<compile_context>
chip_gen: v5e
topology: v5e:2x2
jax: 0.10.0
libtpu: 0.0.40
codegen_flags: <defaults>
</compile_context>

<pallas_src>
import functools

import jax
import jax.numpy as jnp
from jax.experimental import pallas as pl
from jax.experimental.pallas import tpu as pltpu

_HIGHEST = jax.lax.Precision.HIGHEST


def _group_avg_matrix(C, groups, hw):
    """A[c, c'] = 1/(hw * ch_per_group) if c and c' share a group, else 0."""
    cg = C // groups
    gid = jnp.arange(C) // cg
    same = (gid[:, None] == gid[None, :]).astype(jnp.float32)
    return same / float(hw * cg)


def _gn_silu(x, avg_mat, gamma, beta, eps):
    """GroupNorm (affine) + SiLU on a (C, HW) tile."""
    s = jnp.sum(x, axis=1, keepdims=True)            # (C, 1) per-channel sum
    ssq = jnp.sum(x * x, axis=1, keepdims=True)      # (C, 1) per-channel sum of squares
    mean = jnp.dot(avg_mat, s, preferred_element_type=jnp.float32, precision=_HIGHEST)
    ex2 = jnp.dot(avg_mat, ssq, preferred_element_type=jnp.float32, precision=_HIGHEST)
    inv = jax.lax.rsqrt(ex2 - mean * mean + eps)     # per-channel (group-broadcast) inv std
    y = (x - mean) * (inv * gamma) + beta
    return y * jax.nn.sigmoid(y)                     # SiLU (EUP)


def _conv3x3_accumulate(y, w_ref, o_ref, *, H, W):
    """Accumulate a 3x3 'same' conv of y (Cin, HW) into o_ref (Cout, HW).

    w_ref is (9, Cout, Cin); tap k = dy*3 + dx. Each tap is one 2-D MXU matmul,
    shifted along the flattened spatial (lane) axis and masked at row edges.
    """
    HW = y.shape[1]
    col = jax.lax.broadcasted_iota(jnp.int32, (1, HW), 1) % W   # hoisted once
    for dy in range(3):
        oy = dy - 1
        for dx in range(3):
            ox = dx - 1
            shift = oy * W + ox                      # flat offset of this tap
            z = jnp.dot(w_ref[dy * 3 + dx], y,
                        preferred_element_type=jnp.float32,
                        precision=_HIGHEST)          # (Cout, HW)
            r0 = max(0, -shift)
            L = HW - abs(shift)
            zs = z[:, r0 + shift:r0 + shift + L]
            if ox != 0:                              # mask pixels that would wrap a row
                ok = jnp.logical_and(col + ox >= 0, col + ox < W)[:, r0:r0 + L]
                zs = jnp.where(ok, zs, 0.0)
            o_ref[:, r0:r0 + L] += zs


def _block1_kernel(x_ref, a_ref, g_ref, bt_ref, w_ref, t_ref, lw_ref, lb_ref,
                   o_ref, *, H, W, eps):
    """out = Conv3x3(SiLU(GN(x))) + Linear(SiLU(t)) broadcast over pixels."""
    y = _gn_silu(x_ref[...], a_ref[...], g_ref[...], bt_ref[...], eps)
    # Time-embedding MLP for this batch element (one-hot column select, no dyn slice).
    b = pl.program_id(0)
    nb = t_ref.shape[1]
    onehot = (jax.lax.broadcasted_iota(jnp.int32, (nb, 1), 0) == b).astype(jnp.float32)
    tcol = jnp.dot(t_ref[...], onehot, preferred_element_type=jnp.float32,
                   precision=_HIGHEST)                            # (Tdim, 1)
    tcol = tcol * jax.nn.sigmoid(tcol)                            # SiLU first
    emb = jnp.dot(lw_ref[...], tcol, preferred_element_type=jnp.float32,
                  precision=_HIGHEST) + lb_ref[...]               # (Cout, 1)
    o_ref[...] = jnp.broadcast_to(emb, o_ref.shape)               # init with time bias
    _conv3x3_accumulate(y, w_ref, o_ref, H=H, W=W)


def _block2_kernel(h_ref, a_ref, g_ref, bt_ref, w_ref, x_ref, wres_ref,
                   o_ref, *, H, W, eps):
    """out = Conv3x3(SiLU(GN(h))) + res_conv(x) (1x1 conv fused as matmul)."""
    y = _gn_silu(h_ref[...], a_ref[...], g_ref[...], bt_ref[...], eps)
    o_ref[...] = jnp.dot(wres_ref[...], x_ref[...],
                         preferred_element_type=jnp.float32, precision=_HIGHEST)
    _conv3x3_accumulate(y, w_ref, o_ref, H=H, W=W)


def residual_block_forward(x, t, params, *, eps=1e-5):
    """Pallas forward of ResidualBlock. x: (B, Cin, H, W) NCHW; t: (B, time_emb_dim)."""
    B, Cin, H, W = x.shape
    Cout = params["conv1_w"].shape[0]
    Tdim = t.shape[-1]
    HW = H * W
    g1 = 8 if Cin % 8 == 0 else Cin
    g2 = 8 if Cout % 8 == 0 else Cout
    f32 = jnp.float32

    # Wrapper glue: free reshapes / tiny parameter re-layouts only.
    x_flat = x.astype(f32).reshape(B, Cin, HW)                     # NCHW -> (B, C, HW)
    a1 = _group_avg_matrix(Cin, g1, HW)
    a2 = _group_avg_matrix(Cout, g2, HW)
    w1 = jnp.transpose(params["conv1_w"].astype(f32), (2, 3, 0, 1)).reshape(9, Cout, Cin)
    w2 = jnp.transpose(params["conv2_w"].astype(f32), (2, 3, 0, 1)).reshape(9, Cout, Cout)
    res_w = params.get("res_w")
    wres = (jnp.eye(Cout, Cin, dtype=f32) if res_w is None
            else res_w.astype(f32).reshape(Cout, Cin))
    gn1_g = params["gn1_g"].astype(f32).reshape(Cin, 1)
    gn1_b = params["gn1_b"].astype(f32).reshape(Cin, 1)
    gn2_g = params["gn2_g"].astype(f32).reshape(Cout, 1)
    gn2_b = params["gn2_b"].astype(f32).reshape(Cout, 1)
    lin_w = params["lin_w"].astype(f32)                            # (Cout, Tdim)
    lin_b = params["lin_b"].astype(f32).reshape(Cout, 1)
    t_t = jnp.transpose(t.astype(f32), (1, 0))                     # (Tdim, B)

    parallel = pltpu.CompilerParams(dimension_semantics=("parallel",))

    h = pl.pallas_call(
        functools.partial(_block1_kernel, H=H, W=W, eps=eps),
        out_shape=jax.ShapeDtypeStruct((B, Cout, HW), f32),
        grid=(B,),
        in_specs=[
            pl.BlockSpec((None, Cin, HW), lambda b: (b, 0, 0)),
            pl.BlockSpec((Cin, Cin), lambda b: (0, 0)),
            pl.BlockSpec((Cin, 1), lambda b: (0, 0)),
            pl.BlockSpec((Cin, 1), lambda b: (0, 0)),
            pl.BlockSpec((9, Cout, Cin), lambda b: (0, 0, 0)),
            pl.BlockSpec((Tdim, B), lambda b: (0, 0)),
            pl.BlockSpec((Cout, Tdim), lambda b: (0, 0)),
            pl.BlockSpec((Cout, 1), lambda b: (0, 0)),
        ],
        out_specs=pl.BlockSpec((None, Cout, HW), lambda b: (b, 0, 0)),
        compiler_params=parallel,
    )(x_flat, a1, gn1_g, gn1_b, w1, t_t, lin_w, lin_b)

    out = pl.pallas_call(
        functools.partial(_block2_kernel, H=H, W=W, eps=eps),
        out_shape=jax.ShapeDtypeStruct((B, Cout, HW), f32),
        grid=(B,),
        in_specs=[
            pl.BlockSpec((None, Cout, HW), lambda b: (b, 0, 0)),
            pl.BlockSpec((Cout, Cout), lambda b: (0, 0)),
            pl.BlockSpec((Cout, 1), lambda b: (0, 0)),
            pl.BlockSpec((Cout, 1), lambda b: (0, 0)),
            pl.BlockSpec((9, Cout, Cout), lambda b: (0, 0, 0)),
            pl.BlockSpec((None, Cin, HW), lambda b: (b, 0, 0)),
            pl.BlockSpec((Cout, Cin), lambda b: (0, 0)),
        ],
        out_specs=pl.BlockSpec((None, Cout, HW), lambda b: (b, 0, 0)),
        compiler_params=parallel,
    )(h, a2, gn2_g, gn2_b, w2, x_flat, wres)

    return out.reshape(B, Cout, H, W)                              # back to NCHW


def _reference(x, t, params, eps=1e-5):
    """Pure-JAX reference matching the PyTorch module."""
    Cin = x.shape[1]
    Cout = params["conv1_w"].shape[0]
    g1 = 8 if Cin % 8 == 0 else Cin
    g2 = 8 if Cout % 8 == 0 else Cout

    def group_norm(v, groups, gamma, beta):
        B, C, H, W = v.shape
        vr = v.reshape(B, groups, (C // groups) * H * W)
        m = vr.mean(axis=2, keepdims=True)
        var = vr.var(axis=2, keepdims=True)
        vn = ((vr - m) / jnp.sqrt(var + eps)).reshape(B, C, H, W)
        return vn * gamma[None, :, None, None] + beta[None, :, None, None]

    def silu(v):
        return v * jax.nn.sigmoid(v)

    def conv(v, w, pad):
        return jax.lax.conv_general_dilated(
            v, w, window_strides=(1, 1), padding=[(pad, pad), (pad, pad)],
            dimension_numbers=("NCHW", "OIHW", "NCHW"), precision=_HIGHEST)

    h = conv(silu(group_norm(x, g1, params["gn1_g"], params["gn1_b"])),
             params["conv1_w"], 1)
    emb = jnp.dot(silu(t), params["lin_w"].T, precision=_HIGHEST) + params["lin_b"]
    h = h + emb[:, :, None, None]
    h = conv(silu(group_norm(h, g2, params["gn2_g"], params["gn2_b"])),
             params["conv2_w"], 1)
    res = x if params.get("res_w") is None else conv(x, params["res_w"], 0)
    return h + res


if __name__ == "__main__":
    key = jax.random.PRNGKey(0)
    B, Cin, Cout, H, W, Tdim = 2, 8, 16, 16, 16, 32
    ks = jax.random.split(key, 11)
    params = {
        "conv1_w": 0.2 * jax.random.normal(ks[0], (Cout, Cin, 3, 3), jnp.float32),
        "conv2_w": 0.2 * jax.random.normal(ks[1], (Cout, Cout, 3, 3), jnp.float32),
        "res_w":   0.2 * jax.random.normal(ks[2], (Cout, Cin, 1, 1), jnp.float32),
        "gn1_g":   1.0 + 0.1 * jax.random.normal(ks[3], (Cin,), jnp.float32),
        "gn1_b":   0.1 * jax.random.normal(ks[4], (Cin,), jnp.float32),
        "gn2_g":   1.0 + 0.1 * jax.random.normal(ks[5], (Cout,), jnp.float32),
        "gn2_b":   0.1 * jax.random.normal(ks[6], (Cout,), jnp.float32),
        "lin_w":   0.2 * jax.random.normal(ks[7], (Cout, Tdim), jnp.float32),
        "lin_b":   0.1 * jax.random.normal(ks[8], (Cout,), jnp.float32),
    }
    x = jax.random.normal(ks[9], (B, Cin, H, W), jnp.float32)
    t = jax.random.normal(ks[10], (B, Tdim), jnp.float32)

    out = jax.block_until_ready(residual_block_forward(x, t, params))
    ref = _reference(x, t, params)

    assert out.shape == (B, Cout, H, W)
    assert jnp.allclose(out, ref, atol=2e-2, rtol=2e-2), float(jnp.max(jnp.abs(out - ref)))
    print("KERNEL_OK")
</pallas_src>

<mosaic_0001>
module attributes {stable_mosaic.version = 11 : i64} {
  func.func @_block1_kernel(%arg0: i32, %arg1: memref<1x8x256xf32, #tpu.memory_space<vmem>>, %arg2: memref<8x8xf32, #tpu.memory_space<vmem>>, %arg3: memref<8x1xf32, #tpu.memory_space<vmem>>, %arg4: memref<8x1xf32, #tpu.memory_space<vmem>>, %arg5: memref<9x16x8xf32, #tpu.memory_space<vmem>>, %arg6: memref<32x2xf32, #tpu.memory_space<vmem>>, %arg7: memref<16x32xf32, #tpu.memory_space<vmem>>, %arg8: memref<16x1xf32, #tpu.memory_space<vmem>>, %arg9: memref<1x16x256xf32, #tpu.memory_space<vmem>>) attributes {dimension_semantics = [#tpu.dimension_semantics<parallel>], iteration_bounds = array<i64: 2>, scalar_prefetch = 0 : i64, scratch_operands = 0 : i64, tpu.core_type = #tpu.core_type<tc>, window_params = [{transform_indices = @transform_0, window_bounds = array<i64: 1, 8, 256>}, {pipeline_mode = #tpu.pipeline_mode<synchronous>, transform_indices = @transform_1, window_bounds = array<i64: 8, 8>}, {pipeline_mode = #tpu.pipeline_mode<synchronous>, transform_indices = @transform_2, window_bounds = array<i64: 8, 1>}, {pipeline_mode = #tpu.pipeline_mode<synchronous>, transform_indices = @transform_3, window_bounds = array<i64: 8, 1>}, {pipeline_mode = #tpu.pipeline_mode<synchronous>, transform_indices = @transform_4, window_bounds = array<i64: 9, 16, 8>}, {pipeline_mode = #tpu.pipeline_mode<synchronous>, transform_indices = @transform_5, window_bounds = array<i64: 32, 2>}, {pipeline_mode = #tpu.pipeline_mode<synchronous>, transform_indices = @transform_6, window_bounds = array<i64: 16, 32>}, {pipeline_mode = #tpu.pipeline_mode<synchronous>, transform_indices = @transform_7, window_bounds = array<i64: 16, 1>}, {transform_indices = @transform_8, window_bounds = array<i64: 1, 16, 256>}]} {
    %c0 = arith.constant 0 : index
    %c0_0 = arith.constant 0 : index
    %c0_1 = arith.constant 0 : index
    %0 = vector.load %arg1[%c0, %c0_0, %c0_1] : memref<1x8x256xf32, #tpu.memory_space<vmem>>, vector<1x8x256xf32>
    %1 = vector.shape_cast %0 : vector<1x8x256xf32> to vector<8x256xf32>
    %c0_2 = arith.constant 0 : index
    %c0_3 = arith.constant 0 : index
    %2 = vector.load %arg2[%c0_2, %c0_3] : memref<8x8xf32, #tpu.memory_space<vmem>>, vector<8x8xf32>
    %c0_4 = arith.constant 0 : index
    %c0_5 = arith.constant 0 : index
    %3 = vector.load %arg3[%c0_4, %c0_5] : memref<8x1xf32, #tpu.memory_space<vmem>>, vector<8x1xf32>
    %c0_6 = arith.constant 0 : index
    %c0_7 = arith.constant 0 : index
    %4 = vector.load %arg4[%c0_6, %c0_7] : memref<8x1xf32, #tpu.memory_space<vmem>>, vector<8x1xf32>
    %cst = arith.constant dense<0.000000e+00> : vector<8xf32>
    %5 = vector.multi_reduction <add>, %1, %cst [1] : vector<8x256xf32> to vector<8xf32>
    %6 = vector.shape_cast %5 : vector<8xf32> to vector<8x1xf32>
    %7 = arith.mulf %1, %1 : vector<8x256xf32>
    %cst_8 = arith.constant dense<0.000000e+00> : vector<8xf32>
    %8 = vector.multi_reduction <add>, %7, %cst_8 [1] : vector<8x256xf32> to vector<8xf32>
    %9 = vector.shape_cast %8 : vector<8xf32> to vector<8x1xf32>
    %cst_9 = arith.constant dense<0.000000e+00> : vector<8x1xf32>
    %10 = tpu.matmul %2, %6, %cst_9 {dimension_numbers = #tpu.dot_dimension_numbers<[1], [0], [0], [1], [0, 0, 1, 1], [], []>, precision = #tpu.contract_precision<fp32>} : vector<8x8xf32>, vector<8x1xf32>, vector<8x1xf32> -> vector<8x1xf32>
    %cst_10 = arith.constant dense<0.000000e+00> : vector<8x1xf32>
    %11 = tpu.matmul %2, %9, %cst_10 {dimension_numbers = #tpu.dot_dimension_numbers<[1], [0], [0], [1], [0, 0, 1, 1], [], []>, precision = #tpu.contract_precision<fp32>} : vector<8x8xf32>, vector<8x1xf32>, vector<8x1xf32> -> vector<8x1xf32>
    %12 = arith.mulf %10, %10 : vector<8x1xf32>
    %13 = arith.subf %11, %12 : vector<8x1xf32>
    %cst_11 = arith.constant 9.99999974E-6 : f32
    %14 = vector.broadcast %cst_11 : f32 to vector<8x1xf32>
    %15 = arith.addf %13, %14 : vector<8x1xf32>
    %16 = math.rsqrt %15 : vector<8x1xf32>
    %17 = vector.broadcast %10 : vector<8x1xf32> to vector<8x256xf32>
    %18 = arith.subf %1, %17 : vector<8x256xf32>
    %19 = arith.mulf %16, %3 : vector<8x1xf32>
    %20 = vector.broadcast %19 : vector<8x1xf32> to vector<8x256xf32>
    %21 = arith.mulf %18, %20 : vector<8x256xf32>
    %22 = vector.broadcast %4 : vector<8x1xf32> to vector<8x256xf32>
    %23 = arith.addf %21, %22 : vector<8x256xf32>
    %24 = arith.negf %23 : vector<8x256xf32>
    %25 = math.exp %24 : vector<8x256xf32>
    %cst_12 = arith.constant 1.000000e+00 : f32
    %26 = vector.broadcast %cst_12 : f32 to vector<8x256xf32>
    %27 = arith.addf %26, %25 : vector<8x256xf32>
    %28 = arith.divf %26, %27 : vector<8x256xf32>
    %29 = arith.mulf %23, %28 : vector<8x256xf32>
    %30 = tpu.iota {dimensions = array<i32: 0>} : vector<2x1xi32>
    %31 = vector.broadcast %arg0 : i32 to vector<2x1xi32>
    %32 = arith.cmpi eq, %30, %31 : vector<2x1xi32>
    %33 = arith.extui %32 : vector<2x1xi1> to vector<2x1xi32>
    %34 = arith.sitofp %33 : vector<2x1xi32> to vector<2x1xf32>
    %c0_13 = arith.constant 0 : index
    %c0_14 = arith.constant 0 : index
    %35 = vector.load %arg6[%c0_13, %c0_14] : memref<32x2xf32, #tpu.memory_space<vmem>>, vector<32x2xf32>
    %cst_15 = arith.constant dense<0.000000e+00> : vector<32x1xf32>
    %36 = tpu.matmul %35, %34, %cst_15 {dimension_numbers = #tpu.dot_dimension_numbers<[1], [0], [0], [1], [0, 0, 1, 1], [], []>, precision = #tpu.contract_precision<fp32>} : vector<32x2xf32>, vector<2x1xf32>, vector<32x1xf32> -> vector<32x1xf32>
    %37 = arith.negf %36 : vector<32x1xf32>
    %38 = math.exp %37 : vector<32x1xf32>
    %cst_16 = arith.constant 1.000000e+00 : f32
    %39 = vector.broadcast %cst_16 : f32 to vector<32x1xf32>
    %40 = arith.addf %39, %38 : vector<32x1xf32>
    %41 = arith.divf %39, %40 : vector<32x1xf32>
    %42 = arith.mulf %36, %41 : vector<32x1xf32>
    %c0_17 = arith.constant 0 : index
    %c0_18 = arith.constant 0 : index
    %43 = vector.load %arg7[%c0_17, %c0_18] : memref<16x32xf32, #tpu.memory_space<vmem>>, vector<16x32xf32>
    %cst_19 = arith.constant dense<0.000000e+00> : vector<16x1xf32>
    %44 = tpu.matmul %43, %42, %cst_19 {dimension_numbers = #tpu.dot_dimension_numbers<[1], [0], [0], [1], [0, 0, 1, 1], [], []>, precision = #tpu.contract_precision<fp32>} : vector<16x32xf32>, vector<32x1xf32>, vector<16x1xf32> -> vector<16x1xf32>
    %c0_20 = arith.constant 0 : index
    %c0_21 = arith.constant 0 : index
    %45 = vector.load %arg8[%c0_20, %c0_21] : memref<16x1xf32, #tpu.memory_space<vmem>>, vector<16x1xf32>
    %46 = arith.addf %44, %45 : vector<16x1xf32>
    %47 = vector.shape_cast %46 : vector<16x1xf32> to vector<16x1xf32>
    %48 = vector.broadcast %47 : vector<16x1xf32> to vector<16x256xf32>
    %c0_22 = arith.constant 0 : index
    %c0_23 = arith.constant 0 : index
    %c0_24 = arith.constant 0 : index
    %49 = vector.load %arg9[%c0_22, %c0_23, %c0_24] : memref<1x16x256xf32, #tpu.memory_space<vmem>>, vector<1x16x256xf32>
    %50 = vector.shape_cast %49 : vector<1x16x256xf32> to vector<16x256xf32>
    %51 = vector.shape_cast %48 : vector<16x256xf32> to vector<1x16x256xf32>
    tpu.vector_store %arg9[%c0_22, %c0_23, %c0_24], %51 {strides = array<i32>} : memref<1x16x256xf32, #tpu.memory_space<vmem>>, vector<1x16x256xf32>,
    %52 = tpu.iota {dimensions = array<i32: 1>} : vector<1x256xi32>
    %c16_i32 = arith.constant 16 : i32
    %c0_i32 = arith.constant 0 : i32
    %53 = arith.cmpi eq, %c16_i32, %c0_i32 : i32
    %c1_i32 = arith.constant 1 : i32
    %54 = arith.select %53, %c1_i32, %c16_i32 : i32
    %55 = vector.broadcast %54 : i32 to vector<1x256xi32>
    %56 = arith.remsi %52, %55 : vector<1x256xi32>
    %c0_i32_25 = arith.constant 0 : i32
    %57 = vector.broadcast %c0_i32_25 : i32 to vector<1x256xi32>
    %58 = arith.cmpi ne, %56, %57 : vector<1x256xi32>
    %c0_i32_26 = arith.constant 0 : i32
    %59 = vector.broadcast %c0_i32_26 : i32 to vector<1x256xi32>
    %60 = arith.cmpi slt, %56, %59 : vector<1x256xi32>
    %c0_i32_27 = arith.constant 0 : i32
    %61 = arith.cmpi slt, %54, %c0_i32_27 : i32
    %62 = vector.broadcast %61 : i1 to vector<1x256xi1>
    %63 = vector.broadcast %62 : vector<1x256xi1> to vector<1x256xi1>
    %64 = arith.xori %60, %63 : vector<1x256xi1>
    %65 = arith.andi %64, %58 : vector<1x256xi1>
    %66 = vector.broadcast %54 : i32 to vector<1x256xi32>
    %67 = arith.addi %56, %66 : vector<1x256xi32>
    %68 = arith.select %65, %67, %56 : vector<1x256xi1>, vector<1x256xi32>
    %c0_28 = arith.constant 0 : index
    %c0_29 = arith.constant 0 : index
    %c0_30 = arith.constant 0 : index
    %69 = vector.load %arg5[%c0_28, %c0_29, %c0_30] : memref<9x16x8xf32, #tpu.memory_space<vmem>>, vector<1x16x8xf32>
    %70 = vector.shape_cast %69 : vector<1x16x8xf32> to vector<16x8xf32>
    %cst_31 = arith.constant dense<0.000000e+00> : vector<16x256xf32>
    %71 = tpu.matmul %70, %29, %cst_31 {dimension_numbers = #tpu.dot_dimension_numbers<[1], [0], [0], [1], [0, 0, 1, 1], [], []>, precision = #tpu.contract_precision<fp32>} : vector<16x8xf32>, vector<8x256xf32>, vector<16x256xf32> -> vector<16x256xf32>
    %72 = vector.extract_strided_slice %71 {offsets = [0, 0], sizes = [16, 239], strides = [1, 1]} : vector<16x256xf32> to vector<16x239xf32>
    %c-1_i32 = arith.constant -1 : i32
    %73 = vector.broadcast %c-1_i32 : i32 to vector<1x256xi32>
    %74 = arith.addi %68, %73 : vector<1x256xi32>
    %c0_i32_32 = arith.constant 0 : i32
    %75 = vector.broadcast %c0_i32_32 : i32 to vector<1x256xi32>
    %76 = arith.cmpi sge, %74, %75 : vector<1x256xi32>
    %c-1_i32_33 = arith.constant -1 : i32
    %77 = vector.broadcast %c-1_i32_33 : i32 to vector<1x256xi32>
    %78 = arith.addi %68, %77 : vector<1x256xi32>
    %c16_i32_34 = arith.constant 16 : i32
    %79 = vector.broadcast %c16_i32_34 : i32 to vector<1x256xi32>
    %80 = arith.cmpi slt, %78, %79 : vector<1x256xi32>
    %81 = arith.andi %76, %80 : vector<1x256xi1>
    %82 = vector.extract_strided_slice %81 {offsets = [0, 17], sizes = [1, 239], strides = [1, 1]} : vector<1x256xi1> to vector<1x239xi1>
    %cst_35 = arith.constant 0.000000e+00 : f32
    %83 = vector.shape_cast %82 : vector<1x239xi1> to vector<1x239xi1>
    %84 = vector.broadcast %83 : vector<1x239xi1> to vector<16x239xi1>
    %85 = vector.broadcast %cst_35 : f32 to vector<16x239xf32>
    %86 = arith.select %84, %72, %85 : vector<16x239xi1>, vector<16x239xf32>
    %c0_36 = arith.constant 0 : index
    %c0_37 = arith.constant 0 : index
    %c17 = arith.constant 17 : index
    %87 = vector.load %arg9[%c0_36, %c0_37, %c17] : memref<1x16x256xf32, #tpu.memory_space<vmem>>, vector<1x16x239xf32>
    %88 = vector.shape_cast %87 : vector<1x16x239xf32> to vector<16x239xf32>
    %89 = arith.addf %88, %86 : vector<16x239xf32>
    %c0_38 = arith.constant 0 : index
    %c0_39 = arith.constant 0 : index
    %c17_40 = arith.constant 17 : index
    %90 = vector.load %arg9[%c0_38, %c0_39, %c17_40] : memref<1x16x256xf32, #tpu.memory_space<vmem>>, vector<1x16x239xf32>
    %91 = vector.shape_cast %90 : vector<1x16x239xf32> to vector<16x239xf32>
    %92 = vector.shape_cast %89 : vector<16x239xf32> to vector<1x16x239xf32>
    tpu.vector_store %arg9[%c0_38, %c0_39, %c17_40], %92 {strides = array<i32>} : memref<1x16x256xf32, #tpu.memory_space<vmem>>, vector<1x16x239xf32>,
    %c1 = arith.constant 1 : index
    %c0_41 = arith.constant 0 : index
    %c0_42 = arith.constant 0 : index
    %93 = vector.load %arg5[%c1, %c0_41, %c0_42] : memref<9x16x8xf32, #tpu.memory_space<vmem>>, vector<1x16x8xf32>
    %94 = vector.shape_cast %93 : vector<1x16x8xf32> to vector<16x8xf32>
    %cst_43 = arith.constant dense<0.000000e+00> : vector<16x256xf32>
    %95 = tpu.matmul %94, %29, %cst_43 {dimension_numbers = #tpu.dot_dimension_numbers<[1], [0], [0], [1], [0, 0, 1, 1], [], []>, precision = #tpu.contract_precision<fp32>} : vector<16x8xf32>, vector<8x256xf32>, vector<16x256xf32> -> vector<16x256xf32>
    %96 = vector.extract_strided_slice %95 {offsets = [0, 0], sizes = [16, 240], strides = [1, 1]} : vector<16x256xf32> to vector<16x240xf32>
    %c0_44 = arith.constant 0 : index
    %c0_45 = arith.constant 0 : index
    %c16 = arith.constant 16 : index
    %97 = vector.load %arg9[%c0_44, %c0_45, %c16] : memref<1x16x256xf32, #tpu.memory_space<vmem>>, vector<1x16x240xf32>
    %98 = vector.shape_cast %97 : vector<1x16x240xf32> to vector<16x240xf32>
    %99 = arith.addf %98, %96 : vector<16x240xf32>
    %c0_46 = arith.constant 0 : index
    %c0_47 = arith.constant 0 : index
    %c16_48 = arith.constant 16 : index
    %100 = vector.load %arg9[%c0_46, %c0_47, %c16_48] : memref<1x16x256xf32, #tpu.memory_space<vmem>>, vector<1x16x240xf32>
    %101 = vector.shape_cast %100 : vector<1x16x240xf32> to vector<16x240xf32>
    %102 = vector.shape_cast %99 : vector<16x240xf32> to vector<1x16x240xf32>
    tpu.vector_store %arg9[%c0_46, %c0_47, %c16_48], %102 {strides = array<i32>} : memref<1x16x256xf32, #tpu.memory_space<vmem>>, vector<1x16x240xf32>,
    %c2 = arith.constant 2 : index
    %c0_49 = arith.constant 0 : index
    %c0_50 = arith.constant 0 : index
    %103 = vector.load %arg5[%c2, %c0_49, %c0_50] : memref<9x16x8xf32, #tpu.memory_space<vmem>>, vector<1x16x8xf32>
    %104 = vector.shape_cast %103 : vector<1x16x8xf32> to vector<16x8xf32>
    %cst_51 = arith.constant dense<0.000000e+00> : vector<16x256xf32>
    %105 = tpu.matmul %104, %29, %cst_51 {dimension_numbers = #tpu.dot_dimension_numbers<[1], [0], [0], [1], [0, 0, 1, 1], [], []>, precision = #tpu.contract_precision<fp32>} : vector<16x8xf32>, vector<8x256xf32>, vector<16x256xf32> -> vector<16x256xf32>
    %106 = vector.extract_strided_slice %105 {offsets = [0, 0], sizes = [16, 241], strides = [1, 1]} : vector<16x256xf32> to vector<16x241xf32>
    %c1_i32_52 = arith.constant 1 : i32
    %107 = vector.broadcast %c1_i32_52 : i32 to vector<1x256xi32>
    %108 = arith.addi %68, %107 : vector<1x256xi32>
    %c0_i32_53 = arith.constant 0 : i32
    %109 = vector.broadcast %c0_i32_53 : i32 to vector<1x256xi32>
    %110 = arith.cmpi sge, %108, %109 : vector<1x256xi32>
    %c1_i32_54 = arith.constant 1 : i32
    %111 = vector.broadcast %c1_i32_54 : i32 to vector<1x256xi32>
    %112 = arith.addi %68, %111 : vector<1x256xi32>
    %c16_i32_55 = arith.constant 16 : i32
    %113 = vector.broadcast %c16_i32_55 : i32 to vector<1x256xi32>
    %114 = arith.cmpi slt, %112, %113 : vector<1x256xi32>
    %115 = arith.andi %110, %114 : vector<1x256xi1>
    %116 = vector.extract_strided_slice %115 {offsets = [0, 15], sizes = [1, 241], strides = [1, 1]} : vector<1x256xi1> to vector<1x241xi1>
    %cst_56 = arith.constant 0.000000e+00 : f32
    %117 = vector.shape_cast %116 : vector<1x241xi1> to vector<1x241xi1>
    %118 = vector.broadcast %117 : vector<1x241xi1> to vector<16x241xi1>
    %119 = vector.broadcast %cst_56 : f32 to vector<16x241xf32>
    %120 = arith.select %118, %106, %119 : vector<16x241xi1>, vector<16x241xf32>
    %c0_57 = arith.constant 0 : index
    %c0_58 = arith.constant 0 : index
    %c15 = arith.constant 15 : index
    %121 = vector.load %arg9[%c0_57, %c0_58, %c15] : memref<1x16x256xf32, #tpu.memory_space<vmem>>, vector<1x16x241xf32>
    %122 = vector.shape_cast %121 : vector<1x16x241xf32> to vector<16x241xf32>
    %123 = arith.addf %122, %120 : vector<16x241xf32>
    %c0_59 = arith.constant 0 : index
    %c0_60 = arith.constant 0 : index
    %c15_61 = arith.constant 15 : index
    %124 = vector.load %arg9[%c0_59, %c0_60, %c15_61] : memref<1x16x256xf32, #tpu.memory_space<vmem>>, vector<1x16x241xf32>
    %125 = vector.shape_cast %124 : vector<1x16x241xf32> to vector<16x241xf32>
    %126 = vector.shape_cast %123 : vector<16x241xf32> to vector<1x16x241xf32>
    tpu.vector_store %arg9[%c0_59, %c0_60, %c15_61], %126 {strides = array<i32>} : memref<1x16x256xf32, #tpu.memory_space<vmem>>, vector<1x16x241xf32>,
    %c3 = arith.constant 3 : index
    %c0_62 = arith.constant 0 : index
    %c0_63 = arith.constant 0 : index
    %127 = vector.load %arg5[%c3, %c0_62, %c0_63] : memref<9x16x8xf32, #tpu.memory_space<vmem>>, vector<1x16x8xf32>
    %128 = vector.shape_cast %127 : vector<1x16x8xf32> to vector<16x8xf32>
    %cst_64 = arith.constant dense<0.000000e+00> : vector<16x256xf32>
    %129 = tpu.matmul %128, %29, %cst_64 {dimension_numbers = #tpu.dot_dimension_numbers<[1], [0], [0], [1], [0, 0, 1, 1], [], []>, precision = #tpu.contract_precision<fp32>} : vector<16x8xf32>, vector<8x256xf32>, vector<16x256xf32> -> vector<16x256xf32>
    %130 = vector.extract_strided_slice %129 {offsets = [0, 0], sizes = [16, 255], strides = [1, 1]} : vector<16x256xf32> to vector<16x255xf32>
    %c-1_i32_65 = arith.constant -1 : i32
    %131 = vector.broadcast %c-1_i32_65 : i32 to vector<1x256xi32>
    %132 = arith.addi %68, %131 : vector<1x256xi32>
    %c0_i32_66 = arith.constant 0 : i32
    %133 = vector.broadcast %c0_i32_66 : i32 to vector<1x256xi32>
    %134 = arith.cmpi sge, %132, %133 : vector<1x256xi32>
    %c-1_i32_67 = arith.constant -1 : i32
    %135 = vector.broadcast %c-1_i32_67 : i32 to vector<1x256xi32>
    %136 = arith.addi %68, %135 : vector<1x256xi32>
    %c16_i32_68 = arith.constant 16 : i32
    %137 = vector.broadcast %c16_i32_68 : i32 to vector<1x256xi32>
    %138 = arith.cmpi slt, %136, %137 : vector<1x256xi32>
    %139 = arith.andi %134, %138 : vector<1x256xi1>
    %140 = vector.extract_strided_slice %139 {offsets = [0, 1], sizes = [1, 255], strides = [1, 1]} : vector<1x256xi1> to vector<1x255xi1>
    %cst_69 = arith.constant 0.000000e+00 : f32
    %141 = vector.shape_cast %140 : vector<1x255xi1> to vector<1x255xi1>
    %142 = vector.broadcast %141 : vector<1x255xi1> to vector<16x255xi1>
    %143 = vector.broadcast %cst_69 : f32 to vector<16x255xf32>
    %144 = arith.select %142, %130, %143 : vector<16x255xi1>, vector<16x255xf32>
    %c0_70 = arith.constant 0 : index
    %c0_71 = arith.constant 0 : index
    %c1_72 = arith.constant 1 : index
    %145 = vector.load %arg9[%c0_70, %c0_71, %c1_72] : memref<1x16x256xf32, #tpu.memory_space<vmem>>, vector<1x16x255xf32>
    %146 = vector.shape_cast %145 : vector<1x16x255xf32> to vector<16x255xf32>
    %147 = arith.addf %146, %144 : vector<16x255xf32>
    %c0_73 = arith.constant 0 : index
    %c0_74 = arith.constant 0 : index
    %c1_75 = arith.constant 1 : index
    %148 = vector.load %arg9[%c0_73, %c0_74, %c1_75] : memref<1x16x256xf32, #tpu.memory_space<vmem>>, vector<1x16x255xf32>
    %149 = vector.shape_cast %148 : vector<1x16x255xf32> to vector<16x255xf32>
    %150 = vector.shape_cast %147 : vector<16x255xf32> to vector<1x16x255xf32>
    tpu.vector_store %arg9[%c0_73, %c0_74, %c1_75], %150 {strides = array<i32>} : memref<1x16x256xf32, #tpu.memory_space<vmem>>, vector<1x16x255xf32>,
    %c4 = arith.constant 4 : index
    %c0_76 = arith.constant 0 : index
    %c0_77 = arith.constant 0 : index
    %151 = vector.load %arg5[%c4, %c0_76, %c0_77] : memref<9x16x8xf32, #tpu.memory_space<vmem>>, vector<1x16x8xf32>
    %152 = vector.shape_cast %151 : vector<1x16x8xf32> to vector<16x8xf32>
    %cst_78 = arith.constant dense<0.000000e+00> : vector<16x256xf32>
    %153 = tpu.matmul %152, %29, %cst_78 {dimension_numbers = #tpu.dot_dimension_numbers<[1], [0], [0], [1], [0, 0, 1, 1], [], []>, precision = #tpu.contract_precision<fp32>} : vector<16x8xf32>, vector<8x256xf32>, vector<16x256xf32> -> vector<16x256xf32>
    %c0_79 = arith.constant 0 : index
    %c0_80 = arith.constant 0 : index
    %c0_81 = arith.constant 0 : index
    %154 = vector.load %arg9[%c0_79, %c0_80, %c0_81] : memref<1x16x256xf32, #tpu.memory_space<vmem>>, vector<1x16x256xf32>
    %155 = vector.shape_cast %154 : vector<1x16x256xf32> to vector<16x256xf32>
    %156 = arith.addf %155, %153 : vector<16x256xf32>
    %c0_82 = arith.constant 0 : index
    %c0_83 = arith.constant 0 : index
    %c0_84 = arith.constant 0 : index
    %157 = vector.load %arg9[%c0_82, %c0_83, %c0_84] : memref<1x16x256xf32, #tpu.memory_space<vmem>>, vector<1x16x256xf32>
    %158 = vector.shape_cast %157 : vector<1x16x256xf32> to vector<16x256xf32>
    %159 = vector.shape_cast %156 : vector<16x256xf32> to vector<1x16x256xf32>
    tpu.vector_store %arg9[%c0_82, %c0_83, %c0_84], %159 {strides = array<i32>} : memref<1x16x256xf32, #tpu.memory_space<vmem>>, vector<1x16x256xf32>,
    %c5 = arith.constant 5 : index
    %c0_85 = arith.constant 0 : index
    %c0_86 = arith.constant 0 : index
    %160 = vector.load %arg5[%c5, %c0_85, %c0_86] : memref<9x16x8xf32, #tpu.memory_space<vmem>>, vector<1x16x8xf32>
    %161 = vector.shape_cast %160 : vector<1x16x8xf32> to vector<16x8xf32>
    %cst_87 = arith.constant dense<0.000000e+00> : vector<16x256xf32>
    %162 = tpu.matmul %161, %29, %cst_87 {dimension_numbers = #tpu.dot_dimension_numbers<[1], [0], [0], [1], [0, 0, 1, 1], [], []>, precision = #tpu.contract_precision<fp32>} : vector<16x8xf32>, vector<8x256xf32>, vector<16x256xf32> -> vector<16x256xf32>
    %163 = vector.extract_strided_slice %162 {offsets = [0, 1], sizes = [16, 255], strides = [1, 1]} : vector<16x256xf32> to vector<16x255xf32>
    %c1_i32_88 = arith.constant 1 : i32
    %164 = vector.broadcast %c1_i32_88 : i32 to vector<1x256xi32>
    %165 = arith.addi %68, %164 : vector<1x256xi32>
    %c0_i32_89 = arith.constant 0 : i32
    %166 = vector.broadcast %c0_i32_89 : i32 to vector<1x256xi32>
    %167 = arith.cmpi sge, %165, %166 : vector<1x256xi32>
    %c1_i32_90 = arith.constant 1 : i32
    %168 = vector.broadcast %c1_i32_90 : i32 to vector<1x256xi32>
    %169 = arith.addi %68, %168 : vector<1x256xi32>
    %c16_i32_91 = arith.constant 16 : i32
    %170 = vector.broadcast %c16_i32_91 : i32 to vector<1x256xi32>
    %171 = arith.cmpi slt, %169, %170 : vector<1x256xi32>
    %172 = arith.andi %167, %171 : vector<1x256xi1>
    %173 = vector.extract_strided_slice %172 {offsets = [0, 0], sizes = [1, 255], strides = [1, 1]} : vector<1x256xi1> to vector<1x255xi1>
    %cst_92 = arith.constant 0.000000e+00 : f32
    %174 = vector.shape_cast %173 : vector<1x255xi1> to vector<1x255xi1>
    %175 = vector.broadcast %174 : vector<1x255xi1> to vector<16x255xi1>
    %176 = vector.broadcast %cst_92 : f32 to vector<16x255xf32>
    %177 = arith.select %175, %163, %176 : vector<16x255xi1>, vector<16x255xf32>
    %c0_93 = arith.constant 0 : index
    %c0_94 = arith.constant 0 : index
    %c0_95 = arith.constant 0 : index
    %178 = vector.load %arg9[%c0_93, %c0_94, %c0_95] : memref<1x16x256xf32, #tpu.memory_space<vmem>>, vector<1x16x255xf32>
    %179 = vector.shape_cast %178 : vector<1x16x255xf32> to vector<16x255xf32>
    %180 = arith.addf %179, %177 : vector<16x255xf32>
    %c0_96 = arith.constant 0 : index
    %c0_97 = arith.constant 0 : index
    %c0_98 = arith.constant 0 : index
    %181 = vector.load %arg9[%c0_96, %c0_97, %c0_98] : memref<1x16x256xf32, #tpu.memory_space<vmem>>, vector<1x16x255xf32>
    %182 = vector.shape_cast %181 : vector<1x16x255xf32> to vector<16x255xf32>
    %183 = vector.shape_cast %180 : vector<16x255xf32> to vector<1x16x255xf32>
    tpu.vector_store %arg9[%c0_96, %c0_97, %c0_98], %183 {strides = array<i32>} : memref<1x16x256xf32, #tpu.memory_space<vmem>>, vector<1x16x255xf32>,
    %c6 = arith.constant 6 : index
    %c0_99 = arith.constant 0 : index
    %c0_100 = arith.constant 0 : index
    %184 = vector.load %arg5[%c6, %c0_99, %c0_100] : memref<9x16x8xf32, #tpu.memory_space<vmem>>, vector<1x16x8xf32>
    %185 = vector.shape_cast %184 : vector<1x16x8xf32> to vector<16x8xf32>
    %cst_101 = arith.constant dense<0.000000e+00> : vector<16x256xf32>
    %186 = tpu.matmul %185, %29, %cst_101 {dimension_numbers = #tpu.dot_dimension_numbers<[1], [0], [0], [1], [0, 0, 1, 1], [], []>, precision = #tpu.contract_precision<fp32>} : vector<16x8xf32>, vector<8x256xf32>, vector<16x256xf32> -> vector<16x256xf32>
    %187 = vector.extract_strided_slice %186 {offsets = [0, 15], sizes = [16, 241], strides = [1, 1]} : vector<16x256xf32> to vector<16x241xf32>
    %c-1_i32_102 = arith.constant -1 : i32
    %188 = vector.broadcast %c-1_i32_102 : i32 to vector<1x256xi32>
    %189 = arith.addi %68, %188 : vector<1x256xi32>
    %c0_i32_103 = arith.constant 0 : i32
    %190 = vector.broadcast %c0_i32_103 : i32 to vector<1x256xi32>
    %191 = arith.cmpi sge, %189, %190 : vector<1x256xi32>
    %c-1_i32_104 = arith.constant -1 : i32
    %192 = vector.broadcast %c-1_i32_104 : i32 to vector<1x256xi32>
    %193 = arith.addi %68, %192 : vector<1x256xi32>
    %c16_i32_105 = arith.constant 16 : i32
    %194 = vector.broadcast %c16_i32_105 : i32 to vector<1x256xi32>
    %195 = arith.cmpi slt, %193, %194 : vector<1x256xi32>
    %196 = arith.andi %191, %195 : vector<1x256xi1>
    %197 = vector.extract_strided_slice %196 {offsets = [0, 0], sizes = [1, 241], strides = [1, 1]} : vector<1x256xi1> to vector<1x241xi1>
    %cst_106 = arith.constant 0.000000e+00 : f32
    %198 = vector.shape_cast %197 : vector<1x241xi1> to vector<1x241xi1>
    %199 = vector.broadcast %198 : vector<1x241xi1> to vector<16x241xi1>
    %200 = vector.broadcast %cst_106 : f32 to vector<16x241xf32>
    %201 = arith.select %199, %187, %200 : vector<16x241xi1>, vector<16x241xf32>
    %c0_107 = arith.constant 0 : index
    %c0_108 = arith.constant 0 : index
    %c0_109 = arith.constant 0 : index
    %202 = vector.load %arg9[%c0_107, %c0_108, %c0_109] : memref<1x16x256xf32, #tpu.memory_space<vmem>>, vector<1x16x241xf32>
    %203 = vector.shape_cast %202 : vector<1x16x241xf32> to vector<16x241xf32>
    %204 = arith.addf %203, %201 : vector<16x241xf32>
    %c0_110 = arith.constant 0 : index
    %c0_111 = arith.constant 0 : index
    %c0_112 = arith.constant 0 : index
    %205 = vector.load %arg9[%c0_110, %c0_111, %c0_112] : memref<1x16x256xf32, #tpu.memory_space<vmem>>, vector<1x16x241xf32>
    %206 = vector.shape_cast %205 : vector<1x16x241xf32> to vector<16x241xf32>
    %207 = vector.shape_cast %204 : vector<16x241xf32> to vector<1x16x241xf32>
    tpu.vector_store %arg9[%c0_110, %c0_111, %c0_112], %207 {strides = array<i32>} : memref<1x16x256xf32, #tpu.memory_space<vmem>>, vector<1x16x241xf32>,
    %c7 = arith.constant 7 : index
    %c0_113 = arith.constant 0 : index
    %c0_114 = arith.constant 0 : index
    %208 = vector.load %arg5[%c7, %c0_113, %c0_114] : memref<9x16x8xf32, #tpu.memory_space<vmem>>, vector<1x16x8xf32>
    %209 = vector.shape_cast %208 : vector<1x16x8xf32> to vector<16x8xf32>
    %cst_115 = arith.constant dense<0.000000e+00> : vector<16x256xf32>
    %210 = tpu.matmul %209, %29, %cst_115 {dimension_numbers = #tpu.dot_dimension_numbers<[1], [0], [0], [1], [0, 0, 1, 1], [], []>, precision = #tpu.contract_precision<fp32>} : vector<16x8xf32>, vector<8x256xf32>, vector<16x256xf32> -> vector<16x256xf32>
    %211 = vector.extract_strided_slice %210 {offsets = [0, 16], sizes = [16, 240], strides = [1, 1]} : vector<16x256xf32> to vector<16x240xf32>
    %c0_116 = arith.constant 0 : index
    %c0_117 = arith.constant 0 : index
    %c0_118 = arith.constant 0 : index
    %212 = vector.load %arg9[%c0_116, %c0_117, %c0_118] : memref<1x16x256xf32, #tpu.memory_space<vmem>>, vector<1x16x240xf32>
    %213 = vector.shape_cast %212 : vector<1x16x240xf32> to vector<16x240xf32>
    %214 = arith.addf %213, %211 : vector<16x240xf32>
    %c0_119 = arith.constant 0 : index
    %c0_120 = arith.constant 0 : index
    %c0_121 = arith.constant 0 : index
    %215 = vector.load %arg9[%c0_119, %c0_120, %c0_121] : memref<1x16x256xf32, #tpu.memory_space<vmem>>, vector<1x16x240xf32>
    %216 = vector.shape_cast %215 : vector<1x16x240xf32> to vector<16x240xf32>
    %217 = vector.shape_cast %214 : vector<16x240xf32> to vector<1x16x240xf32>
    tpu.vector_store %arg9[%c0_119, %c0_120, %c0_121], %217 {strides = array<i32>} : memref<1x16x256xf32, #tpu.memory_space<vmem>>, vector<1x16x240xf32>,
    %c8 = arith.constant 8 : index
    %c0_122 = arith.constant 0 : index
    %c0_123 = arith.constant 0 : index
    %218 = vector.load %arg5[%c8, %c0_122, %c0_123] : memref<9x16x8xf32, #tpu.memory_space<vmem>>, vector<1x16x8xf32>
    %219 = vector.shape_cast %218 : vector<1x16x8xf32> to vector<16x8xf32>
    %cst_124 = arith.constant dense<0.000000e+00> : vector<16x256xf32>
    %220 = tpu.matmul %219, %29, %cst_124 {dimension_numbers = #tpu.dot_dimension_numbers<[1], [0], [0], [1], [0, 0, 1, 1], [], []>, precision = #tpu.contract_precision<fp32>} : vector<16x8xf32>, vector<8x256xf32>, vector<16x256xf32> -> vector<16x256xf32>
    %221 = vector.extract_strided_slice %220 {offsets = [0, 17], sizes = [16, 239], strides = [1, 1]} : vector<16x256xf32> to vector<16x239xf32>
    %c1_i32_125 = arith.constant 1 : i32
    %222 = vector.broadcast %c1_i32_125 : i32 to vector<1x256xi32>
    %223 = arith.addi %68, %222 : vector<1x256xi32>
    %c0_i32_126 = arith.constant 0 : i32
    %224 = vector.broadcast %c0_i32_126 : i32 to vector<1x256xi32>
    %225 = arith.cmpi sge, %223, %224 : vector<1x256xi32>
    %c1_i32_127 = arith.constant 1 : i32
    %226 = vector.broadcast %c1_i32_127 : i32 to vector<1x256xi32>
    %227 = arith.addi %68, %226 : vector<1x256xi32>
    %c16_i32_128 = arith.constant 16 : i32
    %228 = vector.broadcast %c16_i32_128 : i32 to vector<1x256xi32>
    %229 = arith.cmpi slt, %227, %228 : vector<1x256xi32>
    %230 = arith.andi %225, %229 : vector<1x256xi1>
    %231 = vector.extract_strided_slice %230 {offsets = [0, 0], sizes = [1, 239], strides = [1, 1]} : vector<1x256xi1> to vector<1x239xi1>
    %cst_129 = arith.constant 0.000000e+00 : f32
    %232 = vector.shape_cast %231 : vector<1x239xi1> to vector<1x239xi1>
    %233 = vector.broadcast %232 : vector<1x239xi1> to vector<16x239xi1>
    %234 = vector.broadcast %cst_129 : f32 to vector<16x239xf32>
    %235 = arith.select %233, %221, %234 : vector<16x239xi1>, vector<16x239xf32>
    %c0_130 = arith.constant 0 : index
    %c0_131 = arith.constant 0 : index
    %c0_132 = arith.constant 0 : index
    %236 = vector.load %arg9[%c0_130, %c0_131, %c0_132] : memref<1x16x256xf32, #tpu.memory_space<vmem>>, vector<1x16x239xf32>
    %237 = vector.shape_cast %236 : vector<1x16x239xf32> to vector<16x239xf32>
    %238 = arith.addf %237, %235 : vector<16x239xf32>
    %c0_133 = arith.constant 0 : index
    %c0_134 = arith.constant 0 : index
    %c0_135 = arith.constant 0 : index
    %239 = vector.load %arg9[%c0_133, %c0_134, %c0_135] : memref<1x16x256xf32, #tpu.memory_space<vmem>>, vector<1x16x239xf32>
    %240 = vector.shape_cast %239 : vector<1x16x239xf32> to vector<16x239xf32>
    %241 = vector.shape_cast %238 : vector<16x239xf32> to vector<1x16x239xf32>
    tpu.vector_store %arg9[%c0_133, %c0_134, %c0_135], %241 {strides = array<i32>} : memref<1x16x256xf32, #tpu.memory_space<vmem>>, vector<1x16x239xf32>,
    return
  }
  func.func @transform_0(%arg0: i32) -> (i32, i32, i32) {
    %c0_i32 = arith.constant 0 : i32
    %c0_i32_0 = arith.constant 0 : i32
    %c0_i32_1 = arith.constant 0 : i32
    return %arg0, %c0_i32, %c0_i32_0 : i32, i32, i32
  }
  func.func @transform_1(%arg0: i32) -> (i32, i32) {
    %c0_i32 = arith.constant 0 : i32
    %c0_i32_0 = arith.constant 0 : i32
    %c0_i32_1 = arith.constant 0 : i32
    return %c0_i32, %c0_i32_0 : i32, i32
  }
  func.func @transform_2(%arg0: i32) -> (i32, i32) {
    %c0_i32 = arith.constant 0 : i32
    %c0_i32_0 = arith.constant 0 : i32
    %c0_i32_1 = arith.constant 0 : i32
    return %c0_i32, %c0_i32_0 : i32, i32
  }
  func.func @transform_3(%arg0: i32) -> (i32, i32) {
    %c0_i32 = arith.constant 0 : i32
    %c0_i32_0 = arith.constant 0 : i32
    %c0_i32_1 = arith.constant 0 : i32
    return %c0_i32, %c0_i32_0 : i32, i32
  }
  func.func @transform_4(%arg0: i32) -> (i32, i32, i32) {
    %c0_i32 = arith.constant 0 : i32
    %c0_i32_0 = arith.constant 0 : i32
    %c0_i32_1 = arith.constant 0 : i32
    %c0_i32_2 = arith.constant 0 : i32
    return %c0_i32, %c0_i32_0, %c0_i32_1 : i32, i32, i32
  }
  func.func @transform_5(%arg0: i32) -> (i32, i32) {
    %c0_i32 = arith.constant 0 : i32
    %c0_i32_0 = arith.constant 0 : i32
    %c0_i32_1 = arith.constant 0 : i32
    return %c0_i32, %c0_i32_0 : i32, i32
  }
  func.func @transform_6(%arg0: i32) -> (i32, i32) {
    %c0_i32 = arith.constant 0 : i32
    %c0_i32_0 = arith.constant 0 : i32
    %c0_i32_1 = arith.constant 0 : i32
    return %c0_i32, %c0_i32_0 : i32, i32
  }
  func.func @transform_7(%arg0: i32) -> (i32, i32) {
    %c0_i32 = arith.constant 0 : i32
    %c0_i32_0 = arith.constant 0 : i32
    %c0_i32_1 = arith.constant 0 : i32
    return %c0_i32, %c0_i32_0 : i32, i32
  }
  func.func @transform_8(%arg0: i32) -> (i32, i32, i32) {
    %c0_i32 = arith.constant 0 : i32
    %c0_i32_0 = arith.constant 0 : i32
    %c0_i32_1 = arith.constant 0 : i32
    return %arg0, %c0_i32, %c0_i32_0 : i32, i32, i32
  }
}

</mosaic_0001>

<llo_original>
// kernel: tpu_custom_call.1
$region0: #{tpu_custom_call.1}
  #allocation0 [shape = 'u32[]', space=smem, size = 0x4, offset = 0x4, fixed_abs, tag = 'smem constant byte address 0x4 - core index']
  #allocation1 [shape = 'u32[72,128]{1,0:T(1,128)}', space=vmem, size = 0x9000, scoped, tag = 'internal scratch']
  %s0 = inlined_call_operand.vmem [shape: f32[2,8,256], index: 0, kind: input, shape index: {}]
  %s1 = inlined_call_operand.vmem [shape: f32[8,8], index: 1, kind: input, shape index: {}]
  %s2 = inlined_call_operand.vmem [shape: f32[8,1], index: 2, kind: input, shape index: {}]
  %s3 = inlined_call_operand.vmem [shape: f32[8,1], index: 3, kind: input, shape index: {}]
  %s4 = inlined_call_operand.vmem [shape: f32[9,16,8], index: 4, kind: input, shape index: {}]
  %s5 = inlined_call_operand.vmem [shape: f32[32,2], index: 5, kind: input, shape index: {}]
  %s6 = inlined_call_operand.vmem [shape: f32[16,32], index: 6, kind: input, shape index: {}]
  %s7 = inlined_call_operand.vmem [shape: f32[16,1], index: 7, kind: input, shape index: {}]
  %s8 = inlined_call_operand.hbm [shape: f32[2,16,256], index: 8, kind: output, shape index: {}]
  %s9 = sld [smem:[#allocation0]]
  $region65: #{tpu_custom_call.1} parent=0
    _
  %s11 = ssub.s32 1, %s9
  %s12 = scalar_select 0, %s11, %s9
  $region1: #{tpu_custom_call.1} parent=0
    #allocation2 [shape = 'u8[32768]{0}', space=vmem, size = 0x8000, scoped, tag = 'output window, operand 0']
    #allocation3 [shape = 's32[2]{0}', space=sflag, size = 0x8, scoped, tag = 'scoped memory for tpu_custom_call.1']
    %13 = vsyncpa [#allocation3], 0
    %s14 = scalar_lea.sflag [#allocation3], 1
    %15 = vsyncpa %s14, 0
    loop: start=0, step=1, limit=4
    $region2: #{tpu_custom_call.1} parent=1 // loop_pre_header
      _
    $region3: #{tpu_custom_call.1} parent=1 // loop_header
      %s17 = sphi 0, %s21
      %p18 = scmp.ge.s32.totalorder %s17, 4
      %s27 = sphi 0, %s29
      %s30 = sphi 0, %s27
      %s31 = sphi 0, %s30
      %s47 = sphi 0, %s31
      %s51 = sphi 0, %s51
      %s53 = sphi 0, %s51
      %s54 = sphi 0, %s53
      %s68 = sphi 0, %s54
      %s72 = sphi 0, %s72
      %s74 = sphi 0, %s72
      %s75 = sphi 0, %s74
      %s89 = sphi 0, %s75
      %s93 = sphi 0, %s93
      %s95 = sphi 0, %s93
      %s96 = sphi 0, %s95
      %s110 = sphi 0, %s96
      %s114 = sphi 0, %s114
      %s116 = sphi 0, %s114
      %s117 = sphi 0, %s116
      %s131 = sphi 0, %s117
      %s135 = sphi 0, %s135
      %s137 = sphi 0, %s135
      %s138 = sphi 0, %s137
      %s152 = sphi 0, %s138
      %s156 = sphi 0, %s156
      %s158 = sphi 0, %s156
      %s159 = sphi 0, %s158
      %s173 = sphi 0, %s159
      %s177 = sphi 0, %s177
      %s179 = sphi 0, %s177
      %s180 = sphi 0, %s179
      %s194 = sphi 0, %s180
      %s200 = sphi 0, %s202
      %s203 = sphi 0, %s200
      %s204 = sphi 0, %s203
      %s220 = sphi 0, %s204
    $region4: #{tpu_custom_call.1} parent=1 // loop_header_branch
      %20 = sbr.rel (%p18) target = $region8
    $region5: #{tpu_custom_call.1} parent=1 // loop_body
      %s22 = ssub.s32 %s17, 1
      %s23 = ssub.s32 %s17, 2
      %s24 = sadd.s32 %s17, 1
      %s25 = ssub.s32 %s17, %s24
      %p26 = scmp.eq.s32.totalorder %s25, 0
      %s28 = sadd.s32 %s27, 1
      %s29 = scalar_select %p26, %s27, %s28
      %p32 = pneg %p26
      %p33 = scmp.eq.s32.totalorder %s17, 1
      %p34 = por %p32, %p33
      %p35 = scmp.ne.s32.totalorder %s27, %s30
      %p36 = scmp.eq.s32.totalorder %s17, 0
      %p37 = por %p35, %p36
      %p38 = scmp.ne.s32.totalorder %s27, %s30
      %p39 = scmp.eq.s32.totalorder %s22, 1
      %p40 = por %p38, %p39
      %p41 = scmp.ne.s32.totalorder %s30, %s31
      %p42 = scmp.eq.s32.totalorder %s22, 0
      %p43 = por %p41, %p42
      %p44 = scmp.ne.s32.totalorder %s30, %s31
      %p45 = scmp.eq.s32.totalorder %s23, 1
      %p46 = por %p44, %p45
      %p48 = scmp.ne.s32.totalorder %s31, %s47
      %p49 = scmp.eq.s32.totalorder %s23, 0
      %p50 = por %p48, %p49
      %s52 = sadd.s32 %s51, 1
      %p55 = scmp.eq.s32.totalorder %s17, 1
      %p56 = scmp.ne.s32.totalorder %s51, %s53
      %p57 = scmp.eq.s32.totalorder %s17, 0
      %p58 = por %p56, %p57
      %p59 = scmp.ne.s32.totalorder %s51, %s53
      %p60 = scmp.eq.s32.totalorder %s22, 1
      %p61 = por %p59, %p60
      %p62 = scmp.ne.s32.totalorder %s53, %s54
      %p63 = scmp.eq.s32.totalorder %s22, 0
      %p64 = por %p62, %p63
      %p65 = scmp.ne.s32.totalorder %s53, %s54
      %p66 = scmp.eq.s32.totalorder %s23, 1
      %p67 = por %p65, %p66
      %p69 = scmp.ne.s32.totalorder %s54, %s68
      %p70 = scmp.eq.s32.totalorder %s23, 0
      %p71 = por %p69, %p70
      %s73 = sadd.s32 %s72, 1
      %p76 = scmp.eq.s32.totalorder %s17, 1
      %p77 = scmp.ne.s32.totalorder %s72, %s74
      %p78 = scmp.eq.s32.totalorder %s17, 0
      %p79 = por %p77, %p78
      %p80 = scmp.ne.s32.totalorder %s72, %s74
      %p81 = scmp.eq.s32.totalorder %s22, 1
      %p82 = por %p80, %p81
      %p83 = scmp.ne.s32.totalorder %s74, %s75
      %p84 = scmp.eq.s32.totalorder %s22, 0
      %p85 = por %p83, %p84
      %p86 = scmp.ne.s32.totalorder %s74, %s75
      %p87 = scmp.eq.s32.totalorder %s23, 1
      %p88 = por %p86, %p87
      %p90 = scmp.ne.s32.totalorder %s75, %s89
      %p91 = scmp.eq.s32.totalorder %s23, 0
      %p92 = por %p90, %p91
      %s94 = sadd.s32 %s93, 1
      %p97 = scmp.eq.s32.totalorder %s17, 1
      %p98 = scmp.ne.s32.totalorder %s93, %s95
      %p99 = scmp.eq.s32.totalorder %s17, 0
      %p100 = por %p98, %p99
      %p101 = scmp.ne.s32.totalorder %s93, %s95
      %p102 = scmp.eq.s32.totalorder %s22, 1
      %p103 = por %p101, %p102
      %p104 = scmp.ne.s32.totalorder %s95, %s96
      %p105 = scmp.eq.s32.totalorder %s22, 0
      %p106 = por %p104, %p105
      %p107 = scmp.ne.s32.totalorder %s95, %s96
      %p108 = scmp.eq.s32.totalorder %s23, 1
      %p109 = por %p107, %p108
      %p111 = scmp.ne.s32.totalorder %s96, %s110
      %p112 = scmp.eq.s32.totalorder %s23, 0
      %p113 = por %p111, %p112
      %s115 = sadd.s32 %s114, 1
      %p118 = scmp.eq.s32.totalorder %s17, 1
      %p119 = scmp.ne.s32.totalorder %s114, %s116
      %p120 = scmp.eq.s32.totalorder %s17, 0
      %p121 = por %p119, %p120
      %p122 = scmp.ne.s32.totalorder %s114, %s116
      %p123 = scmp.eq.s32.totalorder %s22, 1
      %p124 = por %p122, %p123
      %p125 = scmp.ne.s32.totalorder %s116, %s117
      %p126 = scmp.eq.s32.totalorder %s22, 0
      %p127 = por %p125, %p126
      %p128 = scmp.ne.s32.totalorder %s116, %s117
      %p129 = scmp.eq.s32.totalorder %s23, 1
      %p130 = por %p128, %p129
      %p132 = scmp.ne.s32.totalorder %s117, %s131
      %p133 = scmp.eq.s32.totalorder %s23, 0
      %p134 = por %p132, %p133
      %s136 = sadd.s32 %s135, 1
      %p139 = scmp.eq.s32.totalorder %s17, 1
      %p140 = scmp.ne.s32.totalorder %s135, %s137
      %p141 = scmp.eq.s32.totalorder %s17, 0
      %p142 = por %p140, %p141
      %p143 = scmp.ne.s32.totalorder %s135, %s137
      %p144 = scmp.eq.s32.totalorder %s22, 1
      %p145 = por %p143, %p144
      %p146 = scmp.ne.s32.totalorder %s137, %s138
      %p147 = scmp.eq.s32.totalorder %s22, 0
      %p148 = por %p146, %p147
      %p149 = scmp.ne.s32.totalorder %s137, %s138
      %p150 = scmp.eq.s32.totalorder %s23, 1
      %p151 = por %p149, %p150
      %p153 = scmp.ne.s32.totalorder %s138, %s152
      %p154 = scmp.eq.s32.totalorder %s23, 0
      %p155 = por %p153, %p154
      %s157 = sadd.s32 %s156, 1
      %p160 = scmp.eq.s32.totalorder %s17, 1
      %p161 = scmp.ne.s32.totalorder %s156, %s158
      %p162 = scmp.eq.s32.totalorder %s17, 0
      %p163 = por %p161, %p162
      %p164 = scmp.ne.s32.totalorder %s156, %s158
      %p165 = scmp.eq.s32.totalorder %s22, 1
      %p166 = por %p164, %p165
      %p167 = scmp.ne.s32.totalorder %s158, %s159
      %p168 = scmp.eq.s32.totalorder %s22, 0
      %p169 = por %p167, %p168
      %p170 = scmp.ne.s32.totalorder %s158, %s159
      %p171 = scmp.eq.s32.totalorder %s23, 1
      %p172 = por %p170, %p171
      %p174 = scmp.ne.s32.totalorder %s159, %s173
      %p175 = scmp.eq.s32.totalorder %s23, 0
      %p176 = por %p174, %p175
      %s178 = sadd.s32 %s177, 1
      %p181 = scmp.eq.s32.totalorder %s17, 1
      %p182 = scmp.ne.s32.totalorder %s177, %s179
      %p183 = scmp.eq.s32.totalorder %s17, 0
      %p184 = por %p182, %p183
      %p185 = scmp.ne.s32.totalorder %s177, %s179
      %p186 = scmp.eq.s32.totalorder %s22, 1
      %p187 = por %p185, %p186
      %p188 = scmp.ne.s32.totalorder %s179, %s180
      %p189 = scmp.eq.s32.totalorder %s22, 0
      %p190 = por %p188, %p189
      %p191 = scmp.ne.s32.totalorder %s179, %s180
      %p192 = scmp.eq.s32.totalorder %s23, 1
      %p193 = por %p191, %p192
      %p195 = scmp.ne.s32.totalorder %s180, %s194
      %p196 = scmp.eq.s32.totalorder %s23, 0
      %p197 = por %p195, %p196
      %s198 = ssub.s32 %s17, %s24
      %p199 = scmp.eq.s32.totalorder %s198, 0
      %s201 = sadd.s32 %s200, 1
      %s202 = scalar_select %p199, %s200, %s201
      %p205 = pneg %p199
      %p206 = scmp.eq.s32.totalorder %s17, 1
      %p207 = por %p205, %p206
      %p208 = scmp.ne.s32.totalorder %s200, %s203
      %p209 = scmp.eq.s32.totalorder %s17, 0
      %p210 = por %p208, %p209
      %p211 = scmp.ne.s32.totalorder %s200, %s203
      %p212 = scmp.eq.s32.totalorder %s22, 1
      %p213 = por %p211, %p212
      %p214 = scmp.ne.s32.totalorder %s203, %s204
      %p215 = scmp.eq.s32.totalorder %s22, 0
      %p216 = por %p214, %p215
      %p217 = scmp.ne.s32.totalorder %s203, %s204
      %p218 = scmp.eq.s32.totalorder %s23, 1
      %p219 = por %p217, %p218
      %p221 = scmp.ne.s32.totalorder %s204, %s220
      %p222 = scmp.eq.s32.totalorder %s23, 0
      %p223 = por %p221, %p222
      %p224 = scmp.le.s32.totalorder 1, %s17
      %p225 = scmp.lt.s32.totalorder %s17, 3
      %p226 = pnand %p224, %p225
      %p227 = pneg %p226
      // Predicated region
      $region9: #{tpu_custom_call.1} parent=5 // pred_check
        _
      $region10: #{tpu_custom_call.1} parent=5 // pred_check_branch
        %229 = sbr.rel (%p226) target = $region12
      $region11: #{tpu_custom_call.1} parent=5 // pred_region
        %s230 = ssub.s32 %s17, 1
        // Predicated region
        $region13: #{tpu_custom_call.1} parent=11 // pred_check
          %p231 = pneg %p64
        $region14: #{tpu_custom_call.1} parent=11 // pred_check_branch
          %233 = sbr.rel (%p231) target = $region16
        $region15: #{tpu_custom_call.1} parent=11 // pred_region
          _
        $region16: #{tpu_custom_call.1} parent=11 // pred_fallthru
          _
        // Predicated region
        $region17: #{tpu_custom_call.1} parent=11 // pred_check
          %p234 = pneg %p85
        $region18: #{tpu_custom_call.1} parent=11 // pred_check_branch
          %236 = sbr.rel (%p234) target = $region20
        $region19: #{tpu_custom_call.1} parent=11 // pred_region
          _
        $region20: #{tpu_custom_call.1} parent=11 // pred_fallthru
          _
        // Predicated region
        $region21: #{tpu_custom_call.1} parent=11 // pred_check
          %p237 = pneg %p106
        $region22: #{tpu_custom_call.1} parent=11 // pred_check_branch
          %239 = sbr.rel (%p237) target = $region24
        $region23: #{tpu_custom_call.1} parent=11 // pred_region
          _
        $region24: #{tpu_custom_call.1} parent=11 // pred_fallthru
          _
        // Predicated region
        $region25: #{tpu_custom_call.1} parent=11 // pred_check
          %p240 = pneg %p127
        $region26: #{tpu_custom_call.1} parent=11 // pred_check_branch
          %242 = sbr.rel (%p240) target = $region28
        $region27: #{tpu_custom_call.1} parent=11 // pred_region
          _
        $region28: #{tpu_custom_call.1} parent=11 // pred_fallthru
          _
        // Predicated region
        $region29: #{tpu_custom_call.1} parent=11 // pred_check
          %p243 = pneg %p148
        $region30: #{tpu_custom_call.1} parent=11 // pred_check_branch
          %245 = sbr.rel (%p243) target = $region32
        $region31: #{tpu_custom_call.1} parent=11 // pred_region
          _
        $region32: #{tpu_custom_call.1} parent=11 // pred_fallthru
          _
        // Predicated region
        $region33: #{tpu_custom_call.1} parent=11 // pred_check
          %p246 = pneg %p169
        $region34: #{tpu_custom_call.1} parent=11 // pred_check_branch
          %248 = sbr.rel (%p246) target = $region36
        $region35: #{tpu_custom_call.1} parent=11 // pred_region
          _
        $region36: #{tpu_custom_call.1} parent=11 // pred_fallthru
          _
        // Predicated region
        $region37: #{tpu_custom_call.1} parent=11 // pred_check
          %p249 = pneg %p190
        $region38: #{tpu_custom_call.1} parent=11 // pred_check_branch
          %251 = sbr.rel (%p249) target = $region40
        $region39: #{tpu_custom_call.1} parent=11 // pred_region
          _
        $region40: #{tpu_custom_call.1} parent=11 // pred_fallthru
          _
      $region12: #{tpu_custom_call.1} parent=5 // pred_fallthru
        _
      %p252 = scmp.lt.s32.totalorder %s17, 2
      // Predicated region
      $region41: #{tpu_custom_call.1} parent=5 // pred_check
        %p253 = pneg %p252
      $region42: #{tpu_custom_call.1} parent=5 // pred_check_branch
        %255 = sbr.rel (%p253) target = $region44
      $region43: #{tpu_custom_call.1} parent=5 // pred_region
        // Predicated region
        $region45: #{tpu_custom_call.1} parent=43 // pred_check
          %p256 = pneg %p37
        $region46: #{tpu_custom_call.1} parent=43 // pred_check_branch
          %258 = sbr.rel (%p256) target = $region48
        $region47: #{tpu_custom_call.1} parent=43 // pred_region
          %p259 = scmp.lt.s32.totalorder %s17, 1
          %s260 = scalar_select %p259, %s17, 1
          %s261 = smul.addr %s260, 2
          %s262 = smul.addr %s261, 8
          %s263 = scalar_lea.vmem %s0, %s262
        $region48: #{tpu_custom_call.1} parent=43 // pred_fallthru
          _
      $region44: #{tpu_custom_call.1} parent=5 // pred_fallthru
        _
      %p264 = scmp.le.s32.totalorder 1, %s17
      %p265 = scmp.lt.s32.totalorder %s17, 3
      %p266 = pnand %p264, %p265
      %p267 = pneg %p266
      // Predicated region
      $region49: #{tpu_custom_call.1} parent=5 // pred_check
        _
      $region50: #{tpu_custom_call.1} parent=5 // pred_check_branch
        %269 = sbr.rel (%p266) target = $region52
      $region51: #{tpu_custom_call.1} parent=5 // pred_region
        %s270 = ssub.s32 %s17, 1
        %p271 = scmp.lt.s32.totalorder %s22, 1
        %s272 = scalar_select %p271, %s22, 1
        %s273 = smul.addr %s272, 2
        %s274 = smul.addr %s273, 8
        %s275 = scalar_lea.vmem %s0, %s274
        %p276 = pneg %p43
        %p277 = pneg %p40
        %p278 = pneg %p64
        %p279 = pneg %p61
        %p280 = pneg %p85
        %p281 = pneg %p82
        %p282 = pneg %p106
        %p283 = pneg %p103
        %p284 = pneg %p127
        %p285 = pneg %p124
        %p286 = pneg %p148
        %p287 = pneg %p145
        %p288 = pneg %p169
        %p289 = pneg %p166
        %p290 = pneg %p190
        %p291 = pneg %p187
        %p292 = pneg %p216
        %p293 = pneg %p213
        %s294 = sand.u32 %s203, 1
        %s295 = scalar_lea.sflag [#allocation3], %s294
        %s296 = sand.u32 %s203, 1
        %s297 = smul.addr %s296, 32
        %s298 = scalar_lea.vmem [#allocation2], %s297
        %p299 = scmp.lt.s32.totalorder %s22, 1
        %s300 = scalar_select %p299, %s22, 1
        %s301 = smul.addr %s300, 2
        %s302 = smul.addr %s301, 8
        %s303 = scalar_lea.vmem %s0, %s302
        %v304 = vld [vmem:[%s303] sm:$0xff]
        %v305 = vld [vmem:[%s303 + $0x8] sm:$0xff]
        %v306 = vld [vmem:[%s1] sm:$0xff]
        %v307 = vld [vmem:[%s2] sm:$0xff]
        %v308 = vld [vmem:[%s3] sm:$0xff]
        %v309 = vadd.f32 %v304, %v305
        %310 = vadd.xlane.f32.xlu0 %v309
        %v311 = vpop.xlane.xlu0 %310
        %v312 = vmul.f32 %v304, %v304
        %v313 = vmul.f32 %v305, %v305
        %v314 = vadd.f32 %v312, %v313
        %315 = vadd.xlane.f32.xlu0 %v314
        %v316 = vpop.xlane.xlu0 %315
        %vm317 = vcmask 64512
        %v319 = vsel %vm317, %v306, 0
        %321 = vmatpush.msra.mxu0 0.0
        %322 = vmatpush.msra.mxu0 0.0
        %323 = vmatpush.msra.mxu0 0.0
        %324 = vmatpush.msra.mxu0 0.0
        %325 = vmatpush.msra.mxu0 0.0
        %326 = vmatpush.msra.mxu0 0.0
        %327 = vmatpush.msra.mxu0 0.0
        %328 = vmatpush.msra.mxu0 0.0
        %329 = vmatpush.msra.mxu0 0.0
        %330 = vmatpush.msra.mxu0 0.0
        %331 = vmatpush.msra.mxu0 0.0
        %332 = vmatpush.msra.mxu0 0.0
        %333 = vmatpush.msra.mxu0 0.0
        %334 = vmatpush.msra.mxu0 0.0
        %335 = vmatpush.msra.mxu0 0.0
        %v336 = vand.u32 %v311, 4294901760
        %337 = vmatpush.msra.mxu0 %v336
        %v338 = vand.u32 %v319, 4294901760
        %v339 = vsub.f32 %v319, %v338
        %v340 = vand.u32 %v339, 4294901760
        %v341 = vsub.f32 %v339, %v340
        %v342 = vand.u32 %v341, 4294901760
        %343 = vmatmul.f32.gmra.mxu0 %v342
        %v344 = vpop.f32.mrf.mxu0
        %v345 = vadd.f32 0.0, %v344
        %346 = vdwg.mxu0
        %347 = vmatpush.msra.mxu0 0.0
        %348 = vmatpush.msra.mxu0 0.0
        %349 = vmatpush.msra.mxu0 0.0
        %350 = vmatpush.msra.mxu0 0.0
        %351 = vmatpush.msra.mxu0 0.0
        %352 = vmatpush.msra.mxu0 0.0
        %353 = vmatpush.msra.mxu0 0.0
        %354 = vmatpush.msra.mxu0 0.0
        %355 = vmatpush.msra.mxu0 0.0
        %356 = vmatpush.msra.mxu0 0.0
        %357 = vmatpush.msra.mxu0 0.0
        %358 = vmatpush.msra.mxu0 0.0
        %359 = vmatpush.msra.mxu0 0.0
        %360 = vmatpush.msra.mxu0 0.0
        %361 = vmatpush.msra.mxu0 0.0
        %v362 = vand.u32 %v311, 4294901760
        %v363 = vsub.f32 %v311, %v362
        %v364 = vand.u32 %v363, 4294901760
        %v365 = vsub.f32 %v363, %v364
        %v366 = vand.u32 %v365, 4294901760
        %367 = vmatpush.msra.mxu0 %v366
        %v368 = vand.u32 %v319, 4294901760
        %369 = vmatmul.f32.gmra.mxu0 %v368
        %v370 = vpop.f32.mrf.mxu0
        %v371 = vadd.f32 %v345, %v370
        %372 = vdwg.mxu0
        %373 = vmatpush.msra.mxu0 0.0
        %374 = vmatpush.msra.mxu0 0.0
        %375 = vmatpush.msra.mxu0 0.0
        %376 = vmatpush.msra.mxu0 0.0
        %377 = vmatpush.msra.mxu0 0.0
        %378 = vmatpush.msra.mxu0 0.0
        %379 = vmatpush.msra.mxu0 0.0
        %380 = vmatpush.msra.mxu0 0.0
        %381 = vmatpush.msra.mxu0 0.0
        %382 = vmatpush.msra.mxu0 0.0
        %383 = vmatpush.msra.mxu0 0.0
        %384 = vmatpush.msra.mxu0 0.0
        %385 = vmatpush.msra.mxu0 0.0
        %386 = vmatpush.msra.mxu0 0.0
        %387 = vmatpush.msra.mxu0 0.0
        %v388 = vand.u32 %v311, 4294901760
        %v389 = vsub.f32 %v311, %v388
        %390 = vmatpush.msra.mxu0 %v389
        %v391 = vand.u32 %v319, 4294901760
        %v392 = vsub.f32 %v319, %v391
        %393 = vmatmul.f32.gmra.mxu0 %v392
        %v394 = vpop.f32.mrf.mxu0
        %v395 = vadd.f32 %v371, %v394
        %396 = vdwg.mxu0
        %397 = vmatpush.msra.mxu0 0.0
        %398 = vmatpush.msra.mxu0 0.0
        %399 = vmatpush.msra.mxu0 0.0
        %400 = vmatpush.msra.mxu0 0.0
        %401 = vmatpush.msra.mxu0 0.0
        %402 = vmatpush.msra.mxu0 0.0
        %403 = vmatpush.msra.mxu0 0.0
        %404 = vmatpush.msra.mxu0 0.0
        %405 = vmatpush.msra.mxu0 0.0
        %406 = vmatpush.msra.mxu0 0.0
        %407 = vmatpush.msra.mxu0 0.0
        %408 = vmatpush.msra.mxu0 0.0
        %409 = vmatpush.msra.mxu0 0.0
        %410 = vmatpush.msra.mxu0 0.0
        %411 = vmatpush.msra.mxu0 0.0
        %v412 = vand.u32 %v311, 4294901760
        %413 = vmatpush.msra.mxu0 %v412
        %v414 = vand.u32 %v319, 4294901760
        %v415 = vsub.f32 %v319, %v414
        %v416 = vand.u32 %v415, 4294901760
        %417 = vmatmul.f32.gmra.mxu0 %v416
        %v418 = vpop.f32.mrf.mxu0
        %v419 = vadd.f32 %v395, %v418
        %420 = vdwg.mxu0
        %421 = vmatpush.msra.mxu0 0.0
        %422 = vmatpush.msra.mxu0 0.0
        %423 = vmatpush.msra.mxu0 0.0
        %424 = vmatpush.msra.mxu0 0.0
        %425 = vmatpush.msra.mxu0 0.0
        %426 = vmatpush.msra.mxu0 0.0
        %427 = vmatpush.msra.mxu0 0.0
        %428 = vmatpush.msra.mxu0 0.0
        %429 = vmatpush.msra.mxu0 0.0
        %430 = vmatpush.msra.mxu0 0.0
        %431 = vmatpush.msra.mxu0 0.0
        %432 = vmatpush.msra.mxu0 0.0
        %433 = vmatpush.msra.mxu0 0.0
        %434 = vmatpush.msra.mxu0 0.0
        %435 = vmatpush.msra.mxu0 0.0
        %v436 = vand.u32 %v311, 4294901760
        %v437 = vsub.f32 %v311, %v436
        %v438 = vand.u32 %v437, 4294901760
        %439 = vmatpush.msra.mxu0 %v438
        %v440 = vand.u32 %v319, 4294901760
        %441 = vmatmul.f32.gmra.mxu0 %v440
        %v442 = vpop.f32.mrf.mxu0
        %v443 = vadd.f32 %v419, %v442
        %444 = vdwg.mxu0
        %445 = vmatpush.msra.mxu0 0.0
        %446 = vmatpush.msra.mxu0 0.0
        %447 = vmatpush.msra.mxu0 0.0
        %448 = vmatpush.msra.mxu0 0.0
        %449 = vmatpush.msra.mxu0 0.0
        %450 = vmatpush.msra.mxu0 0.0
        %451 = vmatpush.msra.mxu0 0.0
        %452 = vmatpush.msra.mxu0 0.0
        %453 = vmatpush.msra.mxu0 0.0
        %454 = vmatpush.msra.mxu0 0.0
        %455 = vmatpush.msra.mxu0 0.0
        %456 = vmatpush.msra.mxu0 0.0
        %457 = vmatpush.msra.mxu0 0.0
        %458 = vmatpush.msra.mxu0 0.0
        %459 = vmatpush.msra.mxu0 0.0
        %v460 = vand.u32 %v311, 4294901760
        %461 = vmatpush.msra.mxu0 %v460
        %v462 = vand.u32 %v319, 4294901760
        %463 = vmatmul.f32.gmra.mxu0 %v462
        %v464 = vpop.f32.mrf.mxu0
        %v465 = vadd.f32 %v443, %v464
        %466 = vdwg.mxu0
        %467 = vmatpush.msra.mxu0 0.0
        %468 = vmatpush.msra.mxu0 0.0
        %469 = vmatpush.msra.mxu0 0.0
        %470 = vmatpush.msra.mxu0 0.0
        %471 = vmatpush.msra.mxu0 0.0
        %472 = vmatpush.msra.mxu0 0.0
        %473 = vmatpush.msra.mxu0 0.0
        %474 = vmatpush.msra.mxu0 0.0
        %475 = vmatpush.msra.mxu0 0.0
        %476 = vmatpush.msra.mxu0 0.0
        %477 = vmatpush.msra.mxu0 0.0
        %478 = vmatpush.msra.mxu0 0.0
        %479 = vmatpush.msra.mxu0 0.0
        %480 = vmatpush.msra.mxu0 0.0
        %481 = vmatpush.msra.mxu0 0.0
        %v482 = vand.u32 %v316, 4294901760
        %483 = vmatpush.msra.mxu0 %v482
        %v484 = vand.u32 %v319, 4294901760
        %v485 = vsub.f32 %v319, %v484
        %v486 = vand.u32 %v485, 4294901760
        %v487 = vsub.f32 %v485, %v486
        %v488 = vand.u32 %v487, 4294901760
        %489 = vmatmul.f32.gmra.mxu0 %v488
        %v490 = vpop.f32.mrf.mxu0
        %v491 = vadd.f32 0.0, %v490
        %492 = vdwg.mxu0
        %493 = vmatpush.msra.mxu0 0.0
        %494 = vmatpush.msra.mxu0 0.0
        %495 = vmatpush.msra.mxu0 0.0
        %496 = vmatpush.msra.mxu0 0.0
        %497 = vmatpush.msra.mxu0 0.0
        %498 = vmatpush.msra.mxu0 0.0
        %499 = vmatpush.msra.mxu0 0.0
        %500 = vmatpush.msra.mxu0 0.0
        %501 = vmatpush.msra.mxu0 0.0
        %502 = vmatpush.msra.mxu0 0.0
        %503 = vmatpush.msra.mxu0 0.0
        %504 = vmatpush.msra.mxu0 0.0
        %505 = vmatpush.msra.mxu0 0.0
        %506 = vmatpush.msra.mxu0 0.0
        %507 = vmatpush.msra.mxu0 0.0
        %v508 = vand.u32 %v316, 4294901760
        %v509 = vsub.f32 %v316, %v508
        %v510 = vand.u32 %v509, 4294901760
        %v511 = vsub.f32 %v509, %v510
        %v512 = vand.u32 %v511, 4294901760
        %513 = vmatpush.msra.mxu0 %v512
        %v514 = vand.u32 %v319, 4294901760
        %515 = vmatmul.f32.gmra.mxu0 %v514
        %v516 = vpop.f32.mrf.mxu0
        %v517 = vadd.f32 %v491, %v516
        %518 = vdwg.mxu0
        %519 = vmatpush.msra.mxu0 0.0
        %520 = vmatpush.msra.mxu0 0.0
        %521 = vmatpush.msra.mxu0 0.0
        %522 = vmatpush.msra.mxu0 0.0
        %523 = vmatpush.msra.mxu0 0.0
        %524 = vmatpush.msra.mxu0 0.0
        %525 = vmatpush.msra.mxu0 0.0
        %526 = vmatpush.msra.mxu0 0.0
        %527 = vmatpush.msra.mxu0 0.0
        %528 = vmatpush.msra.mxu0 0.0
        %529 = vmatpush.msra.mxu0 0.0
        %530 = vmatpush.msra.mxu0 0.0
        %531 = vmatpush.msra.mxu0 0.0
        %532 = vmatpush.msra.mxu0 0.0
        %533 = vmatpush.msra.mxu0 0.0
        %v534 = vand.u32 %v316, 4294901760
        %v535 = vsub.f32 %v316, %v534
        %536 = vmatpush.msra.mxu0 %v535
        %v537 = vand.u32 %v319, 4294901760
        %v538 = vsub.f32 %v319, %v537
        %539 = vmatmul.f32.gmra.mxu0 %v538
        %v540 = vpop.f32.mrf.mxu0
        %v541 = vadd.f32 %v517, %v540
        %542 = vdwg.mxu0
        %543 = vmatpush.msra.mxu0 0.0
        %544 = vmatpush.msra.mxu0 0.0
        %545 = vmatpush.msra.mxu0 0.0
        %546 = vmatpush.msra.mxu0 0.0
        %547 = vmatpush.msra.mxu0 0.0
        %548 = vmatpush.msra.mxu0 0.0
        %549 = vmatpush.msra.mxu0 0.0
        %550 = vmatpush.msra.mxu0 0.0
        %551 = vmatpush.msra.mxu0 0.0
        %552 = vmatpush.msra.mxu0 0.0
        %553 = vmatpush.msra.mxu0 0.0
        %554 = vmatpush.msra.mxu0 0.0
        %555 = vmatpush.msra.mxu0 0.0
        %556 = vmatpush.msra.mxu0 0.0
        %557 = vmatpush.msra.mxu0 0.0
        %v558 = vand.u32 %v316, 4294901760
        %559 = vmatpush.msra.mxu0 %v558
        %v560 = vand.u32 %v319, 4294901760
        %v561 = vsub.f32 %v319, %v560
        %v562 = vand.u32 %v561, 4294901760
        %563 = vmatmul.f32.gmra.mxu0 %v562
        %v564 = vpop.f32.mrf.mxu0
        %v565 = vadd.f32 %v541, %v564
        %566 = vdwg.mxu0
        %567 = vmatpush.msra.mxu0 0.0
        %568 = vmatpush.msra.mxu0 0.0
        %569 = vmatpush.msra.mxu0 0.0
        %570 = vmatpush.msra.mxu0 0.0
        %571 = vmatpush.msra.mxu0 0.0
        %572 = vmatpush.msra.mxu0 0.0
        %573 = vmatpush.msra.mxu0 0.0
        %574 = vmatpush.msra.mxu0 0.0
        %575 = vmatpush.msra.mxu0 0.0
        %576 = vmatpush.msra.mxu0 0.0
        %577 = vmatpush.msra.mxu0 0.0
        %578 = vmatpush.msra.mxu0 0.0
        %579 = vmatpush.msra.mxu0 0.0
        %580 = vmatpush.msra.mxu0 0.0
        %581 = vmatpush.msra.mxu0 0.0
        %v582 = vand.u32 %v316, 4294901760
        %v583 = vsub.f32 %v316, %v582
        %v584 = vand.u32 %v583, 4294901760
        %585 = vmatpush.msra.mxu0 %v584
        %v586 = vand.u32 %v319, 4294901760
        %587 = vmatmul.f32.gmra.mxu0 %v586
        %v588 = vpop.f32.mrf.mxu0
        %v589 = vadd.f32 %v565, %v588
        %590 = vdwg.mxu0
        %591 = vmatpush.msra.mxu0 0.0
        %592 = vmatpush.msra.mxu0 0.0
        %593 = vmatpush.msra.mxu0 0.0
        %594 = vmatpush.msra.mxu0 0.0
        %595 = vmatpush.msra.mxu0 0.0
        %596 = vmatpush.msra.mxu0 0.0
        %597 = vmatpush.msra.mxu0 0.0
        %598 = vmatpush.msra.mxu0 0.0
        %599 = vmatpush.msra.mxu0 0.0
        %600 = vmatpush.msra.mxu0 0.0
        %601 = vmatpush.msra.mxu0 0.0
        %602 = vmatpush.msra.mxu0 0.0
        %603 = vmatpush.msra.mxu0 0.0
        %604 = vmatpush.msra.mxu0 0.0
        %605 = vmatpush.msra.mxu0 0.0
        %v606 = vand.u32 %v316, 4294901760
        %607 = vmatpush.msra.mxu0 %v606
        %v608 = vand.u32 %v319, 4294901760
        %609 = vmatmul.f32.gmra.mxu0 %v608
        %v610 = vpop.f32.mrf.mxu0
        %v611 = vadd.f32 %v589, %v610
        %612 = vdwg.mxu0
        %v613 = vmul.f32 %v465, %v465
        %v614 = vsub.f32 %v611, %v613
        %v615 = vadd.f32 %v614, 1e-05
        %v616 = vrsqrt.pop %v615
        %v617 = vmul.f32 %v616, %v615
        %v618 = vmul.f32 %v617, %v616
        %v619 = vmul.f32 0.5, %v618
        %v620 = vsub.f32 1.5, %v619
        %v621 = vmul.f32 %v616, %v620
        %vm622 = vweird.f32 %v615
        %vm623 = vweird.f32 %v616
        %vm624 = vmor %vm622, %vm623
        %v625 = vsel %vm624, %v616, %v621
        %627 = vset.pattern.permute.xlu0 0
        %628 = vperm.xlu0 %627, %v465
        %v629 = vpop.permute.xlu0 %628
        %v631 = vsub.f32 %v304, %v629
        %v632 = vsub.f32 %v305, %v629
        %v633 = vmul.f32 %v625, %v307
        %635 = vset.pattern.permute.xlu0 0
        %636 = vperm.xlu0 %635, %v633
        %v637 = vpop.permute.xlu0 %636
        %v639 = vmul.f32 %v631, %v637
        %v640 = vmul.f32 %v632, %v637
        %642 = vset.pattern.permute.xlu0 0
        %643 = vperm.xlu0 %642, %v308
        %v644 = vpop.permute.xlu0 %643
        %v646 = vadd.f32 %v639, %v644
        %v647 = vadd.f32 %v640, %v644
        %v648 = vxor.u32 %v646, 2147483648
        %v649 = vxor.u32 %v647, 2147483648
        %v650 = vmul.f32 %v648, 1.442695
        %v651 = vpow.pop %v650
        %v652 = vmul.f32 %v649, 1.442695
        %v653 = vpow.pop %v652
        %v654 = vadd.f32 %v651, 1.0
        %v655 = vadd.f32 %v653, 1.0
        %v656 = vrcp.pop %v654
        %v657 = vmul.f32 %v654, %v656
        %v658 = vsub.f32 1.0, %v657
        %v659 = vmul.f32 %v656, %v658
        %v660 = vadd.f32 %v656, %v659
        %vm661 = vweird.f32 %v654
        %vm662 = vweird.f32 %v656
        %vm663 = vmor %vm661, %vm662
        %v664 = vsel %vm663, %v656, %v660
        %v665 = vand.u32 2147483647, %v654
        %vm666 = vcmp.eq.f32.partialorder %v665, 8.507059e+37
        %v667 = vand.u32 %v654, 2147483648
        %v668 = vor.u32 1.1754944e-38, %v667
        %v669 = vsel %vm666, %v668, %v664
        %v670 = vmul.f32 1.0, %v669
        %v671 = vrcp.pop %v655
        %v672 = vmul.f32 %v655, %v671
        %v673 = vsub.f32 1.0, %v672
        %v674 = vmul.f32 %v671, %v673
        %v675 = vadd.f32 %v671, %v674
        %vm676 = vweird.f32 %v655
        %vm677 = vweird.f32 %v671
        %vm678 = vmor %vm676, %vm677
        %v679 = vsel %vm678, %v671, %v675
        %v680 = vand.u32 2147483647, %v655
        %vm681 = vcmp.eq.f32.partialorder %v680, 8.507059e+37
        %v682 = vand.u32 %v655, 2147483648
        %v683 = vor.u32 1.1754944e-38, %v682
        %v684 = vsel %vm681, %v683, %v679
        %v685 = vmul.f32 1.0, %v684
        %v686 = vmul.f32 %v646, %v670
        %v687 = vmul.f32 %v647, %v685
        %v688 = vlaneseq
        %v689 = vshrl.u32 %v688, 7
        %v690 = vstv %s22
        %vm691 = vcmp.eq.s32.totalorder %v689, %v690
        %v692 = vsel %vm691, 1, 0
        %v693 = vcvt.s32.f32 %v692
        %v694 = vld [vmem:[%s5] sm:$0xff]
        %v695 = vld [vmem:[%s5 + $0x8] sm:$0xff]
        %v696 = vld [vmem:[%s5 + $0x10] sm:$0xff]
        %v697 = vld [vmem:[%s5 + $0x18] sm:$0xff]
        %vm698 = vcmask 15360
        %v700 = vsel %vm698, %v694, 0
        %v703 = vsel %vm698, %v695, 0
        %v706 = vsel %vm698, %v696, 0
        %v709 = vsel %vm698, %v697, 0
        %vm711 = vcmask 1041408
        %v713 = vsel %vm711, %v693, 0
        %715 = vmatpush.msra.mxu0 0.0
        %716 = vmatpush.msra.mxu0 0.0
        %717 = vmatpush.msra.mxu0 0.0
        %718 = vmatpush.msra.mxu0 0.0
        %719 = vmatpush.msra.mxu0 0.0
        %720 = vmatpush.msra.mxu0 0.0
        %721 = vmatpush.msra.mxu0 0.0
        %722 = vmatpush.msra.mxu0 0.0
        %723 = vmatpush.msra.mxu0 0.0
        %724 = vmatpush.msra.mxu0 0.0
        %725 = vmatpush.msra.mxu0 0.0
        %726 = vmatpush.msra.mxu0 0.0
        %727 = vmatpush.msra.mxu0 0.0
        %728 = vmatpush.msra.mxu0 0.0
        %729 = vmatpush.msra.mxu0 0.0
        %v730 = vand.u32 %v713, 4294901760
        %731 = vmatpush.msra.mxu0 %v730
        %v732 = vand.u32 %v700, 4294901760
        %v733 = vsub.f32 %v700, %v732
        %v734 = vand.u32 %v733, 4294901760
        %v735 = vsub.f32 %v733, %v734
        %v736 = vand.u32 %v735, 4294901760
        %737 = vmatmul.f32.gmra.mxu0 %v736
        %v738 = vpop.f32.mrf.mxu0
        %v739 = vadd.f32 0.0, %v738
        %v740 = vand.u32 %v703, 4294901760
        %v741 = vsub.f32 %v703, %v740
        %v742 = vand.u32 %v741, 4294901760
        %v743 = vsub.f32 %v741, %v742
        %v744 = vand.u32 %v743, 4294901760
        %745 = vmatmul.f32.gmra.mxu0 %v744
        %v746 = vpop.f32.mrf.mxu0
        %v747 = vadd.f32 0.0, %v746
        %v748 = vand.u32 %v706, 4294901760
        %v749 = vsub.f32 %v706, %v748
        %v750 = vand.u32 %v749, 4294901760
        %v751 = vsub.f32 %v749, %v750
        %v752 = vand.u32 %v751, 4294901760
        %753 = vmatmul.f32.gmra.mxu0 %v752
        %v754 = vpop.f32.mrf.mxu0
        %v755 = vadd.f32 0.0, %v754
        %v756 = vand.u32 %v709, 4294901760
        %v757 = vsub.f32 %v709, %v756
        %v758 = vand.u32 %v757, 4294901760
        %v759 = vsub.f32 %v757, %v758
        %v760 = vand.u32 %v759, 4294901760
        %761 = vmatmul.f32.gmra.mxu0 %v760
        %v762 = vpop.f32.mrf.mxu0
        %v763 = vadd.f32 0.0, %v762
        %764 = vdwg.mxu0
        %765 = vmatpush.msra.mxu0 0.0
        %766 = vmatpush.msra.mxu0 0.0
        %767 = vmatpush.msra.mxu0 0.0
        %768 = vmatpush.msra.mxu0 0.0
        %769 = vmatpush.msra.mxu0 0.0
        %770 = vmatpush.msra.mxu0 0.0
        %771 = vmatpush.msra.mxu0 0.0
        %772 = vmatpush.msra.mxu0 0.0
        %773 = vmatpush.msra.mxu0 0.0
        %774 = vmatpush.msra.mxu0 0.0
        %775 = vmatpush.msra.mxu0 0.0
        %776 = vmatpush.msra.mxu0 0.0
        %777 = vmatpush.msra.mxu0 0.0
        %778 = vmatpush.msra.mxu0 0.0
        %779 = vmatpush.msra.mxu0 0.0
        %v780 = vand.u32 %v713, 4294901760
        %v781 = vsub.f32 %v713, %v780
        %v782 = vand.u32 %v781, 4294901760
        %v783 = vsub.f32 %v781, %v782
        %v784 = vand.u32 %v783, 4294901760
        %785 = vmatpush.msra.mxu0 %v784
        %v786 = vand.u32 %v700, 4294901760
        %787 = vmatmul.f32.gmra.mxu0 %v786
        %v788 = vpop.f32.mrf.mxu0
        %v789 = vadd.f32 %v739, %v788
        %v790 = vand.u32 %v703, 4294901760
        %791 = vmatmul.f32.gmra.mxu0 %v790
        %v792 = vpop.f32.mrf.mxu0
        %v793 = vadd.f32 %v747, %v792
        %v794 = vand.u32 %v706, 4294901760
        %795 = vmatmul.f32.gmra.mxu0 %v794
        %v796 = vpop.f32.mrf.mxu0
        %v797 = vadd.f32 %v755, %v796
        %v798 = vand.u32 %v709, 4294901760
        %799 = vmatmul.f32.gmra.mxu0 %v798
        %v800 = vpop.f32.mrf.mxu0
        %v801 = vadd.f32 %v763, %v800
        %802 = vdwg.mxu0
        %803 = vmatpush.msra.mxu0 0.0
        %804 = vmatpush.msra.mxu0 0.0
        %805 = vmatpush.msra.mxu0 0.0
        %806 = vmatpush.msra.mxu0 0.0
        %807 = vmatpush.msra.mxu0 0.0
        %808 = vmatpush.msra.mxu0 0.0
        %809 = vmatpush.msra.mxu0 0.0
        %810 = vmatpush.msra.mxu0 0.0
        %811 = vmatpush.msra.mxu0 0.0
        %812 = vmatpush.msra.mxu0 0.0
        %813 = vmatpush.msra.mxu0 0.0
        %814 = vmatpush.msra.mxu0 0.0
        %815 = vmatpush.msra.mxu0 0.0
        %816 = vmatpush.msra.mxu0 0.0
        %817 = vmatpush.msra.mxu0 0.0
        %v818 = vand.u32 %v713, 4294901760
        %v819 = vsub.f32 %v713, %v818
        %820 = vmatpush.msra.mxu0 %v819
        %v821 = vand.u32 %v700, 4294901760
        %v822 = vsub.f32 %v700, %v821
        %823 = vmatmul.f32.gmra.mxu0 %v822
        %v824 = vpop.f32.mrf.mxu0
        %v825 = vadd.f32 %v789, %v824
        %v826 = vand.u32 %v703, 4294901760
        %v827 = vsub.f32 %v703, %v826
        %828 = vmatmul.f32.gmra.mxu0 %v827
        %v829 = vpop.f32.mrf.mxu0
        %v830 = vadd.f32 %v793, %v829
        %v831 = vand.u32 %v706, 4294901760
        %v832 = vsub.f32 %v706, %v831
        %833 = vmatmul.f32.gmra.mxu0 %v832
        %v834 = vpop.f32.mrf.mxu0
        %v835 = vadd.f32 %v797, %v834
        %v836 = vand.u32 %v709, 4294901760
        %v837 = vsub.f32 %v709, %v836
        %838 = vmatmul.f32.gmra.mxu0 %v837
        %v839 = vpop.f32.mrf.mxu0
        %v840 = vadd.f32 %v801, %v839
        %841 = vdwg.mxu0
        %842 = vmatpush.msra.mxu0 0.0
        %843 = vmatpush.msra.mxu0 0.0
        %844 = vmatpush.msra.mxu0 0.0
        %845 = vmatpush.msra.mxu0 0.0
        %846 = vmatpush.msra.mxu0 0.0
        %847 = vmatpush.msra.mxu0 0.0
        %848 = vmatpush.msra.mxu0 0.0
        %849 = vmatpush.msra.mxu0 0.0
        %850 = vmatpush.msra.mxu0 0.0
        %851 = vmatpush.msra.mxu0 0.0
        %852 = vmatpush.msra.mxu0 0.0
        %853 = vmatpush.msra.mxu0 0.0
        %854 = vmatpush.msra.mxu0 0.0
        %855 = vmatpush.msra.mxu0 0.0
        %856 = vmatpush.msra.mxu0 0.0
        %v857 = vand.u32 %v713, 4294901760
        %858 = vmatpush.msra.mxu0 %v857
        %v859 = vand.u32 %v700, 4294901760
        %v860 = vsub.f32 %v700, %v859
        %v861 = vand.u32 %v860, 4294901760
        %862 = vmatmul.f32.gmra.mxu0 %v861
        %v863 = vpop.f32.mrf.mxu0
        %v864 = vadd.f32 %v825, %v863
        %v865 = vand.u32 %v703, 4294901760
        %v866 = vsub.f32 %v703, %v865
        %v867 = vand.u32 %v866, 4294901760
        %868 = vmatmul.f32.gmra.mxu0 %v867
        %v869 = vpop.f32.mrf.mxu0
        %v870 = vadd.f32 %v830, %v869
        %v871 = vand.u32 %v706, 4294901760
        %v872 = vsub.f32 %v706, %v871
        %v873 = vand.u32 %v872, 4294901760
        %874 = vmatmul.f32.gmra.mxu0 %v873
        %v875 = vpop.f32.mrf.mxu0
        %v876 = vadd.f32 %v835, %v875
        %v877 = vand.u32 %v709, 4294901760
        %v878 = vsub.f32 %v709, %v877
        %v879 = vand.u32 %v878, 4294901760
        %880 = vmatmul.f32.gmra.mxu0 %v879
        %v881 = vpop.f32.mrf.mxu0
        %v882 = vadd.f32 %v840, %v881
        %883 = vdwg.mxu0
        %884 = vmatpush.msra.mxu0 0.0
        %885 = vmatpush.msra.mxu0 0.0
        %886 = vmatpush.msra.mxu0 0.0
        %887 = vmatpush.msra.mxu0 0.0
        %888 = vmatpush.msra.mxu0 0.0
        %889 = vmatpush.msra.mxu0 0.0
        %890 = vmatpush.msra.mxu0 0.0
        %891 = vmatpush.msra.mxu0 0.0
        %892 = vmatpush.msra.mxu0 0.0
        %893 = vmatpush.msra.mxu0 0.0
        %894 = vmatpush.msra.mxu0 0.0
        %895 = vmatpush.msra.mxu0 0.0
        %896 = vmatpush.msra.mxu0 0.0
        %897 = vmatpush.msra.mxu0 0.0
        %898 = vmatpush.msra.mxu0 0.0
        %v899 = vand.u32 %v713, 4294901760
        %v900 = vsub.f32 %v713, %v899
        %v901 = vand.u32 %v900, 4294901760
        %902 = vmatpush.msra.mxu0 %v901
        %v903 = vand.u32 %v700, 4294901760
        %904 = vmatmul.f32.gmra.mxu0 %v903
        %v905 = vpop.f32.mrf.mxu0
        %v906 = vadd.f32 %v864, %v905
        %v907 = vand.u32 %v703, 4294901760
        %908 = vmatmul.f32.gmra.mxu0 %v907
        %v909 = vpop.f32.mrf.mxu0
        %v910 = vadd.f32 %v870, %v909
        %v911 = vand.u32 %v706, 4294901760
        %912 = vmatmul.f32.gmra.mxu0 %v911
        %v913 = vpop.f32.mrf.mxu0
        %v914 = vadd.f32 %v876, %v913
        %v915 = vand.u32 %v709, 4294901760
        %916 = vmatmul.f32.gmra.mxu0 %v915
        %v917 = vpop.f32.mrf.mxu0
        %v918 = vadd.f32 %v882, %v917
        %919 = vdwg.mxu0
        %920 = vmatpush.msra.mxu0 0.0
        %921 = vmatpush.msra.mxu0 0.0
        %922 = vmatpush.msra.mxu0 0.0
        %923 = vmatpush.msra.mxu0 0.0
        %924 = vmatpush.msra.mxu0 0.0
        %925 = vmatpush.msra.mxu0 0.0
        %926 = vmatpush.msra.mxu0 0.0
        %927 = vmatpush.msra.mxu0 0.0
        %928 = vmatpush.msra.mxu0 0.0
        %929 = vmatpush.msra.mxu0 0.0
        %930 = vmatpush.msra.mxu0 0.0
        %931 = vmatpush.msra.mxu0 0.0
        %932 = vmatpush.msra.mxu0 0.0
        %933 = vmatpush.msra.mxu0 0.0
        %934 = vmatpush.msra.mxu0 0.0
        %v935 = vand.u32 %v713, 4294901760
        %936 = vmatpush.msra.mxu0 %v935
        %v937 = vand.u32 %v700, 4294901760
        %938 = vmatmul.f32.gmra.mxu0 %v937
        %v939 = vpop.f32.mrf.mxu0
        %v940 = vadd.f32 %v906, %v939
        %v941 = vand.u32 %v703, 4294901760
        %942 = vmatmul.f32.gmra.mxu0 %v941
        %v943 = vpop.f32.mrf.mxu0
        %v944 = vadd.f32 %v910, %v943
        %v945 = vand.u32 %v706, 4294901760
        %946 = vmatmul.f32.gmra.mxu0 %v945
        %v947 = vpop.f32.mrf.mxu0
        %v948 = vadd.f32 %v914, %v947
        %v949 = vand.u32 %v709, 4294901760
        %950 = vmatmul.f32.gmra.mxu0 %v949
        %v951 = vpop.f32.mrf.mxu0
        %v952 = vadd.f32 %v918, %v951
        %953 = vdwg.mxu0
        %v954 = vxor.u32 %v940, 2147483648
        %v955 = vxor.u32 %v944, 2147483648
        %v956 = vxor.u32 %v948, 2147483648
        %v957 = vxor.u32 %v952, 2147483648
        %v958 = vmul.f32 %v954, 1.442695
        %v959 = vpow.pop %v958
        %v960 = vmul.f32 %v955, 1.442695
        %v961 = vpow.pop %v960
        %v962 = vmul.f32 %v956, 1.442695
        %v963 = vpow.pop %v962
        %v964 = vmul.f32 %v957, 1.442695
        %v965 = vpow.pop %v964
        %v966 = vadd.f32 %v959, 1.0
        %v967 = vadd.f32 %v961, 1.0
        %v968 = vadd.f32 %v963, 1.0
        %v969 = vadd.f32 %v965, 1.0
        %v970 = vrcp.pop %v966
        %v971 = vmul.f32 %v966, %v970
        %v972 = vsub.f32 1.0, %v971
        %v973 = vmul.f32 %v970, %v972
        %v974 = vadd.f32 %v970, %v973
        %vm975 = vweird.f32 %v966
        %vm976 = vweird.f32 %v970
        %vm977 = vmor %vm975, %vm976
        %v978 = vsel %vm977, %v970, %v974
        %v979 = vand.u32 2147483647, %v966
        %vm980 = vcmp.eq.f32.partialorder %v979, 8.507059e+37
        %v981 = vand.u32 %v966, 2147483648
        %v982 = vor.u32 1.1754944e-38, %v981
        %v983 = vsel %vm980, %v982, %v978
        %v984 = vmul.f32 1.0, %v983
        %v985 = vrcp.pop %v967
        %v986 = vmul.f32 %v967, %v985
        %v987 = vsub.f32 1.0, %v986
        %v988 = vmul.f32 %v985, %v987
        %v989 = vadd.f32 %v985, %v988
        %vm990 = vweird.f32 %v967
        %vm991 = vweird.f32 %v985
        %vm992 = vmor %vm990, %vm991
        %v993 = vsel %vm992, %v985, %v989
        %v994 = vand.u32 2147483647, %v967
        %vm995 = vcmp.eq.f32.partialorder %v994, 8.507059e+37
        %v996 = vand.u32 %v967, 2147483648
        %v997 = vor.u32 1.1754944e-38, %v996
        %v998 = vsel %vm995, %v997, %v993
        %v999 = vmul.f32 1.0, %v998
        %v1000 = vrcp.pop %v968
        %v1001 = vmul.f32 %v968, %v1000
        %v1002 = vsub.f32 1.0, %v1001
        %v1003 = vmul.f32 %v1000, %v1002
        %v1004 = vadd.f32 %v1000, %v1003
        %vm1005 = vweird.f32 %v968
        %vm1006 = vweird.f32 %v1000
        %vm1007 = vmor %vm1005, %vm1006
        %v1008 = vsel %vm1007, %v1000, %v1004
        %v1009 = vand.u32 2147483647, %v968
        %vm1010 = vcmp.eq.f32.partialorder %v1009, 8.507059e+37
        %v1011 = vand.u32 %v968, 2147483648
        %v1012 = vor.u32 1.1754944e-38, %v1011
        %v1013 = vsel %vm1010, %v1012, %v1008
        %v1014 = vmul.f32 1.0, %v1013
        %v1015 = vrcp.pop %v969
        %v1016 = vmul.f32 %v969, %v1015
        %v1017 = vsub.f32 1.0, %v1016
        %v1018 = vmul.f32 %v1015, %v1017
        %v1019 = vadd.f32 %v1015, %v1018
        %vm1020 = vweird.f32 %v969
        %vm1021 = vweird.f32 %v1015
        %vm1022 = vmor %vm1020, %vm1021
        %v1023 = vsel %vm1022, %v1015, %v1019
        %v1024 = vand.u32 2147483647, %v969
        %vm1025 = vcmp.eq.f32.partialorder %v1024, 8.507059e+37
        %v1026 = vand.u32 %v969, 2147483648
        %v1027 = vor.u32 1.1754944e-38, %v1026
        %v1028 = vsel %vm1025, %v1027, %v1023
        %v1029 = vmul.f32 1.0, %v1028
        %v1030 = vmul.f32 %v940, %v984
        %v1031 = vmul.f32 %v944, %v999
        %v1032 = vmul.f32 %v948, %v1014
        %v1033 = vmul.f32 %v952, %v1029
        %v1034 = vld [vmem:[%s6] sm:$0xff]
        %v1035 = vld [vmem:[%s6 + $0x8] sm:$0xff]
        %v1036 = vld [vmem:[%s7] sm:$0xff]
        %v1037 = vld [vmem:[%s7 + $0x8] sm:$0xff]
        %vm1038 = vcmask 261120
        %v1040 = vsel %vm1038, %v1034, 0
        %v1043 = vsel %vm1038, %v1035, 0
        %1045 = vmatpush.msra.mxu0 0.0
        %1046 = vmatpush.msra.mxu0 0.0
        %1047 = vmatpush.msra.mxu0 0.0
        %1048 = vmatpush.msra.mxu0 0.0
        %1049 = vmatpush.msra.mxu0 0.0
        %1050 = vmatpush.msra.mxu0 0.0
        %1051 = vmatpush.msra.mxu0 0.0
        %1052 = vmatpush.msra.mxu0 0.0
        %1053 = vmatpush.msra.mxu0 0.0
        %1054 = vmatpush.msra.mxu0 0.0
        %1055 = vmatpush.msra.mxu0 0.0
        %1056 = vmatpush.msra.mxu0 0.0
        %v1057 = vand.u32 %v1033, 4294901760
        %1058 = vmatpush.msra.mxu0 %v1057
        %v1059 = vand.u32 %v1032, 4294901760
        %1060 = vmatpush.msra.mxu0 %v1059
        %v1061 = vand.u32 %v1031, 4294901760
        %1062 = vmatpush.msra.mxu0 %v1061
        %v1063 = vand.u32 %v1030, 4294901760
        %1064 = vmatpush.msra.mxu0 %v1063
        %v1065 = vand.u32 %v1040, 4294901760
        %v1066 = vsub.f32 %v1040, %v1065
        %v1067 = vand.u32 %v1066, 4294901760
        %v1068 = vsub.f32 %v1066, %v1067
        %v1069 = vand.u32 %v1068, 4294901760
        %1070 = vmatmul.f32.gmra.mxu0 %v1069
        %v1071 = vpop.f32.mrf.mxu0
        %v1072 = vadd.f32 %v1036, %v1071
        %v1073 = vand.u32 %v1043, 4294901760
        %v1074 = vsub.f32 %v1043, %v1073
        %v1075 = vand.u32 %v1074, 4294901760
        %v1076 = vsub.f32 %v1074, %v1075
        %v1077 = vand.u32 %v1076, 4294901760
        %1078 = vmatmul.f32.gmra.mxu0 %v1077
        %v1079 = vpop.f32.mrf.mxu0
        %v1080 = vadd.f32 %v1037, %v1079
        %1081 = vdwg.mxu0
        %1082 = vmatpush.msra.mxu0 0.0
        %1083 = vmatpush.msra.mxu0 0.0
        %1084 = vmatpush.msra.mxu0 0.0
        %1085 = vmatpush.msra.mxu0 0.0
        %1086 = vmatpush.msra.mxu0 0.0
        %1087 = vmatpush.msra.mxu0 0.0
        %1088 = vmatpush.msra.mxu0 0.0
        %1089 = vmatpush.msra.mxu0 0.0
        %1090 = vmatpush.msra.mxu0 0.0
        %1091 = vmatpush.msra.mxu0 0.0
        %1092 = vmatpush.msra.mxu0 0.0
        %1093 = vmatpush.msra.mxu0 0.0
        %v1094 = vand.u32 %v1033, 4294901760
        %v1095 = vsub.f32 %v1033, %v1094
        %v1096 = vand.u32 %v1095, 4294901760
        %v1097 = vsub.f32 %v1095, %v1096
        %v1098 = vand.u32 %v1097, 4294901760
        %1099 = vmatpush.msra.mxu0 %v1098
        %v1100 = vand.u32 %v1032, 4294901760
        %v1101 = vsub.f32 %v1032, %v1100
        %v1102 = vand.u32 %v1101, 4294901760
        %v1103 = vsub.f32 %v1101, %v1102
        %v1104 = vand.u32 %v1103, 4294901760
        %1105 = vmatpush.msra.mxu0 %v1104
        %v1106 = vand.u32 %v1031, 4294901760
        %v1107 = vsub.f32 %v1031, %v1106
        %v1108 = vand.u32 %v1107, 4294901760
        %v1109 = vsub.f32 %v1107, %v1108
        %v1110 = vand.u32 %v1109, 4294901760
        %1111 = vmatpush.msra.mxu0 %v1110
        %v1112 = vand.u32 %v1030, 4294901760
        %v1113 = vsub.f32 %v1030, %v1112
        %v1114 = vand.u32 %v1113, 4294901760
        %v1115 = vsub.f32 %v1113, %v1114
        %v1116 = vand.u32 %v1115, 4294901760
        %1117 = vmatpush.msra.mxu0 %v1116
        %v1118 = vand.u32 %v1040, 4294901760
        %1119 = vmatmul.f32.gmra.mxu0 %v1118
        %v1120 = vpop.f32.mrf.mxu0
        %v1121 = vadd.f32 %v1072, %v1120
        %v1122 = vand.u32 %v1043, 4294901760
        %1123 = vmatmul.f32.gmra.mxu0 %v1122
        %v1124 = vpop.f32.mrf.mxu0
        %v1125 = vadd.f32 %v1080, %v1124
        %1126 = vdwg.mxu0
        %1127 = vmatpush.msra.mxu0 0.0
        %1128 = vmatpush.msra.mxu0 0.0
        %1129 = vmatpush.msra.mxu0 0.0
        %1130 = vmatpush.msra.mxu0 0.0
        %1131 = vmatpush.msra.mxu0 0.0
        %1132 = vmatpush.msra.mxu0 0.0
        %1133 = vmatpush.msra.mxu0 0.0
        %1134 = vmatpush.msra.mxu0 0.0
        %1135 = vmatpush.msra.mxu0 0.0
        %1136 = vmatpush.msra.mxu0 0.0
        %1137 = vmatpush.msra.mxu0 0.0
        %1138 = vmatpush.msra.mxu0 0.0
        %v1139 = vand.u32 %v1033, 4294901760
        %v1140 = vsub.f32 %v1033, %v1139
        %1141 = vmatpush.msra.mxu0 %v1140
        %v1142 = vand.u32 %v1032, 4294901760
        %v1143 = vsub.f32 %v1032, %v1142
        %1144 = vmatpush.msra.mxu0 %v1143
        %v1145 = vand.u32 %v1031, 4294901760
        %v1146 = vsub.f32 %v1031, %v1145
        %1147 = vmatpush.msra.mxu0 %v1146
        %v1148 = vand.u32 %v1030, 4294901760
        %v1149 = vsub.f32 %v1030, %v1148
        %1150 = vmatpush.msra.mxu0 %v1149
        %v1151 = vand.u32 %v1040, 4294901760
        %v1152 = vsub.f32 %v1040, %v1151
        %1153 = vmatmul.f32.gmra.mxu0 %v1152
        %v1154 = vpop.f32.mrf.mxu0
        %v1155 = vadd.f32 %v1121, %v1154
        %v1156 = vand.u32 %v1043, 4294901760
        %v1157 = vsub.f32 %v1043, %v1156
        %1158 = vmatmul.f32.gmra.mxu0 %v1157
        %v1159 = vpop.f32.mrf.mxu0
        %v1160 = vadd.f32 %v1125, %v1159
        %1161 = vdwg.mxu0
        %1162 = vmatpush.msra.mxu0 0.0
        %1163 = vmatpush.msra.mxu0 0.0
        %1164 = vmatpush.msra.mxu0 0.0
        %1165 = vmatpush.msra.mxu0 0.0
        %1166 = vmatpush.msra.mxu0 0.0
        %1167 = vmatpush.msra.mxu0 0.0
        %1168 = vmatpush.msra.mxu0 0.0
        %1169 = vmatpush.msra.mxu0 0.0
        %1170 = vmatpush.msra.mxu0 0.0
        %1171 = vmatpush.msra.mxu0 0.0
        %1172 = vmatpush.msra.mxu0 0.0
        %1173 = vmatpush.msra.mxu0 0.0
        %v1174 = vand.u32 %v1033, 4294901760
        %1175 = vmatpush.msra.mxu0 %v1174
        %v1176 = vand.u32 %v1032, 4294901760
        %1177 = vmatpush.msra.mxu0 %v1176
        %v1178 = vand.u32 %v1031, 4294901760
        %1179 = vmatpush.msra.mxu0 %v1178
        %v1180 = vand.u32 %v1030, 4294901760
        %1181 = vmatpush.msra.mxu0 %v1180
        %v1182 = vand.u32 %v1040, 4294901760
        %v1183 = vsub.f32 %v1040, %v1182
        %v1184 = vand.u32 %v1183, 4294901760
        %1185 = vmatmul.f32.gmra.mxu0 %v1184
        %v1186 = vpop.f32.mrf.mxu0
        %v1187 = vadd.f32 %v1155, %v1186
        %v1188 = vand.u32 %v1043, 4294901760
        %v1189 = vsub.f32 %v1043, %v1188
        %v1190 = vand.u32 %v1189, 4294901760
        %1191 = vmatmul.f32.gmra.mxu0 %v1190
        %v1192 = vpop.f32.mrf.mxu0
        %v1193 = vadd.f32 %v1160, %v1192
        %1194 = vdwg.mxu0
        %1195 = vmatpush.msra.mxu0 0.0
        %1196 = vmatpush.msra.mxu0 0.0
        %1197 = vmatpush.msra.mxu0 0.0
        %1198 = vmatpush.msra.mxu0 0.0
        %1199 = vmatpush.msra.mxu0 0.0
        %1200 = vmatpush.msra.mxu0 0.0
        %1201 = vmatpush.msra.mxu0 0.0
        %1202 = vmatpush.msra.mxu0 0.0
        %1203 = vmatpush.msra.mxu0 0.0
        %1204 = vmatpush.msra.mxu0 0.0
        %1205 = vmatpush.msra.mxu0 0.0
        %1206 = vmatpush.msra.mxu0 0.0
        %v1207 = vand.u32 %v1033, 4294901760
        %v1208 = vsub.f32 %v1033, %v1207
        %v1209 = vand.u32 %v1208, 4294901760
        %1210 = vmatpush.msra.mxu0 %v1209
        %v1211 = vand.u32 %v1032, 4294901760
        %v1212 = vsub.f32 %v1032, %v1211
        %v1213 = vand.u32 %v1212, 4294901760
        %1214 = vmatpush.msra.mxu0 %v1213
        %v1215 = vand.u32 %v1031, 4294901760
        %v1216 = vsub.f32 %v1031, %v1215
        %v1217 = vand.u32 %v1216, 4294901760
        %1218 = vmatpush.msra.mxu0 %v1217
        %v1219 = vand.u32 %v1030, 4294901760
        %v1220 = vsub.f32 %v1030, %v1219
        %v1221 = vand.u32 %v1220, 4294901760
        %1222 = vmatpush.msra.mxu0 %v1221
        %v1223 = vand.u32 %v1040, 4294901760
        %1224 = vmatmul.f32.gmra.mxu0 %v1223
        %v1225 = vpop.f32.mrf.mxu0
        %v1226 = vadd.f32 %v1187, %v1225
        %v1227 = vand.u32 %v1043, 4294901760
        %1228 = vmatmul.f32.gmra.mxu0 %v1227
        %v1229 = vpop.f32.mrf.mxu0
        %v1230 = vadd.f32 %v1193, %v1229
        %1231 = vdwg.mxu0
        %1232 = vmatpush.msra.mxu0 0.0
        %1233 = vmatpush.msra.mxu0 0.0
        %1234 = vmatpush.msra.mxu0 0.0
        %1235 = vmatpush.msra.mxu0 0.0
        %1236 = vmatpush.msra.mxu0 0.0
        %1237 = vmatpush.msra.mxu0 0.0
        %1238 = vmatpush.msra.mxu0 0.0
        %1239 = vmatpush.msra.mxu0 0.0
        %1240 = vmatpush.msra.mxu0 0.0
        %1241 = vmatpush.msra.mxu0 0.0
        %1242 = vmatpush.msra.mxu0 0.0
        %1243 = vmatpush.msra.mxu0 0.0
        %v1244 = vand.u32 %v1033, 4294901760
        %1245 = vmatpush.msra.mxu0 %v1244
        %v1246 = vand.u32 %v1032, 4294901760
        %1247 = vmatpush.msra.mxu0 %v1246
        %v1248 = vand.u32 %v1031, 4294901760
        %1249 = vmatpush.msra.mxu0 %v1248
        %v1250 = vand.u32 %v1030, 4294901760
        %1251 = vmatpush.msra.mxu0 %v1250
        %v1252 = vand.u32 %v1040, 4294901760
        %1253 = vmatmul.f32.gmra.mxu0 %v1252
        %v1254 = vpop.f32.mrf.mxu0
        %v1255 = vadd.f32 %v1226, %v1254
        %v1256 = vand.u32 %v1043, 4294901760
        %1257 = vmatmul.f32.gmra.mxu0 %v1256
        %v1258 = vpop.f32.mrf.mxu0
        %v1259 = vadd.f32 %v1230, %v1258
        %1260 = vdwg.mxu0
        %1262 = vset.pattern.permute.xlu0 0
        %1263 = vperm.xlu0 %1262, %v1255
        %v1264 = vpop.permute.xlu0 %1263
        %1267 = vset.pattern.permute.xlu0 0
        %1268 = vperm.xlu0 %1267, %v1259
        %v1269 = vpop.permute.xlu0 %1268
        %1271 = vst [vmem:[%s298] sm:$0xff] %v1264
        %1272 = vst [vmem:[%s298 + $0x8] sm:$0xff] %v1264
        %1273 = vst [vmem:[%s298 + $0x10] sm:$0xff] %v1269
        %1274 = vst [vmem:[%s298 + $0x18] sm:$0xff] %v1269
        %v1275 = vlaneseq
        %v1276 = vand.u32 %v1275, 127
        %v1277 = vadd.s32 %v1276, 128
        %vm1278 = vcmp.lt.s32.totalorder %v1276, 0
        %v1279 = vsub.s32 0, %v1276
        %v1280 = vsel %vm1278, %v1279, %v1276
        %v1281 = vshrl.u32 %v1280, 4
        %v1282 = vand.u32 %v1280, 15
        %v1283 = vsub.s32 0, %v1282
        %v1284 = vsel %vm1278, %v1283, %v1282
        %vm1285 = vcmp.lt.s32.totalorder %v1277, 0
        %v1286 = vsub.s32 0, %v1277
        %v1287 = vsel %vm1285, %v1286, %v1277
        %v1288 = vshrl.u32 %v1287, 4
        %v1289 = vand.u32 %v1287, 15
        %v1290 = vsub.s32 0, %v1289
        %v1291 = vsel %vm1285, %v1290, %v1289
        %vm1292 = vcmp.ne.s32.totalorder %v1284, 0
        %vm1293 = vcmp.ne.s32.totalorder %v1291, 0
        %vm1294 = vcmp.lt.s32.totalorder %v1284, 0
        %vm1295 = vcmp.lt.s32.totalorder %v1291, 0
        %vm1296 = vmand %vm1294, %vm1292
        %vm1297 = vmand %vm1295, %vm1293
        %v1298 = vadd.s32 %v1284, 16
        %v1299 = vadd.s32 %v1291, 16
        %v1300 = vsel %vm1296, %v1298, %v1284
        %v1301 = vsel %vm1297, %v1299, %v1291
        %v1302 = vld [vmem:[%s4] sm:$0xff]
        %v1303 = vld [vmem:[%s4 + $0x8] sm:$0xff]
        %v1305 = vsel %vm317, %v1302, 0
        %v1308 = vsel %vm317, %v1303, 0
        %1310 = vmatpush.msra.mxu0 0.0
        %1311 = vmatpush.msra.mxu0 0.0
        %1312 = vmatpush.msra.mxu0 0.0
        %1313 = vmatpush.msra.mxu0 0.0
        %1314 = vmatpush.msra.mxu0 0.0
        %1315 = vmatpush.msra.mxu0 0.0
        %1316 = vmatpush.msra.mxu0 0.0
        %1317 = vmatpush.msra.mxu0 0.0
        %1318 = vmatpush.msra.mxu0 0.0
        %1319 = vmatpush.msra.mxu0 0.0
        %1320 = vmatpush.msra.mxu0 0.0
        %1321 = vmatpush.msra.mxu0 0.0
        %1322 = vmatpush.msra.mxu0 0.0
        %1323 = vmatpush.msra.mxu0 0.0
        %1324 = vmatpush.msra.mxu0 0.0
        %v1325 = vand.u32 %v686, 4294901760
        %1326 = vmatpush.msra.mxu0 %v1325
        %v1327 = vand.u32 %v1305, 4294901760
        %v1328 = vsub.f32 %v1305, %v1327
        %v1329 = vand.u32 %v1328, 4294901760
        %v1330 = vsub.f32 %v1328, %v1329
        %v1331 = vand.u32 %v1330, 4294901760
        %1332 = vmatmul.f32.gmra.mxu0 %v1331
        %v1333 = vpop.f32.mrf.mxu0
        %v1334 = vadd.f32 0.0, %v1333
        %v1335 = vand.u32 %v1308, 4294901760
        %v1336 = vsub.f32 %v1308, %v1335
        %v1337 = vand.u32 %v1336, 4294901760
        %v1338 = vsub.f32 %v1336, %v1337
        %v1339 = vand.u32 %v1338, 4294901760
        %1340 = vmatmul.f32.gmra.mxu0 %v1339
        %v1341 = vpop.f32.mrf.mxu0
        %v1342 = vadd.f32 0.0, %v1341
        %1343 = vdwg.mxu0
        %1344 = vmatpush.msra.mxu0 0.0
        %1345 = vmatpush.msra.mxu0 0.0
        %1346 = vmatpush.msra.mxu0 0.0
        %1347 = vmatpush.msra.mxu0 0.0
        %1348 = vmatpush.msra.mxu0 0.0
        %1349 = vmatpush.msra.mxu0 0.0
        %1350 = vmatpush.msra.mxu0 0.0
        %1351 = vmatpush.msra.mxu0 0.0
        %1352 = vmatpush.msra.mxu0 0.0
        %1353 = vmatpush.msra.mxu0 0.0
        %1354 = vmatpush.msra.mxu0 0.0
        %1355 = vmatpush.msra.mxu0 0.0
        %1356 = vmatpush.msra.mxu0 0.0
        %1357 = vmatpush.msra.mxu0 0.0
        %1358 = vmatpush.msra.mxu0 0.0
        %v1359 = vand.u32 %v686, 4294901760
        %v1360 = vsub.f32 %v686, %v1359
        %v1361 = vand.u32 %v1360, 4294901760
        %v1362 = vsub.f32 %v1360, %v1361
        %v1363 = vand.u32 %v1362, 4294901760
        %1364 = vmatpush.msra.mxu0 %v1363
        %v1365 = vand.u32 %v1305, 4294901760
        %1366 = vmatmul.f32.gmra.mxu0 %v1365
        %v1367 = vpop.f32.mrf.mxu0
        %v1368 = vadd.f32 %v1334, %v1367
        %v1369 = vand.u32 %v1308, 4294901760
        %1370 = vmatmul.f32.gmra.mxu0 %v1369
        %v1371 = vpop.f32.mrf.mxu0
        %v1372 = vadd.f32 %v1342, %v1371
        %1373 = vdwg.mxu0
        %1374 = vmatpush.msra.mxu0 0.0
        %1375 = vmatpush.msra.mxu0 0.0
        %1376 = vmatpush.msra.mxu0 0.0
        %1377 = vmatpush.msra.mxu0 0.0
        %1378 = vmatpush.msra.mxu0 0.0
        %1379 = vmatpush.msra.mxu0 0.0
        %1380 = vmatpush.msra.mxu0 0.0
        %1381 = vmatpush.msra.mxu0 0.0
        %1382 = vmatpush.msra.mxu0 0.0
        %1383 = vmatpush.msra.mxu0 0.0
        %1384 = vmatpush.msra.mxu0 0.0
        %1385 = vmatpush.msra.mxu0 0.0
        %1386 = vmatpush.msra.mxu0 0.0
        %1387 = vmatpush.msra.mxu0 0.0
        %1388 = vmatpush.msra.mxu0 0.0
        %v1389 = vand.u32 %v686, 4294901760
        %v1390 = vsub.f32 %v686, %v1389
        %1391 = vmatpush.msra.mxu0 %v1390
        %v1392 = vand.u32 %v1305, 4294901760
        %v1393 = vsub.f32 %v1305, %v1392
        %1394 = vmatmul.f32.gmra.mxu0 %v1393
        %v1395 = vpop.f32.mrf.mxu0
        %v1396 = vadd.f32 %v1368, %v1395
        %v1397 = vand.u32 %v1308, 4294901760
        %v1398 = vsub.f32 %v1308, %v1397
        %1399 = vmatmul.f32.gmra.mxu0 %v1398
        %v1400 = vpop.f32.mrf.mxu0
        %v1401 = vadd.f32 %v1372, %v1400
        %1402 = vdwg.mxu0
        %1403 = vmatpush.msra.mxu0 0.0
        %1404 = vmatpush.msra.mxu0 0.0
        %1405 = vmatpush.msra.mxu0 0.0
        %1406 = vmatpush.msra.mxu0 0.0
        %1407 = vmatpush.msra.mxu0 0.0
        %1408 = vmatpush.msra.mxu0 0.0
        %1409 = vmatpush.msra.mxu0 0.0
        %1410 = vmatpush.msra.mxu0 0.0
        %1411 = vmatpush.msra.mxu0 0.0
        %1412 = vmatpush.msra.mxu0 0.0
        %1413 = vmatpush.msra.mxu0 0.0
        %1414 = vmatpush.msra.mxu0 0.0
        %1415 = vmatpush.msra.mxu0 0.0
        %1416 = vmatpush.msra.mxu0 0.0
        %1417 = vmatpush.msra.mxu0 0.0
        %v1418 = vand.u32 %v686, 4294901760
        %1419 = vmatpush.msra.mxu0 %v1418
        %v1420 = vand.u32 %v1305, 4294901760
        %v1421 = vsub.f32 %v1305, %v1420
        %v1422 = vand.u32 %v1421, 4294901760
        %1423 = vmatmul.f32.gmra.mxu0 %v1422
        %v1424 = vpop.f32.mrf.mxu0
        %v1425 = vadd.f32 %v1396, %v1424
        %v1426 = vand.u32 %v1308, 4294901760
        %v1427 = vsub.f32 %v1308, %v1426
        %v1428 = vand.u32 %v1427, 4294901760
        %1429 = vmatmul.f32.gmra.mxu0 %v1428
        %v1430 = vpop.f32.mrf.mxu0
        %v1431 = vadd.f32 %v1401, %v1430
        %1432 = vdwg.mxu0
        %1433 = vmatpush.msra.mxu0 0.0
        %1434 = vmatpush.msra.mxu0 0.0
        %1435 = vmatpush.msra.mxu0 0.0
        %1436 = vmatpush.msra.mxu0 0.0
        %1437 = vmatpush.msra.mxu0 0.0
        %1438 = vmatpush.msra.mxu0 0.0
        %1439 = vmatpush.msra.mxu0 0.0
        %1440 = vmatpush.msra.mxu0 0.0
        %1441 = vmatpush.msra.mxu0 0.0
        %1442 = vmatpush.msra.mxu0 0.0
        %1443 = vmatpush.msra.mxu0 0.0
        %1444 = vmatpush.msra.mxu0 0.0
        %1445 = vmatpush.msra.mxu0 0.0
        %1446 = vmatpush.msra.mxu0 0.0
        %1447 = vmatpush.msra.mxu0 0.0
        %v1448 = vand.u32 %v686, 4294901760
        %v1449 = vsub.f32 %v686, %v1448
        %v1450 = vand.u32 %v1449, 4294901760
        %1451 = vmatpush.msra.mxu0 %v1450
        %v1452 = vand.u32 %v1305, 4294901760
        %1453 = vmatmul.f32.gmra.mxu0 %v1452
        %v1454 = vpop.f32.mrf.mxu0
        %v1455 = vadd.f32 %v1425, %v1454
        %v1456 = vand.u32 %v1308, 4294901760
        %1457 = vmatmul.f32.gmra.mxu0 %v1456
        %v1458 = vpop.f32.mrf.mxu0
        %v1459 = vadd.f32 %v1431, %v1458
        %1460 = vdwg.mxu0
        %1461 = vmatpush.msra.mxu0 0.0
        %1462 = vmatpush.msra.mxu0 0.0
        %1463 = vmatpush.msra.mxu0 0.0
        %1464 = vmatpush.msra.mxu0 0.0
        %1465 = vmatpush.msra.mxu0 0.0
        %1466 = vmatpush.msra.mxu0 0.0
        %1467 = vmatpush.msra.mxu0 0.0
        %1468 = vmatpush.msra.mxu0 0.0
        %1469 = vmatpush.msra.mxu0 0.0
        %1470 = vmatpush.msra.mxu0 0.0
        %1471 = vmatpush.msra.mxu0 0.0
        %1472 = vmatpush.msra.mxu0 0.0
        %1473 = vmatpush.msra.mxu0 0.0
        %1474 = vmatpush.msra.mxu0 0.0
        %1475 = vmatpush.msra.mxu0 0.0
        %v1476 = vand.u32 %v686, 4294901760
        %1477 = vmatpush.msra.mxu0 %v1476
        %v1478 = vand.u32 %v1305, 4294901760
        %1479 = vmatmul.f32.gmra.mxu0 %v1478
        %v1480 = vpop.f32.mrf.mxu0
        %v1481 = vadd.f32 %v1455, %v1480
        %v1482 = vand.u32 %v1308, 4294901760
        %1483 = vmatmul.f32.gmra.mxu0 %v1482
        %v1484 = vpop.f32.mrf.mxu0
        %v1485 = vadd.f32 %v1459, %v1484
        %1486 = vdwg.mxu0
        %1487 = vmatpush.msra.mxu0 0.0
        %1488 = vmatpush.msra.mxu0 0.0
        %1489 = vmatpush.msra.mxu0 0.0
        %1490 = vmatpush.msra.mxu0 0.0
        %1491 = vmatpush.msra.mxu0 0.0
        %1492 = vmatpush.msra.mxu0 0.0
        %1493 = vmatpush.msra.mxu0 0.0
        %1494 = vmatpush.msra.mxu0 0.0
        %1495 = vmatpush.msra.mxu0 0.0
        %1496 = vmatpush.msra.mxu0 0.0
        %1497 = vmatpush.msra.mxu0 0.0
        %1498 = vmatpush.msra.mxu0 0.0
        %1499 = vmatpush.msra.mxu0 0.0
        %1500 = vmatpush.msra.mxu0 0.0
        %1501 = vmatpush.msra.mxu0 0.0
        %v1502 = vand.u32 %v687, 4294901760
        %1503 = vmatpush.msra.mxu0 %v1502
        %v1504 = vand.u32 %v1305, 4294901760
        %v1505 = vsub.f32 %v1305, %v1504
        %v1506 = vand.u32 %v1505, 4294901760
        %v1507 = vsub.f32 %v1505, %v1506
        %v1508 = vand.u32 %v1507, 4294901760
        %1509 = vmatmul.f32.gmra.mxu0 %v1508
        %v1510 = vpop.f32.mrf.mxu0
        %v1511 = vadd.f32 0.0, %v1510
        %v1512 = vand.u32 %v1308, 4294901760
        %v1513 = vsub.f32 %v1308, %v1512
        %v1514 = vand.u32 %v1513, 4294901760
        %v1515 = vsub.f32 %v1513, %v1514
        %v1516 = vand.u32 %v1515, 4294901760
        %1517 = vmatmul.f32.gmra.mxu0 %v1516
        %v1518 = vpop.f32.mrf.mxu0
        %v1519 = vadd.f32 0.0, %v1518
        %1520 = vdwg.mxu0
        %1521 = vmatpush.msra.mxu0 0.0
        %1522 = vmatpush.msra.mxu0 0.0
        %1523 = vmatpush.msra.mxu0 0.0
        %1524 = vmatpush.msra.mxu0 0.0
        %1525 = vmatpush.msra.mxu0 0.0
        %1526 = vmatpush.msra.mxu0 0.0
        %1527 = vmatpush.msra.mxu0 0.0
        %1528 = vmatpush.msra.mxu0 0.0
        %1529 = vmatpush.msra.mxu0 0.0
        %1530 = vmatpush.msra.mxu0 0.0
        %1531 = vmatpush.msra.mxu0 0.0
        %1532 = vmatpush.msra.mxu0 0.0
        %1533 = vmatpush.msra.mxu0 0.0
        %1534 = vmatpush.msra.mxu0 0.0
        %1535 = vmatpush.msra.mxu0 0.0
        %v1536 = vand.u32 %v687, 4294901760
        %v1537 = vsub.f32 %v687, %v1536
        %v1538 = vand.u32 %v1537, 4294901760
        %v1539 = vsub.f32 %v1537, %v1538
        %v1540 = vand.u32 %v1539, 4294901760
        %1541 = vmatpush.msra.mxu0 %v1540
        %v1542 = vand.u32 %v1305, 4294901760
        %1543 = vmatmul.f32.gmra.mxu0 %v1542
        %v1544 = vpop.f32.mrf.mxu0
        %v1545 = vadd.f32 %v1511, %v1544
        %v1546 = vand.u32 %v1308, 4294901760
        %1547 = vmatmul.f32.gmra.mxu0 %v1546
        %v1548 = vpop.f32.mrf.mxu0
        %v1549 = vadd.f32 %v1519, %v1548
        %1550 = vdwg.mxu0
        %1551 = vmatpush.msra.mxu0 0.0
        %1552 = vmatpush.msra.mxu0 0.0
        %1553 = vmatpush.msra.mxu0 0.0
        %1554 = vmatpush.msra.mxu0 0.0
        %1555 = vmatpush.msra.mxu0 0.0
        %1556 = vmatpush.msra.mxu0 0.0
        %1557 = vmatpush.msra.mxu0 0.0
        %1558 = vmatpush.msra.mxu0 0.0
        %1559 = vmatpush.msra.mxu0 0.0
        %1560 = vmatpush.msra.mxu0 0.0
        %1561 = vmatpush.msra.mxu0 0.0
        %1562 = vmatpush.msra.mxu0 0.0
        %1563 = vmatpush.msra.mxu0 0.0
        %1564 = vmatpush.msra.mxu0 0.0
        %1565 = vmatpush.msra.mxu0 0.0
        %v1566 = vand.u32 %v687, 4294901760
        %v1567 = vsub.f32 %v687, %v1566
        %1568 = vmatpush.msra.mxu0 %v1567
        %v1569 = vand.u32 %v1305, 4294901760
        %v1570 = vsub.f32 %v1305, %v1569
        %1571 = vmatmul.f32.gmra.mxu0 %v1570
        %v1572 = vpop.f32.mrf.mxu0
        %v1573 = vadd.f32 %v1545, %v1572
        %v1574 = vand.u32 %v1308, 4294901760
        %v1575 = vsub.f32 %v1308, %v1574
        %1576 = vmatmul.f32.gmra.mxu0 %v1575
        %v1577 = vpop.f32.mrf.mxu0
        %v1578 = vadd.f32 %v1549, %v1577
        %1579 = vdwg.mxu0
        %1580 = vmatpush.msra.mxu0 0.0
        %1581 = vmatpush.msra.mxu0 0.0
        %1582 = vmatpush.msra.mxu0 0.0
        %1583 = vmatpush.msra.mxu0 0.0
        %1584 = vmatpush.msra.mxu0 0.0
        %1585 = vmatpush.msra.mxu0 0.0
        %1586 = vmatpush.msra.mxu0 0.0
        %1587 = vmatpush.msra.mxu0 0.0
        %1588 = vmatpush.msra.mxu0 0.0
        %1589 = vmatpush.msra.mxu0 0.0
        %1590 = vmatpush.msra.mxu0 0.0
        %1591 = vmatpush.msra.mxu0 0.0
        %1592 = vmatpush.msra.mxu0 0.0
        %1593 = vmatpush.msra.mxu0 0.0
        %1594 = vmatpush.msra.mxu0 0.0
        %v1595 = vand.u32 %v687, 4294901760
        %1596 = vmatpush.msra.mxu0 %v1595
        %v1597 = vand.u32 %v1305, 4294901760
        %v1598 = vsub.f32 %v1305, %v1597
        %v1599 = vand.u32 %v1598, 4294901760
        %1600 = vmatmul.f32.gmra.mxu0 %v1599
        %v1601 = vpop.f32.mrf.mxu0
        %v1602 = vadd.f32 %v1573, %v1601
        %v1603 = vand.u32 %v1308, 4294901760
        %v1604 = vsub.f32 %v1308, %v1603
        %v1605 = vand.u32 %v1604, 4294901760
        %1606 = vmatmul.f32.gmra.mxu0 %v1605
        %v1607 = vpop.f32.mrf.mxu0
        %v1608 = vadd.f32 %v1578, %v1607
        %1609 = vdwg.mxu0
        %1610 = vmatpush.msra.mxu0 0.0
        %1611 = vmatpush.msra.mxu0 0.0
        %1612 = vmatpush.msra.mxu0 0.0
        %1613 = vmatpush.msra.mxu0 0.0
        %1614 = vmatpush.msra.mxu0 0.0
        %1615 = vmatpush.msra.mxu0 0.0
        %1616 = vmatpush.msra.mxu0 0.0
        %1617 = vmatpush.msra.mxu0 0.0
        %1618 = vmatpush.msra.mxu0 0.0
        %1619 = vmatpush.msra.mxu0 0.0
        %1620 = vmatpush.msra.mxu0 0.0
        %1621 = vmatpush.msra.mxu0 0.0
        %1622 = vmatpush.msra.mxu0 0.0
        %1623 = vmatpush.msra.mxu0 0.0
        %1624 = vmatpush.msra.mxu0 0.0
        %v1625 = vand.u32 %v687, 4294901760
        %v1626 = vsub.f32 %v687, %v1625
        %v1627 = vand.u32 %v1626, 4294901760
        %1628 = vmatpush.msra.mxu0 %v1627
        %v1629 = vand.u32 %v1305, 4294901760
        %1630 = vmatmul.f32.gmra.mxu0 %v1629
        %v1631 = vpop.f32.mrf.mxu0
        %v1632 = vadd.f32 %v1602, %v1631
        %v1633 = vand.u32 %v1308, 4294901760
        %1634 = vmatmul.f32.gmra.mxu0 %v1633
        %v1635 = vpop.f32.mrf.mxu0
        %v1636 = vadd.f32 %v1608, %v1635
        %1637 = vdwg.mxu0
        %1638 = vmatpush.msra.mxu0 0.0
        %1639 = vmatpush.msra.mxu0 0.0
        %1640 = vmatpush.msra.mxu0 0.0
        %1641 = vmatpush.msra.mxu0 0.0
        %1642 = vmatpush.msra.mxu0 0.0
        %1643 = vmatpush.msra.mxu0 0.0
        %1644 = vmatpush.msra.mxu0 0.0
        %1645 = vmatpush.msra.mxu0 0.0
        %1646 = vmatpush.msra.mxu0 0.0
        %1647 = vmatpush.msra.mxu0 0.0
        %1648 = vmatpush.msra.mxu0 0.0
        %1649 = vmatpush.msra.mxu0 0.0
        %1650 = vmatpush.msra.mxu0 0.0
        %1651 = vmatpush.msra.mxu0 0.0
        %1652 = vmatpush.msra.mxu0 0.0
        %v1653 = vand.u32 %v687, 4294901760
        %1654 = vmatpush.msra.mxu0 %v1653
        %v1655 = vand.u32 %v1305, 4294901760
        %1656 = vmatmul.f32.gmra.mxu0 %v1655
        %v1657 = vpop.f32.mrf.mxu0
        %v1658 = vadd.f32 %v1632, %v1657
        %v1659 = vand.u32 %v1308, 4294901760
        %1660 = vmatmul.f32.gmra.mxu0 %v1659
        %v1661 = vpop.f32.mrf.mxu0
        %v1662 = vadd.f32 %v1636, %v1661
        %1663 = vdwg.mxu0
        %v1664 = vadd.s32 %v1300, 4294967295
        %v1665 = vadd.s32 %v1301, 4294967295
        %vm1666 = vcmp.ge.s32.totalorder %v1664, 0
        %vm1667 = vcmp.ge.s32.totalorder %v1665, 0
        %vm1668 = vcmp.lt.s32.totalorder %v1664, 16
        %vm1669 = vcmp.lt.s32.totalorder %v1665, 16
        %vm1670 = vmand %vm1666, %vm1668
        %vm1671 = vmand %vm1667, %vm1669
        %v1672 = vsel %vm1670, 1, 0
        %v1673 = vsel %vm1671, 1, 0
        %vm1674 = vcmp.eq.s32.totalorder %v1672, 1
        %vm1675 = vcmp.eq.s32.totalorder %v1673, 1
        %1680 = vrot.lane.b32.xlu0 %v1481, 17
        %v1681 = vpop.permute.xlu0 %1680
        %1682 = vrot.lane.b32.xlu0 %v1658, 17
        %v1683 = vpop.permute.xlu0 %1682
        %1684 = vrot.lane.b32.xlu0 %v1485, 17
        %v1685 = vpop.permute.xlu0 %1684
        %1686 = vrot.lane.b32.xlu0 %v1662, 17
        %v1687 = vpop.permute.xlu0 %1686
        %vm1688 = vcmask 138240
        %v1689 = vsel %vm1688, %v1681, %v1683
        %v1690 = vsel %vm1688, %v1685, %v1687
        %v1695 = vsel %vm1674, %v1681, 0.0
        %v1696 = vsel %vm1675, %v1689, 0.0
        %v1697 = vsel %vm1674, %v1685, 0.0
        %v1698 = vsel %vm1675, %v1690, 0.0
        %v1699 = vld [vmem:[%s298] sm:$0xff]
        %v1700 = vld [vmem:[%s298 + $0x8] sm:$0xff]
        %v1701 = vld [vmem:[%s298 + $0x10] sm:$0xff]
        %v1702 = vld [vmem:[%s298 + $0x18] sm:$0xff]
        %v1703 = vadd.f32 %v1699, %v1695
        %v1704 = vadd.f32 %v1700, %v1696
        %v1705 = vadd.f32 %v1701, %v1697
        %v1706 = vadd.f32 %v1702, %v1698
        %vm1707 = vcmask 1047688
        %1708 = vst.msk [vmem:[%s298] sm:$0xff] %vm1707, %v1703
        %1709 = vst [vmem:[%s298 + $0x8] sm:$0xff] %v1704
        %1710 = vst.msk [vmem:[%s298 + $0x10] sm:$0xff] %vm1707, %v1705
        %1711 = vst [vmem:[%s298 + $0x18] sm:$0xff] %v1706
        %s1712 = scalar_lea.vmem %s4, 16
        %v1713 = vld [vmem:[%s1712] sm:$0xff]
        %v1714 = vld [vmem:[%s1712 + $0x8] sm:$0xff]
        %v1716 = vsel %vm317, %v1713, 0
        %v1719 = vsel %vm317, %v1714, 0
        %1721 = vmatpush.msra.mxu0 0.0
        %1722 = vmatpush.msra.mxu0 0.0
        %1723 = vmatpush.msra.mxu0 0.0
        %1724 = vmatpush.msra.mxu0 0.0
        %1725 = vmatpush.msra.mxu0 0.0
        %1726 = vmatpush.msra.mxu0 0.0
        %1727 = vmatpush.msra.mxu0 0.0
        %1728 = vmatpush.msra.mxu0 0.0
        %1729 = vmatpush.msra.mxu0 0.0
        %1730 = vmatpush.msra.mxu0 0.0
        %1731 = vmatpush.msra.mxu0 0.0
        %1732 = vmatpush.msra.mxu0 0.0
        %1733 = vmatpush.msra.mxu0 0.0
        %1734 = vmatpush.msra.mxu0 0.0
        %1735 = vmatpush.msra.mxu0 0.0
        %v1736 = vand.u32 %v686, 4294901760
        %1737 = vmatpush.msra.mxu0 %v1736
        %v1738 = vand.u32 %v1716, 4294901760
        %v1739 = vsub.f32 %v1716, %v1738
        %v1740 = vand.u32 %v1739, 4294901760
        %v1741 = vsub.f32 %v1739, %v1740
        %v1742 = vand.u32 %v1741, 4294901760
        %1743 = vmatmul.f32.gmra.mxu0 %v1742
        %v1744 = vpop.f32.mrf.mxu0
        %v1745 = vadd.f32 0.0, %v1744
        %v1746 = vand.u32 %v1719, 4294901760
        %v1747 = vsub.f32 %v1719, %v1746
        %v1748 = vand.u32 %v1747, 4294901760
        %v1749 = vsub.f32 %v1747, %v1748
        %v1750 = vand.u32 %v1749, 4294901760
        %1751 = vmatmul.f32.gmra.mxu0 %v1750
        %v1752 = vpop.f32.mrf.mxu0
        %v1753 = vadd.f32 0.0, %v1752
        %1754 = vdwg.mxu0
        %1755 = vmatpush.msra.mxu0 0.0
        %1756 = vmatpush.msra.mxu0 0.0
        %1757 = vmatpush.msra.mxu0 0.0
        %1758 = vmatpush.msra.mxu0 0.0
        %1759 = vmatpush.msra.mxu0 0.0
        %1760 = vmatpush.msra.mxu0 0.0
        %1761 = vmatpush.msra.mxu0 0.0
        %1762 = vmatpush.msra.mxu0 0.0
        %1763 = vmatpush.msra.mxu0 0.0
        %1764 = vmatpush.msra.mxu0 0.0
        %1765 = vmatpush.msra.mxu0 0.0
        %1766 = vmatpush.msra.mxu0 0.0
        %1767 = vmatpush.msra.mxu0 0.0
        %1768 = vmatpush.msra.mxu0 0.0
        %1769 = vmatpush.msra.mxu0 0.0
        %v1770 = vand.u32 %v686, 4294901760
        %v1771 = vsub.f32 %v686, %v1770
        %v1772 = vand.u32 %v1771, 4294901760
        %v1773 = vsub.f32 %v1771, %v1772
        %v1774 = vand.u32 %v1773, 4294901760
        %1775 = vmatpush.msra.mxu0 %v1774
        %v1776 = vand.u32 %v1716, 4294901760
        %1777 = vmatmul.f32.gmra.mxu0 %v1776
        %v1778 = vpop.f32.mrf.mxu0
        %v1779 = vadd.f32 %v1745, %v1778
        %v1780 = vand.u32 %v1719, 4294901760
        %1781 = vmatmul.f32.gmra.mxu0 %v1780
        %v1782 = vpop.f32.mrf.mxu0
        %v1783 = vadd.f32 %v1753, %v1782
        %1784 = vdwg.mxu0
        %1785 = vmatpush.msra.mxu0 0.0
        %1786 = vmatpush.msra.mxu0 0.0
        %1787 = vmatpush.msra.mxu0 0.0
        %1788 = vmatpush.msra.mxu0 0.0
        %1789 = vmatpush.msra.mxu0 0.0
        %1790 = vmatpush.msra.mxu0 0.0
        %1791 = vmatpush.msra.mxu0 0.0
        %1792 = vmatpush.msra.mxu0 0.0
        %1793 = vmatpush.msra.mxu0 0.0
        %1794 = vmatpush.msra.mxu0 0.0
        %1795 = vmatpush.msra.mxu0 0.0
        %1796 = vmatpush.msra.mxu0 0.0
        %1797 = vmatpush.msra.mxu0 0.0
        %1798 = vmatpush.msra.mxu0 0.0
        %1799 = vmatpush.msra.mxu0 0.0
        %v1800 = vand.u32 %v686, 4294901760
        %v1801 = vsub.f32 %v686, %v1800
        %1802 = vmatpush.msra.mxu0 %v1801
        %v1803 = vand.u32 %v1716, 4294901760
        %v1804 = vsub.f32 %v1716, %v1803
        %1805 = vmatmul.f32.gmra.mxu0 %v1804
        %v1806 = vpop.f32.mrf.mxu0
        %v1807 = vadd.f32 %v1779, %v1806
        %v1808 = vand.u32 %v1719, 4294901760
        %v1809 = vsub.f32 %v1719, %v1808
        %1810 = vmatmul.f32.gmra.mxu0 %v1809
        %v1811 = vpop.f32.mrf.mxu0
        %v1812 = vadd.f32 %v1783, %v1811
        %1813 = vdwg.mxu0
        %1814 = vmatpush.msra.mxu0 0.0
        %1815 = vmatpush.msra.mxu0 0.0
        %1816 = vmatpush.msra.mxu0 0.0
        %1817 = vmatpush.msra.mxu0 0.0
        %1818 = vmatpush.msra.mxu0 0.0
        %1819 = vmatpush.msra.mxu0 0.0
        %1820 = vmatpush.msra.mxu0 0.0
        %1821 = vmatpush.msra.mxu0 0.0
        %1822 = vmatpush.msra.mxu0 0.0
        %1823 = vmatpush.msra.mxu0 0.0
        %1824 = vmatpush.msra.mxu0 0.0
        %1825 = vmatpush.msra.mxu0 0.0
        %1826 = vmatpush.msra.mxu0 0.0
        %1827 = vmatpush.msra.mxu0 0.0
        %1828 = vmatpush.msra.mxu0 0.0
        %v1829 = vand.u32 %v686, 4294901760
        %1830 = vmatpush.msra.mxu0 %v1829
        %v1831 = vand.u32 %v1716, 4294901760
        %v1832 = vsub.f32 %v1716, %v1831
        %v1833 = vand.u32 %v1832, 4294901760
        %1834 = vmatmul.f32.gmra.mxu0 %v1833
        %v1835 = vpop.f32.mrf.mxu0
        %v1836 = vadd.f32 %v1807, %v1835
        %v1837 = vand.u32 %v1719, 4294901760
        %v1838 = vsub.f32 %v1719, %v1837
        %v1839 = vand.u32 %v1838, 4294901760
        %1840 = vmatmul.f32.gmra.mxu0 %v1839
        %v1841 = vpop.f32.mrf.mxu0
        %v1842 = vadd.f32 %v1812, %v1841
        %1843 = vdwg.mxu0
        %1844 = vmatpush.msra.mxu0 0.0
        %1845 = vmatpush.msra.mxu0 0.0
        %1846 = vmatpush.msra.mxu0 0.0
        %1847 = vmatpush.msra.mxu0 0.0
        %1848 = vmatpush.msra.mxu0 0.0
        %1849 = vmatpush.msra.mxu0 0.0
        %1850 = vmatpush.msra.mxu0 0.0
        %1851 = vmatpush.msra.mxu0 0.0
        %1852 = vmatpush.msra.mxu0 0.0
        %1853 = vmatpush.msra.mxu0 0.0
        %1854 = vmatpush.msra.mxu0 0.0
        %1855 = vmatpush.msra.mxu0 0.0
        %1856 = vmatpush.msra.mxu0 0.0
        %1857 = vmatpush.msra.mxu0 0.0
        %1858 = vmatpush.msra.mxu0 0.0
        %v1859 = vand.u32 %v686, 4294901760
        %v1860 = vsub.f32 %v686, %v1859
        %v1861 = vand.u32 %v1860, 4294901760
        %1862 = vmatpush.msra.mxu0 %v1861
        %v1863 = vand.u32 %v1716, 4294901760
        %1864 = vmatmul.f32.gmra.mxu0 %v1863
        %v1865 = vpop.f32.mrf.mxu0
        %v1866 = vadd.f32 %v1836, %v1865
        %v1867 = vand.u32 %v1719, 4294901760
        %1868 = vmatmul.f32.gmra.mxu0 %v1867
        %v1869 = vpop.f32.mrf.mxu0
        %v1870 = vadd.f32 %v1842, %v1869
        %1871 = vdwg.mxu0
        %1872 = vmatpush.msra.mxu0 0.0
        %1873 = vmatpush.msra.mxu0 0.0
        %1874 = vmatpush.msra.mxu0 0.0
        %1875 = vmatpush.msra.mxu0 0.0
        %1876 = vmatpush.msra.mxu0 0.0
        %1877 = vmatpush.msra.mxu0 0.0
        %1878 = vmatpush.msra.mxu0 0.0
        %1879 = vmatpush.msra.mxu0 0.0
        %1880 = vmatpush.msra.mxu0 0.0
        %1881 = vmatpush.msra.mxu0 0.0
        %1882 = vmatpush.msra.mxu0 0.0
        %1883 = vmatpush.msra.mxu0 0.0
        %1884 = vmatpush.msra.mxu0 0.0
        %1885 = vmatpush.msra.mxu0 0.0
        %1886 = vmatpush.msra.mxu0 0.0
        %v1887 = vand.u32 %v686, 4294901760
        %1888 = vmatpush.msra.mxu0 %v1887
        %v1889 = vand.u32 %v1716, 4294901760
        %1890 = vmatmul.f32.gmra.mxu0 %v1889
        %v1891 = vpop.f32.mrf.mxu0
        %v1892 = vadd.f32 %v1866, %v1891
        %v1893 = vand.u32 %v1719, 4294901760
        %1894 = vmatmul.f32.gmra.mxu0 %v1893
        %v1895 = vpop.f32.mrf.mxu0
        %v1896 = vadd.f32 %v1870, %v1895
        %1897 = vdwg.mxu0
        %1898 = vmatpush.msra.mxu0 0.0
        %1899 = vmatpush.msra.mxu0 0.0
        %1900 = vmatpush.msra.mxu0 0.0
        %1901 = vmatpush.msra.mxu0 0.0
        %1902 = vmatpush.msra.mxu0 0.0
        %1903 = vmatpush.msra.mxu0 0.0
        %1904 = vmatpush.msra.mxu0 0.0
        %1905 = vmatpush.msra.mxu0 0.0
        %1906 = vmatpush.msra.mxu0 0.0
        %1907 = vmatpush.msra.mxu0 0.0
        %1908 = vmatpush.msra.mxu0 0.0
        %1909 = vmatpush.msra.mxu0 0.0
        %1910 = vmatpush.msra.mxu0 0.0
        %1911 = vmatpush.msra.mxu0 0.0
        %1912 = vmatpush.msra.mxu0 0.0
        %v1913 = vand.u32 %v687, 4294901760
        %1914 = vmatpush.msra.mxu0 %v1913
        %v1915 = vand.u32 %v1716, 4294901760
        %v1916 = vsub.f32 %v1716, %v1915
        %v1917 = vand.u32 %v1916, 4294901760
        %v1918 = vsub.f32 %v1916, %v1917
        %v1919 = vand.u32 %v1918, 4294901760
        %1920 = vmatmul.f32.gmra.mxu0 %v1919
        %v1921 = vpop.f32.mrf.mxu0
        %v1922 = vadd.f32 0.0, %v1921
        %v1923 = vand.u32 %v1719, 4294901760
        %v1924 = vsub.f32 %v1719, %v1923
        %v1925 = vand.u32 %v1924, 4294901760
        %v1926 = vsub.f32 %v1924, %v1925
        %v1927 = vand.u32 %v1926, 4294901760
        %1928 = vmatmul.f32.gmra.mxu0 %v1927
        %v1929 = vpop.f32.mrf.mxu0
        %v1930 = vadd.f32 0.0, %v1929
        %1931 = vdwg.mxu0
        %1932 = vmatpush.msra.mxu0 0.0
        %1933 = vmatpush.msra.mxu0 0.0
        %1934 = vmatpush.msra.mxu0 0.0
        %1935 = vmatpush.msra.mxu0 0.0
        %1936 = vmatpush.msra.mxu0 0.0
        %1937 = vmatpush.msra.mxu0 0.0
        %1938 = vmatpush.msra.mxu0 0.0
        %1939 = vmatpush.msra.mxu0 0.0
        %1940 = vmatpush.msra.mxu0 0.0
        %1941 = vmatpush.msra.mxu0 0.0
        %1942 = vmatpush.msra.mxu0 0.0
        %1943 = vmatpush.msra.mxu0 0.0
        %1944 = vmatpush.msra.mxu0 0.0
        %1945 = vmatpush.msra.mxu0 0.0
        %1946 = vmatpush.msra.mxu0 0.0
        %v1947 = vand.u32 %v687, 4294901760
        %v1948 = vsub.f32 %v687, %v1947
        %v1949 = vand.u32 %v1948, 4294901760
        %v1950 = vsub.f32 %v1948, %v1949
        %v1951 = vand.u32 %v1950, 4294901760
        %1952 = vmatpush.msra.mxu0 %v1951
        %v1953 = vand.u32 %v1716, 4294901760
        %1954 = vmatmul.f32.gmra.mxu0 %v1953
        %v1955 = vpop.f32.mrf.mxu0
        %v1956 = vadd.f32 %v1922, %v1955
        %v1957 = vand.u32 %v1719, 4294901760
        %1958 = vmatmul.f32.gmra.mxu0 %v1957
        %v1959 = vpop.f32.mrf.mxu0
        %v1960 = vadd.f32 %v1930, %v1959
        %1961 = vdwg.mxu0
        %1962 = vmatpush.msra.mxu0 0.0
        %1963 = vmatpush.msra.mxu0 0.0
        %1964 = vmatpush.msra.mxu0 0.0
        %1965 = vmatpush.msra.mxu0 0.0
        %1966 = vmatpush.msra.mxu0 0.0
        %1967 = vmatpush.msra.mxu0 0.0
        %1968 = vmatpush.msra.mxu0 0.0
        %1969 = vmatpush.msra.mxu0 0.0
        %1970 = vmatpush.msra.mxu0 0.0
        %1971 = vmatpush.msra.mxu0 0.0
        %1972 = vmatpush.msra.mxu0 0.0
        %1973 = vmatpush.msra.mxu0 0.0
        %1974 = vmatpush.msra.mxu0 0.0
        %1975 = vmatpush.msra.mxu0 0.0
        %1976 = vmatpush.msra.mxu0 0.0
        %v1977 = vand.u32 %v687, 4294901760
        %v1978 = vsub.f32 %v687, %v1977
        %1979 = vmatpush.msra.mxu0 %v1978
        %v1980 = vand.u32 %v1716, 4294901760
        %v1981 = vsub.f32 %v1716, %v1980
        %1982 = vmatmul.f32.gmra.mxu0 %v1981
        %v1983 = vpop.f32.mrf.mxu0
        %v1984 = vadd.f32 %v1956, %v1983
        %v1985 = vand.u32 %v1719, 4294901760
        %v1986 = vsub.f32 %v1719, %v1985
        %1987 = vmatmul.f32.gmra.mxu0 %v1986
        %v1988 = vpop.f32.mrf.mxu0
        %v1989 = vadd.f32 %v1960, %v1988
        %1990 = vdwg.mxu0
        %1991 = vmatpush.msra.mxu0 0.0
        %1992 = vmatpush.msra.mxu0 0.0
        %1993 = vmatpush.msra.mxu0 0.0
        %1994 = vmatpush.msra.mxu0 0.0
        %1995 = vmatpush.msra.mxu0 0.0
        %1996 = vmatpush.msra.mxu0 0.0
        %1997 = vmatpush.msra.mxu0 0.0
        %1998 = vmatpush.msra.mxu0 0.0
        %1999 = vmatpush.msra.mxu0 0.0
        %2000 = vmatpush.msra.mxu0 0.0
        %2001 = vmatpush.msra.mxu0 0.0
        %2002 = vmatpush.msra.mxu0 0.0
        %2003 = vmatpush.msra.mxu0 0.0
        %2004 = vmatpush.msra.mxu0 0.0
        %2005 = vmatpush.msra.mxu0 0.0
        %v2006 = vand.u32 %v687, 4294901760
        %2007 = vmatpush.msra.mxu0 %v2006
        %v2008 = vand.u32 %v1716, 4294901760
        %v2009 = vsub.f32 %v1716, %v2008
        %v2010 = vand.u32 %v2009, 4294901760
        %2011 = vmatmul.f32.gmra.mxu0 %v2010
        %v2012 = vpop.f32.mrf.mxu0
        %v2013 = vadd.f32 %v1984, %v2012
        %v2014 = vand.u32 %v1719, 4294901760
        %v2015 = vsub.f32 %v1719, %v2014
        %v2016 = vand.u32 %v2015, 4294901760
        %2017 = vmatmul.f32.gmra.mxu0 %v2016
        %v2018 = vpop.f32.mrf.mxu0
        %v2019 = vadd.f32 %v1989, %v2018
        %2020 = vdwg.mxu0
        %2021 = vmatpush.msra.mxu0 0.0
        %2022 = vmatpush.msra.mxu0 0.0
        %2023 = vmatpush.msra.mxu0 0.0
        %2024 = vmatpush.msra.mxu0 0.0
        %2025 = vmatpush.msra.mxu0 0.0
        %2026 = vmatpush.msra.mxu0 0.0
        %2027 = vmatpush.msra.mxu0 0.0
        %2028 = vmatpush.msra.mxu0 0.0
        %2029 = vmatpush.msra.mxu0 0.0
        %2030 = vmatpush.msra.mxu0 0.0
        %2031 = vmatpush.msra.mxu0 0.0
        %2032 = vmatpush.msra.mxu0 0.0
        %2033 = vmatpush.msra.mxu0 0.0
        %2034 = vmatpush.msra.mxu0 0.0
        %2035 = vmatpush.msra.mxu0 0.0
        %v2036 = vand.u32 %v687, 4294901760
        %v2037 = vsub.f32 %v687, %v2036
        %v2038 = vand.u32 %v2037, 4294901760
        %2039 = vmatpush.msra.mxu0 %v2038
        %v2040 = vand.u32 %v1716, 4294901760
        %2041 = vmatmul.f32.gmra.mxu0 %v2040
        %v2042 = vpop.f32.mrf.mxu0
        %v2043 = vadd.f32 %v2013, %v2042
        %v2044 = vand.u32 %v1719, 4294901760
        %2045 = vmatmul.f32.gmra.mxu0 %v2044
        %v2046 = vpop.f32.mrf.mxu0
        %v2047 = vadd.f32 %v2019, %v2046
        %2048 = vdwg.mxu0
        %2049 = vmatpush.msra.mxu0 0.0
        %2050 = vmatpush.msra.mxu0 0.0
        %2051 = vmatpush.msra.mxu0 0.0
        %2052 = vmatpush.msra.mxu0 0.0
        %2053 = vmatpush.msra.mxu0 0.0
        %2054 = vmatpush.msra.mxu0 0.0
        %2055 = vmatpush.msra.mxu0 0.0
        %2056 = vmatpush.msra.mxu0 0.0
        %2057 = vmatpush.msra.mxu0 0.0
        %2058 = vmatpush.msra.mxu0 0.0
        %2059 = vmatpush.msra.mxu0 0.0
        %2060 = vmatpush.msra.mxu0 0.0
        %2061 = vmatpush.msra.mxu0 0.0
        %2062 = vmatpush.msra.mxu0 0.0
        %2063 = vmatpush.msra.mxu0 0.0
        %v2064 = vand.u32 %v687, 4294901760
        %2065 = vmatpush.msra.mxu0 %v2064
        %v2066 = vand.u32 %v1716, 4294901760
        %2067 = vmatmul.f32.gmra.mxu0 %v2066
        %v2068 = vpop.f32.mrf.mxu0
        %v2069 = vadd.f32 %v2043, %v2068
        %v2070 = vand.u32 %v1719, 4294901760
        %2071 = vmatmul.f32.gmra.mxu0 %v2070
        %v2072 = vpop.f32.mrf.mxu0
        %v2073 = vadd.f32 %v2047, %v2072
        %2074 = vdwg.mxu0
        %v2075 = vld [vmem:[%s298] sm:$0xff]
        %v2076 = vld [vmem:[%s298 + $0x8] sm:$0xff]
        %v2077 = vld [vmem:[%s298 + $0x10] sm:$0xff]
        %v2078 = vld [vmem:[%s298 + $0x18] sm:$0xff]
        %2083 = vrot.lane.b32.xlu0 %v1892, 16
        %v2084 = vpop.permute.xlu0 %2083
        %2085 = vrot.lane.b32.xlu0 %v2069, 16
        %v2086 = vpop.permute.xlu0 %2085
        %2087 = vrot.lane.b32.xlu0 %v1896, 16
        %v2088 = vpop.permute.xlu0 %2087
        %2089 = vrot.lane.b32.xlu0 %v2073, 16
        %v2090 = vpop.permute.xlu0 %2089
        %vm2091 = vcmask 130048
        %v2092 = vsel %vm2091, %v2084, %v2086
        %v2093 = vsel %vm2091, %v2088, %v2090
        %v2098 = vadd.f32 %v2075, %v2084
        %v2099 = vadd.f32 %v2076, %v2092
        %v2100 = vadd.f32 %v2077, %v2088
        %v2101 = vadd.f32 %v2078, %v2093
        %vm2102 = vcmask 1047680
        %2103 = vst.msk [vmem:[%s298] sm:$0xff] %vm2102, %v2098
        %2104 = vst [vmem:[%s298 + $0x8] sm:$0xff] %v2099
        %2105 = vst.msk [vmem:[%s298 + $0x10] sm:$0xff] %vm2102, %v2100
        %2106 = vst [vmem:[%s298 + $0x18] sm:$0xff] %v2101
        %s2107 = scalar_lea.vmem %s4, 32
        %v2108 = vld [vmem:[%s2107] sm:$0xff]
        %v2109 = vld [vmem:[%s2107 + $0x8] sm:$0xff]
        %v2111 = vsel %vm317, %v2108, 0
        %v2114 = vsel %vm317, %v2109, 0
        %2116 = vmatpush.msra.mxu0 0.0
        %2117 = vmatpush.msra.mxu0 0.0
        %2118 = vmatpush.msra.mxu0 0.0
        %2119 = vmatpush.msra.mxu0 0.0
        %2120 = vmatpush.msra.mxu0 0.0
        %2121 = vmatpush.msra.mxu0 0.0
        %2122 = vmatpush.msra.mxu0 0.0
        %2123 = vmatpush.msra.mxu0 0.0
        %2124 = vmatpush.msra.mxu0 0.0
        %2125 = vmatpush.msra.mxu0 0.0
        %2126 = vmatpush.msra.mxu0 0.0
        %2127 = vmatpush.msra.mxu0 0.0
        %2128 = vmatpush.msra.mxu0 0.0
        %2129 = vmatpush.msra.mxu0 0.0
        %2130 = vmatpush.msra.mxu0 0.0
        %v2131 = vand.u32 %v686, 4294901760
        %2132 = vmatpush.msra.mxu0 %v2131
        %v2133 = vand.u32 %v2111, 4294901760
        %v2134 = vsub.f32 %v2111, %v2133
        %v2135 = vand.u32 %v2134, 4294901760
        %v2136 = vsub.f32 %v2134, %v2135
        %v2137 = vand.u32 %v2136, 4294901760
        %2138 = vmatmul.f32.gmra.mxu0 %v2137
        %v2139 = vpop.f32.mrf.mxu0
        %v2140 = vadd.f32 0.0, %v2139
        %v2141 = vand.u32 %v2114, 4294901760
        %v2142 = vsub.f32 %v2114, %v2141
        %v2143 = vand.u32 %v2142, 4294901760
        %v2144 = vsub.f32 %v2142, %v2143
        %v2145 = vand.u32 %v2144, 4294901760
        %2146 = vmatmul.f32.gmra.mxu0 %v2145
        %v2147 = vpop.f32.mrf.mxu0
        %v2148 = vadd.f32 0.0, %v2147
        %2149 = vdwg.mxu0
        %2150 = vmatpush.msra.mxu0 0.0
        %2151 = vmatpush.msra.mxu0 0.0
        %2152 = vmatpush.msra.mxu0 0.0
        %2153 = vmatpush.msra.mxu0 0.0
        %2154 = vmatpush.msra.mxu0 0.0
        %2155 = vmatpush.msra.mxu0 0.0
        %2156 = vmatpush.msra.mxu0 0.0
        %2157 = vmatpush.msra.mxu0 0.0
        %2158 = vmatpush.msra.mxu0 0.0
        %2159 = vmatpush.msra.mxu0 0.0
        %2160 = vmatpush.msra.mxu0 0.0
        %2161 = vmatpush.msra.mxu0 0.0
        %2162 = vmatpush.msra.mxu0 0.0
        %2163 = vmatpush.msra.mxu0 0.0
        %2164 = vmatpush.msra.mxu0 0.0
        %v2165 = vand.u32 %v686, 4294901760
        %v2166 = vsub.f32 %v686, %v2165
        %v2167 = vand.u32 %v2166, 4294901760
        %v2168 = vsub.f32 %v2166, %v2167
        %v2169 = vand.u32 %v2168, 4294901760
        %2170 = vmatpush.msra.mxu0 %v2169
        %v2171 = vand.u32 %v2111, 4294901760
        %2172 = vmatmul.f32.gmra.mxu0 %v2171
        %v2173 = vpop.f32.mrf.mxu0
        %v2174 = vadd.f32 %v2140, %v2173
        %v2175 = vand.u32 %v2114, 4294901760
        %2176 = vmatmul.f32.gmra.mxu0 %v2175
        %v2177 = vpop.f32.mrf.mxu0
        %v2178 = vadd.f32 %v2148, %v2177
        %2179 = vdwg.mxu0
        %2180 = vmatpush.msra.mxu0 0.0
        %2181 = vmatpush.msra.mxu0 0.0
        %2182 = vmatpush.msra.mxu0 0.0
        %2183 = vmatpush.msra.mxu0 0.0
        %2184 = vmatpush.msra.mxu0 0.0
        %2185 = vmatpush.msra.mxu0 0.0
        %2186 = vmatpush.msra.mxu0 0.0
        %2187 = vmatpush.msra.mxu0 0.0
        %2188 = vmatpush.msra.mxu0 0.0
        %2189 = vmatpush.msra.mxu0 0.0
        %2190 = vmatpush.msra.mxu0 0.0
        %2191 = vmatpush.msra.mxu0 0.0
        %2192 = vmatpush.msra.mxu0 0.0
        %2193 = vmatpush.msra.mxu0 0.0
        %2194 = vmatpush.msra.mxu0 0.0
        %v2195 = vand.u32 %v686, 4294901760
        %v2196 = vsub.f32 %v686, %v2195
        %2197 = vmatpush.msra.mxu0 %v2196
        %v2198 = vand.u32 %v2111, 4294901760
        %v2199 = vsub.f32 %v2111, %v2198
        %2200 = vmatmul.f32.gmra.mxu0 %v2199
        %v2201 = vpop.f32.mrf.mxu0
        %v2202 = vadd.f32 %v2174, %v2201
        %v2203 = vand.u32 %v2114, 4294901760
        %v2204 = vsub.f32 %v2114, %v2203
        %2205 = vmatmul.f32.gmra.mxu0 %v2204
        %v2206 = vpop.f32.mrf.mxu0
        %v2207 = vadd.f32 %v2178, %v2206
        %2208 = vdwg.mxu0
        %2209 = vmatpush.msra.mxu0 0.0
        %2210 = vmatpush.msra.mxu0 0.0
        %2211 = vmatpush.msra.mxu0 0.0
        %2212 = vmatpush.msra.mxu0 0.0
        %2213 = vmatpush.msra.mxu0 0.0
        %2214 = vmatpush.msra.mxu0 0.0
        %2215 = vmatpush.msra.mxu0 0.0
        %2216 = vmatpush.msra.mxu0 0.0
        %2217 = vmatpush.msra.mxu0 0.0
        %2218 = vmatpush.msra.mxu0 0.0
        %2219 = vmatpush.msra.mxu0 0.0
        %2220 = vmatpush.msra.mxu0 0.0
        %2221 = vmatpush.msra.mxu0 0.0
        %2222 = vmatpush.msra.mxu0 0.0
        %2223 = vmatpush.msra.mxu0 0.0
        %v2224 = vand.u32 %v686, 4294901760
        %2225 = vmatpush.msra.mxu0 %v2224
        %v2226 = vand.u32 %v2111, 4294901760
        %v2227 = vsub.f32 %v2111, %v2226
        %v2228 = vand.u32 %v2227, 4294901760
        %2229 = vmatmul.f32.gmra.mxu0 %v2228
        %v2230 = vpop.f32.mrf.mxu0
        %v2231 = vadd.f32 %v2202, %v2230
        %v2232 = vand.u32 %v2114, 4294901760
        %v2233 = vsub.f32 %v2114, %v2232
        %v2234 = vand.u32 %v2233, 4294901760
        %2235 = vmatmul.f32.gmra.mxu0 %v2234
        %v2236 = vpop.f32.mrf.mxu0
        %v2237 = vadd.f32 %v2207, %v2236
        %2238 = vdwg.mxu0
        %2239 = vmatpush.msra.mxu0 0.0
        %2240 = vmatpush.msra.mxu0 0.0
        %2241 = vmatpush.msra.mxu0 0.0
        %2242 = vmatpush.msra.mxu0 0.0
        %2243 = vmatpush.msra.mxu0 0.0
        %2244 = vmatpush.msra.mxu0 0.0
        %2245 = vmatpush.msra.mxu0 0.0
        %2246 = vmatpush.msra.mxu0 0.0
        %2247 = vmatpush.msra.mxu0 0.0
        %2248 = vmatpush.msra.mxu0 0.0
        %2249 = vmatpush.msra.mxu0 0.0
        %2250 = vmatpush.msra.mxu0 0.0
        %2251 = vmatpush.msra.mxu0 0.0
        %2252 = vmatpush.msra.mxu0 0.0
        %2253 = vmatpush.msra.mxu0 0.0
        %v2254 = vand.u32 %v686, 4294901760
        %v2255 = vsub.f32 %v686, %v2254
        %v2256 = vand.u32 %v2255, 4294901760
        %2257 = vmatpush.msra.mxu0 %v2256
        %v2258 = vand.u32 %v2111, 4294901760
        %2259 = vmatmul.f32.gmra.mxu0 %v2258
        %v2260 = vpop.f32.mrf.mxu0
        %v2261 = vadd.f32 %v2231, %v2260
        %v2262 = vand.u32 %v2114, 4294901760
        %2263 = vmatmul.f32.gmra.mxu0 %v2262
        %v2264 = vpop.f32.mrf.mxu0
        %v2265 = vadd.f32 %v2237, %v2264
        %2266 = vdwg.mxu0
        %2267 = vmatpush.msra.mxu0 0.0
        %2268 = vmatpush.msra.mxu0 0.0
        %2269 = vmatpush.msra.mxu0 0.0
        %2270 = vmatpush.msra.mxu0 0.0
        %2271 = vmatpush.msra.mxu0 0.0
        %2272 = vmatpush.msra.mxu0 0.0
        %2273 = vmatpush.msra.mxu0 0.0
        %2274 = vmatpush.msra.mxu0 0.0
        %2275 = vmatpush.msra.mxu0 0.0
        %2276 = vmatpush.msra.mxu0 0.0
        %2277 = vmatpush.msra.mxu0 0.0
        %2278 = vmatpush.msra.mxu0 0.0
        %2279 = vmatpush.msra.mxu0 0.0
        %2280 = vmatpush.msra.mxu0 0.0
        %2281 = vmatpush.msra.mxu0 0.0
        %v2282 = vand.u32 %v686, 4294901760
        %2283 = vmatpush.msra.mxu0 %v2282
        %v2284 = vand.u32 %v2111, 4294901760
        %2285 = vmatmul.f32.gmra.mxu0 %v2284
        %v2286 = vpop.f32.mrf.mxu0
        %v2287 = vadd.f32 %v2261, %v2286
        %v2288 = vand.u32 %v2114, 4294901760
        %2289 = vmatmul.f32.gmra.mxu0 %v2288
        %v2290 = vpop.f32.mrf.mxu0
        %v2291 = vadd.f32 %v2265, %v2290
        %2292 = vdwg.mxu0
        %2293 = vmatpush.msra.mxu0 0.0
        %2294 = vmatpush.msra.mxu0 0.0
        %2295 = vmatpush.msra.mxu0 0.0
        %2296 = vmatpush.msra.mxu0 0.0
        %2297 = vmatpush.msra.mxu0 0.0
        %2298 = vmatpush.msra.mxu0 0.0
        %2299 = vmatpush.msra.mxu0 0.0
        %2300 = vmatpush.msra.mxu0 0.0
        %2301 = vmatpush.msra.mxu0 0.0
        %2302 = vmatpush.msra.mxu0 0.0
        %2303 = vmatpush.msra.mxu0 0.0
        %2304 = vmatpush.msra.mxu0 0.0
        %2305 = vmatpush.msra.mxu0 0.0
        %2306 = vmatpush.msra.mxu0 0.0
        %2307 = vmatpush.msra.mxu0 0.0
        %v2308 = vand.u32 %v687, 4294901760
        %2309 = vmatpush.msra.mxu0 %v2308
        %v2310 = vand.u32 %v2111, 4294901760
        %v2311 = vsub.f32 %v2111, %v2310
        %v2312 = vand.u32 %v2311, 4294901760
        %v2313 = vsub.f32 %v2311, %v2312
        %v2314 = vand.u32 %v2313, 4294901760
        %2315 = vmatmul.f32.gmra.mxu0 %v2314
        %v2316 = vpop.f32.mrf.mxu0
        %v2317 = vadd.f32 0.0, %v2316
        %v2318 = vand.u32 %v2114, 4294901760
        %v2319 = vsub.f32 %v2114, %v2318
        %v2320 = vand.u32 %v2319, 4294901760
        %v2321 = vsub.f32 %v2319, %v2320
        %v2322 = vand.u32 %v2321, 4294901760
        %2323 = vmatmul.f32.gmra.mxu0 %v2322
        %v2324 = vpop.f32.mrf.mxu0
        %v2325 = vadd.f32 0.0, %v2324
        %2326 = vdwg.mxu0
        %2327 = vmatpush.msra.mxu0 0.0
        %2328 = vmatpush.msra.mxu0 0.0
        %2329 = vmatpush.msra.mxu0 0.0
        %2330 = vmatpush.msra.mxu0 0.0
        %2331 = vmatpush.msra.mxu0 0.0
        %2332 = vmatpush.msra.mxu0 0.0
        %2333 = vmatpush.msra.mxu0 0.0
        %2334 = vmatpush.msra.mxu0 0.0
        %2335 = vmatpush.msra.mxu0 0.0
        %2336 = vmatpush.msra.mxu0 0.0
        %2337 = vmatpush.msra.mxu0 0.0
        %2338 = vmatpush.msra.mxu0 0.0
        %2339 = vmatpush.msra.mxu0 0.0
        %2340 = vmatpush.msra.mxu0 0.0
        %2341 = vmatpush.msra.mxu0 0.0
        %v2342 = vand.u32 %v687, 4294901760
        %v2343 = vsub.f32 %v687, %v2342
        %v2344 = vand.u32 %v2343, 4294901760
        %v2345 = vsub.f32 %v2343, %v2344
        %v2346 = vand.u32 %v2345, 4294901760
        %2347 = vmatpush.msra.mxu0 %v2346
        %v2348 = vand.u32 %v2111, 4294901760
        %2349 = vmatmul.f32.gmra.mxu0 %v2348
        %v2350 = vpop.f32.mrf.mxu0
        %v2351 = vadd.f32 %v2317, %v2350
        %v2352 = vand.u32 %v2114, 4294901760
        %2353 = vmatmul.f32.gmra.mxu0 %v2352
        %v2354 = vpop.f32.mrf.mxu0
        %v2355 = vadd.f32 %v2325, %v2354
        %2356 = vdwg.mxu0
        %2357 = vmatpush.msra.mxu0 0.0
        %2358 = vmatpush.msra.mxu0 0.0
        %2359 = vmatpush.msra.mxu0 0.0
        %2360 = vmatpush.msra.mxu0 0.0
        %2361 = vmatpush.msra.mxu0 0.0
        %2362 = vmatpush.msra.mxu0 0.0
        %2363 = vmatpush.msra.mxu0 0.0
        %2364 = vmatpush.msra.mxu0 0.0
        %2365 = vmatpush.msra.mxu0 0.0
        %2366 = vmatpush.msra.mxu0 0.0
        %2367 = vmatpush.msra.mxu0 0.0
        %2368 = vmatpush.msra.mxu0 0.0
        %2369 = vmatpush.msra.mxu0 0.0
        %2370 = vmatpush.msra.mxu0 0.0
        %2371 = vmatpush.msra.mxu0 0.0
        %v2372 = vand.u32 %v687, 4294901760
        %v2373 = vsub.f32 %v687, %v2372
        %2374 = vmatpush.msra.mxu0 %v2373
        %v2375 = vand.u32 %v2111, 4294901760
        %v2376 = vsub.f32 %v2111, %v2375
        %2377 = vmatmul.f32.gmra.mxu0 %v2376
        %v2378 = vpop.f32.mrf.mxu0
        %v2379 = vadd.f32 %v2351, %v2378
        %v2380 = vand.u32 %v2114, 4294901760
        %v2381 = vsub.f32 %v2114, %v2380
        %2382 = vmatmul.f32.gmra.mxu0 %v2381
        %v2383 = vpop.f32.mrf.mxu0
        %v2384 = vadd.f32 %v2355, %v2383
        %2385 = vdwg.mxu0
        %2386 = vmatpush.msra.mxu0 0.0
        %2387 = vmatpush.msra.mxu0 0.0
        %2388 = vmatpush.msra.mxu0 0.0
        %2389 = vmatpush.msra.mxu0 0.0
        %2390 = vmatpush.msra.mxu0 0.0
        %2391 = vmatpush.msra.mxu0 0.0
        %2392 = vmatpush.msra.mxu0 0.0
        %2393 = vmatpush.msra.mxu0 0.0
        %2394 = vmatpush.msra.mxu0 0.0
        %2395 = vmatpush.msra.mxu0 0.0
        %2396 = vmatpush.msra.mxu0 0.0
        %2397 = vmatpush.msra.mxu0 0.0
        %2398 = vmatpush.msra.mxu0 0.0
        %2399 = vmatpush.msra.mxu0 0.0
        %2400 = vmatpush.msra.mxu0 0.0
        %v2401 = vand.u32 %v687, 4294901760
        %2402 = vmatpush.msra.mxu0 %v2401
        %v2403 = vand.u32 %v2111, 4294901760
        %v2404 = vsub.f32 %v2111, %v2403
        %v2405 = vand.u32 %v2404, 4294901760
        %2406 = vmatmul.f32.gmra.mxu0 %v2405
        %v2407 = vpop.f32.mrf.mxu0
        %v2408 = vadd.f32 %v2379, %v2407
        %v2409 = vand.u32 %v2114, 4294901760
        %v2410 = vsub.f32 %v2114, %v2409
        %v2411 = vand.u32 %v2410, 4294901760
        %2412 = vmatmul.f32.gmra.mxu0 %v2411
        %v2413 = vpop.f32.mrf.mxu0
        %v2414 = vadd.f32 %v2384, %v2413
        %2415 = vdwg.mxu0
        %2416 = vmatpush.msra.mxu0 0.0
        %2417 = vmatpush.msra.mxu0 0.0
        %2418 = vmatpush.msra.mxu0 0.0
        %2419 = vmatpush.msra.mxu0 0.0
        %2420 = vmatpush.msra.mxu0 0.0
        %2421 = vmatpush.msra.mxu0 0.0
        %2422 = vmatpush.msra.mxu0 0.0
        %2423 = vmatpush.msra.mxu0 0.0
        %2424 = vmatpush.msra.mxu0 0.0
        %2425 = vmatpush.msra.mxu0 0.0
        %2426 = vmatpush.msra.mxu0 0.0
        %2427 = vmatpush.msra.mxu0 0.0
        %2428 = vmatpush.msra.mxu0 0.0
        %2429 = vmatpush.msra.mxu0 0.0
        %2430 = vmatpush.msra.mxu0 0.0
        %v2431 = vand.u32 %v687, 4294901760
        %v2432 = vsub.f32 %v687, %v2431
        %v2433 = vand.u32 %v2432, 4294901760
        %2434 = vmatpush.msra.mxu0 %v2433
        %v2435 = vand.u32 %v2111, 4294901760
        %2436 = vmatmul.f32.gmra.mxu0 %v2435
        %v2437 = vpop.f32.mrf.mxu0
        %v2438 = vadd.f32 %v2408, %v2437
        %v2439 = vand.u32 %v2114, 4294901760
        %2440 = vmatmul.f32.gmra.mxu0 %v2439
        %v2441 = vpop.f32.mrf.mxu0
        %v2442 = vadd.f32 %v2414, %v2441
        %2443 = vdwg.mxu0
        %2444 = vmatpush.msra.mxu0 0.0
        %2445 = vmatpush.msra.mxu0 0.0
        %2446 = vmatpush.msra.mxu0 0.0
        %2447 = vmatpush.msra.mxu0 0.0
        %2448 = vmatpush.msra.mxu0 0.0
        %2449 = vmatpush.msra.mxu0 0.0
        %2450 = vmatpush.msra.mxu0 0.0
        %2451 = vmatpush.msra.mxu0 0.0
        %2452 = vmatpush.msra.mxu0 0.0
        %2453 = vmatpush.msra.mxu0 0.0
        %2454 = vmatpush.msra.mxu0 0.0
        %2455 = vmatpush.msra.mxu0 0.0
        %2456 = vmatpush.msra.mxu0 0.0
        %2457 = vmatpush.msra.mxu0 0.0
        %2458 = vmatpush.msra.mxu0 0.0
        %v2459 = vand.u32 %v687, 4294901760
        %2460 = vmatpush.msra.mxu0 %v2459
        %v2461 = vand.u32 %v2111, 4294901760
        %2462 = vmatmul.f32.gmra.mxu0 %v2461
        %v2463 = vpop.f32.mrf.mxu0
        %v2464 = vadd.f32 %v2438, %v2463
        %v2465 = vand.u32 %v2114, 4294901760
        %2466 = vmatmul.f32.gmra.mxu0 %v2465
        %v2467 = vpop.f32.mrf.mxu0
        %v2468 = vadd.f32 %v2442, %v2467
        %2469 = vdwg.mxu0
        %v2470 = vadd.s32 %v1300, 1
        %v2471 = vadd.s32 %v1301, 1
        %vm2472 = vcmp.ge.s32.totalorder %v2470, 0
        %vm2473 = vcmp.ge.s32.totalorder %v2471, 0
        %vm2474 = vcmp.lt.s32.totalorder %v2470, 16
        %vm2475 = vcmp.lt.s32.totalorder %v2471, 16
        %vm2476 = vmand %vm2472, %vm2474
        %vm2477 = vmand %vm2473, %vm2475
        %v2478 = vsel %vm2476, 1, 0
        %v2479 = vsel %vm2477, 1, 0
        %vm2480 = vcmp.eq.s32.totalorder %v2478, 1
        %vm2481 = vcmp.eq.s32.totalorder %v2479, 1
        %2486 = vrot.lane.b32.xlu0 %v2287, 15
        %v2487 = vpop.permute.xlu0 %2486
        %2488 = vrot.lane.b32.xlu0 %v2464, 15
        %v2489 = vpop.permute.xlu0 %2488
        %2490 = vrot.lane.b32.xlu0 %v2291, 15
        %v2491 = vpop.permute.xlu0 %2490
        %2492 = vrot.lane.b32.xlu0 %v2468, 15
        %v2493 = vpop.permute.xlu0 %2492
        %vm2494 = vcmask 121856
        %v2495 = vsel %vm2494, %v2487, %v2489
        %v2496 = vsel %vm2494, %v2491, %v2493
        %v2501 = vsel %vm2480, %v2487, 0.0
        %v2502 = vsel %vm2481, %v2495, 0.0
        %v2503 = vsel %vm2480, %v2491, 0.0
        %v2504 = vsel %vm2481, %v2496, 0.0
        %v2505 = vld [vmem:[%s298] sm:$0xff]
        %v2506 = vld [vmem:[%s298 + $0x8] sm:$0xff]
        %v2507 = vld [vmem:[%s298 + $0x10] sm:$0xff]
        %v2508 = vld [vmem:[%s298 + $0x18] sm:$0xff]
        %v2509 = vadd.f32 %v2505, %v2501
        %v2510 = vadd.f32 %v2506, %v2502
        %v2511 = vadd.f32 %v2507, %v2503
        %v2512 = vadd.f32 %v2508, %v2504
        %vm2513 = vcmask 1047672
        %2514 = vst.msk [vmem:[%s298] sm:$0xff] %vm2513, %v2509
        %2515 = vst [vmem:[%s298 + $0x8] sm:$0xff] %v2510
        %2516 = vst.msk [vmem:[%s298 + $0x10] sm:$0xff] %vm2513, %v2511
        %2517 = vst [vmem:[%s298 + $0x18] sm:$0xff] %v2512
        %s2518 = scalar_lea.vmem %s4, 48
        %v2519 = vld [vmem:[%s2518] sm:$0xff]
        %v2520 = vld [vmem:[%s2518 + $0x8] sm:$0xff]
        %v2522 = vsel %vm317, %v2519, 0
        %v2525 = vsel %vm317, %v2520, 0
        %2527 = vmatpush.msra.mxu0 0.0
        %2528 = vmatpush.msra.mxu0 0.0
        %2529 = vmatpush.msra.mxu0 0.0
        %2530 = vmatpush.msra.mxu0 0.0
        %2531 = vmatpush.msra.mxu0 0.0
        %2532 = vmatpush.msra.mxu0 0.0
        %2533 = vmatpush.msra.mxu0 0.0
        %2534 = vmatpush.msra.mxu0 0.0
        %2535 = vmatpush.msra.mxu0 0.0
        %2536 = vmatpush.msra.mxu0 0.0
        %2537 = vmatpush.msra.mxu0 0.0
        %2538 = vmatpush.msra.mxu0 0.0
        %2539 = vmatpush.msra.mxu0 0.0
        %2540 = vmatpush.msra.mxu0 0.0
        %2541 = vmatpush.msra.mxu0 0.0
        %v2542 = vand.u32 %v686, 4294901760
        %2543 = vmatpush.msra.mxu0 %v2542
        %v2544 = vand.u32 %v2522, 4294901760
        %v2545 = vsub.f32 %v2522, %v2544
        %v2546 = vand.u32 %v2545, 4294901760
        %v2547 = vsub.f32 %v2545, %v2546
        %v2548 = vand.u32 %v2547, 4294901760
        %2549 = vmatmul.f32.gmra.mxu0 %v2548
        %v2550 = vpop.f32.mrf.mxu0
        %v2551 = vadd.f32 0.0, %v2550
        %v2552 = vand.u32 %v2525, 4294901760
        %v2553 = vsub.f32 %v2525, %v2552
        %v2554 = vand.u32 %v2553, 4294901760
        %v2555 = vsub.f32 %v2553, %v2554
        %v2556 = vand.u32 %v2555, 4294901760
        %2557 = vmatmul.f32.gmra.mxu0 %v2556
        %v2558 = vpop.f32.mrf.mxu0
        %v2559 = vadd.f32 0.0, %v2558
        %2560 = vdwg.mxu0
        %2561 = vmatpush.msra.mxu0 0.0
        %2562 = vmatpush.msra.mxu0 0.0
        %2563 = vmatpush.msra.mxu0 0.0
        %2564 = vmatpush.msra.mxu0 0.0
        %2565 = vmatpush.msra.mxu0 0.0
        %2566 = vmatpush.msra.mxu0 0.0
        %2567 = vmatpush.msra.mxu0 0.0
        %2568 = vmatpush.msra.mxu0 0.0
        %2569 = vmatpush.msra.mxu0 0.0
        %2570 = vmatpush.msra.mxu0 0.0
        %2571 = vmatpush.msra.mxu0 0.0
        %2572 = vmatpush.msra.mxu0 0.0
        %2573 = vmatpush.msra.mxu0 0.0
        %2574 = vmatpush.msra.mxu0 0.0
        %2575 = vmatpush.msra.mxu0 0.0
        %v2576 = vand.u32 %v686, 4294901760
        %v2577 = vsub.f32 %v686, %v2576
        %v2578 = vand.u32 %v2577, 4294901760
        %v2579 = vsub.f32 %v2577, %v2578
        %v2580 = vand.u32 %v2579, 4294901760
        %2581 = vmatpush.msra.mxu0 %v2580
        %v2582 = vand.u32 %v2522, 4294901760
        %2583 = vmatmul.f32.gmra.mxu0 %v2582
        %v2584 = vpop.f32.mrf.mxu0
        %v2585 = vadd.f32 %v2551, %v2584
        %v2586 = vand.u32 %v2525, 4294901760
        %2587 = vmatmul.f32.gmra.mxu0 %v2586
        %v2588 = vpop.f32.mrf.mxu0
        %v2589 = vadd.f32 %v2559, %v2588
        %2590 = vdwg.mxu0
        %2591 = vmatpush.msra.mxu0 0.0
        %2592 = vmatpush.msra.mxu0 0.0
        %2593 = vmatpush.msra.mxu0 0.0
        %2594 = vmatpush.msra.mxu0 0.0
        %2595 = vmatpush.msra.mxu0 0.0
        %2596 = vmatpush.msra.mxu0 0.0
        %2597 = vmatpush.msra.mxu0 0.0
        %2598 = vmatpush.msra.mxu0 0.0
        %2599 = vmatpush.msra.mxu0 0.0
        %2600 = vmatpush.msra.mxu0 0.0
        %2601 = vmatpush.msra.mxu0 0.0
        %2602 = vmatpush.msra.mxu0 0.0
        %2603 = vmatpush.msra.mxu0 0.0
        %2604 = vmatpush.msra.mxu0 0.0
        %2605 = vmatpush.msra.mxu0 0.0
        %v2606 = vand.u32 %v686, 4294901760
        %v2607 = vsub.f32 %v686, %v2606
        %2608 = vmatpush.msra.mxu0 %v2607
        %v2609 = vand.u32 %v2522, 4294901760
        %v2610 = vsub.f32 %v2522, %v2609
        %2611 = vmatmul.f32.gmra.mxu0 %v2610
        %v2612 = vpop.f32.mrf.mxu0
        %v2613 = vadd.f32 %v2585, %v2612
        %v2614 = vand.u32 %v2525, 4294901760
        %v2615 = vsub.f32 %v2525, %v2614
        %2616 = vmatmul.f32.gmra.mxu0 %v2615
        %v2617 = vpop.f32.mrf.mxu0
        %v2618 = vadd.f32 %v2589, %v2617
        %2619 = vdwg.mxu0
        %2620 = vmatpush.msra.mxu0 0.0
        %2621 = vmatpush.msra.mxu0 0.0
        %2622 = vmatpush.msra.mxu0 0.0
        %2623 = vmatpush.msra.mxu0 0.0
        %2624 = vmatpush.msra.mxu0 0.0
        %2625 = vmatpush.msra.mxu0 0.0
        %2626 = vmatpush.msra.mxu0 0.0
        %2627 = vmatpush.msra.mxu0 0.0
        %2628 = vmatpush.msra.mxu0 0.0
        %2629 = vmatpush.msra.mxu0 0.0
        %2630 = vmatpush.msra.mxu0 0.0
        %2631 = vmatpush.msra.mxu0 0.0
        %2632 = vmatpush.msra.mxu0 0.0
        %2633 = vmatpush.msra.mxu0 0.0
        %2634 = vmatpush.msra.mxu0 0.0
        %v2635 = vand.u32 %v686, 4294901760
        %2636 = vmatpush.msra.mxu0 %v2635
        %v2637 = vand.u32 %v2522, 4294901760
        %v2638 = vsub.f32 %v2522, %v2637
        %v2639 = vand.u32 %v2638, 4294901760
        %2640 = vmatmul.f32.gmra.mxu0 %v2639
        %v2641 = vpop.f32.mrf.mxu0
        %v2642 = vadd.f32 %v2613, %v2641
        %v2643 = vand.u32 %v2525, 4294901760
        %v2644 = vsub.f32 %v2525, %v2643
        %v2645 = vand.u32 %v2644, 4294901760
        %2646 = vmatmul.f32.gmra.mxu0 %v2645
        %v2647 = vpop.f32.mrf.mxu0
        %v2648 = vadd.f32 %v2618, %v2647
        %2649 = vdwg.mxu0
        %2650 = vmatpush.msra.mxu0 0.0
        %2651 = vmatpush.msra.mxu0 0.0
        %2652 = vmatpush.msra.mxu0 0.0
        %2653 = vmatpush.msra.mxu0 0.0
        %2654 = vmatpush.msra.mxu0 0.0
        %2655 = vmatpush.msra.mxu0 0.0
        %2656 = vmatpush.msra.mxu0 0.0
        %2657 = vmatpush.msra.mxu0 0.0
        %2658 = vmatpush.msra.mxu0 0.0
        %2659 = vmatpush.msra.mxu0 0.0
        %2660 = vmatpush.msra.mxu0 0.0
        %2661 = vmatpush.msra.mxu0 0.0
        %2662 = vmatpush.msra.mxu0 0.0
        %2663 = vmatpush.msra.mxu0 0.0
        %2664 = vmatpush.msra.mxu0 0.0
        %v2665 = vand.u32 %v686, 4294901760
        %v2666 = vsub.f32 %v686, %v2665
        %v2667 = vand.u32 %v2666, 4294901760
        %2668 = vmatpush.msra.mxu0 %v2667
        %v2669 = vand.u32 %v2522, 4294901760
        %2670 = vmatmul.f32.gmra.mxu0 %v2669
        %v2671 = vpop.f32.mrf.mxu0
        %v2672 = vadd.f32 %v2642, %v2671
        %v2673 = vand.u32 %v2525, 4294901760
        %2674 = vmatmul.f32.gmra.mxu0 %v2673
        %v2675 = vpop.f32.mrf.mxu0
        %v2676 = vadd.f32 %v2648, %v2675
        %2677 = vdwg.mxu0
        %2678 = vmatpush.msra.mxu0 0.0
        %2679 = vmatpush.msra.mxu0 0.0
        %2680 = vmatpush.msra.mxu0 0.0
        %2681 = vmatpush.msra.mxu0 0.0
        %2682 = vmatpush.msra.mxu0 0.0
        %2683 = vmatpush.msra.mxu0 0.0
        %2684 = vmatpush.msra.mxu0 0.0
        %2685 = vmatpush.msra.mxu0 0.0
        %2686 = vmatpush.msra.mxu0 0.0
        %2687 = vmatpush.msra.mxu0 0.0
        %2688 = vmatpush.msra.mxu0 0.0
        %2689 = vmatpush.msra.mxu0 0.0
        %2690 = vmatpush.msra.mxu0 0.0
        %2691 = vmatpush.msra.mxu0 0.0
        %2692 = vmatpush.msra.mxu0 0.0
        %v2693 = vand.u32 %v686, 4294901760
        %2694 = vmatpush.msra.mxu0 %v2693
        %v2695 = vand.u32 %v2522, 4294901760
        %2696 = vmatmul.f32.gmra.mxu0 %v2695
        %v2697 = vpop.f32.mrf.mxu0
        %v2698 = vadd.f32 %v2672, %v2697
        %v2699 = vand.u32 %v2525, 4294901760
        %2700 = vmatmul.f32.gmra.mxu0 %v2699
        %v2701 = vpop.f32.mrf.mxu0
        %v2702 = vadd.f32 %v2676, %v2701
        %2703 = vdwg.mxu0
        %2704 = vmatpush.msra.mxu0 0.0
        %2705 = vmatpush.msra.mxu0 0.0
        %2706 = vmatpush.msra.mxu0 0.0
        %2707 = vmatpush.msra.mxu0 0.0
        %2708 = vmatpush.msra.mxu0 0.0
        %2709 = vmatpush.msra.mxu0 0.0
        %2710 = vmatpush.msra.mxu0 0.0
        %2711 = vmatpush.msra.mxu0 0.0
        %2712 = vmatpush.msra.mxu0 0.0
        %2713 = vmatpush.msra.mxu0 0.0
        %2714 = vmatpush.msra.mxu0 0.0
        %2715 = vmatpush.msra.mxu0 0.0
        %2716 = vmatpush.msra.mxu0 0.0
        %2717 = vmatpush.msra.mxu0 0.0
        %2718 = vmatpush.msra.mxu0 0.0
        %v2719 = vand.u32 %v687, 4294901760
        %2720 = vmatpush.msra.mxu0 %v2719
        %v2721 = vand.u32 %v2522, 4294901760
        %v2722 = vsub.f32 %v2522, %v2721
        %v2723 = vand.u32 %v2722, 4294901760
        %v2724 = vsub.f32 %v2722, %v2723
        %v2725 = vand.u32 %v2724, 4294901760
        %2726 = vmatmul.f32.gmra.mxu0 %v2725
        %v2727 = vpop.f32.mrf.mxu0
        %v2728 = vadd.f32 0.0, %v2727
        %v2729 = vand.u32 %v2525, 4294901760
        %v2730 = vsub.f32 %v2525, %v2729
        %v2731 = vand.u32 %v2730, 4294901760
        %v2732 = vsub.f32 %v2730, %v2731
        %v2733 = vand.u32 %v2732, 4294901760
        %2734 = vmatmul.f32.gmra.mxu0 %v2733
        %v2735 = vpop.f32.mrf.mxu0
        %v2736 = vadd.f32 0.0, %v2735
        %2737 = vdwg.mxu0
        %2738 = vmatpush.msra.mxu0 0.0
        %2739 = vmatpush.msra.mxu0 0.0
        %2740 = vmatpush.msra.mxu0 0.0
        %2741 = vmatpush.msra.mxu0 0.0
        %2742 = vmatpush.msra.mxu0 0.0
        %2743 = vmatpush.msra.mxu0 0.0
        %2744 = vmatpush.msra.mxu0 0.0
        %2745 = vmatpush.msra.mxu0 0.0
        %2746 = vmatpush.msra.mxu0 0.0
        %2747 = vmatpush.msra.mxu0 0.0
        %2748 = vmatpush.msra.mxu0 0.0
        %2749 = vmatpush.msra.mxu0 0.0
        %2750 = vmatpush.msra.mxu0 0.0
        %2751 = vmatpush.msra.mxu0 0.0
        %2752 = vmatpush.msra.mxu0 0.0
        %v2753 = vand.u32 %v687, 4294901760
        %v2754 = vsub.f32 %v687, %v2753
        %v2755 = vand.u32 %v2754, 4294901760
        %v2756 = vsub.f32 %v2754, %v2755
        %v2757 = vand.u32 %v2756, 4294901760
        %2758 = vmatpush.msra.mxu0 %v2757
        %v2759 = vand.u32 %v2522, 4294901760
        %2760 = vmatmul.f32.gmra.mxu0 %v2759
        %v2761 = vpop.f32.mrf.mxu0
        %v2762 = vadd.f32 %v2728, %v2761
        %v2763 = vand.u32 %v2525, 4294901760
        %2764 = vmatmul.f32.gmra.mxu0 %v2763
        %v2765 = vpop.f32.mrf.mxu0
        %v2766 = vadd.f32 %v2736, %v2765
        %2767 = vdwg.mxu0
        %2768 = vmatpush.msra.mxu0 0.0
        %2769 = vmatpush.msra.mxu0 0.0
        %2770 = vmatpush.msra.mxu0 0.0
        %2771 = vmatpush.msra.mxu0 0.0
        %2772 = vmatpush.msra.mxu0 0.0
        %2773 = vmatpush.msra.mxu0 0.0
        %2774 = vmatpush.msra.mxu0 0.0
        %2775 = vmatpush.msra.mxu0 0.0
        %2776 = vmatpush.msra.mxu0 0.0
        %2777 = vmatpush.msra.mxu0 0.0
        %2778 = vmatpush.msra.mxu0 0.0
        %2779 = vmatpush.msra.mxu0 0.0
        %2780 = vmatpush.msra.mxu0 0.0
        %2781 = vmatpush.msra.mxu0 0.0
        %2782 = vmatpush.msra.mxu0 0.0
        %v2783 = vand.u32 %v687, 4294901760
        %v2784 = vsub.f32 %v687, %v2783
        %2785 = vmatpush.msra.mxu0 %v2784
        %v2786 = vand.u32 %v2522, 4294901760
        %v2787 = vsub.f32 %v2522, %v2786
        %2788 = vmatmul.f32.gmra.mxu0 %v2787
        %v2789 = vpop.f32.mrf.mxu0
        %v2790 = vadd.f32 %v2762, %v2789
        %v2791 = vand.u32 %v2525, 4294901760
        %v2792 = vsub.f32 %v2525, %v2791
        %2793 = vmatmul.f32.gmra.mxu0 %v2792
        %v2794 = vpop.f32.mrf.mxu0
        %v2795 = vadd.f32 %v2766, %v2794
        %2796 = vdwg.mxu0
        %2797 = vmatpush.msra.mxu0 0.0
        %2798 = vmatpush.msra.mxu0 0.0
        %2799 = vmatpush.msra.mxu0 0.0
        %2800 = vmatpush.msra.mxu0 0.0
        %2801 = vmatpush.msra.mxu0 0.0
        %2802 = vmatpush.msra.mxu0 0.0
        %2803 = vmatpush.msra.mxu0 0.0
        %2804 = vmatpush.msra.mxu0 0.0
        %2805 = vmatpush.msra.mxu0 0.0
        %2806 = vmatpush.msra.mxu0 0.0
        %2807 = vmatpush.msra.mxu0 0.0
        %2808 = vmatpush.msra.mxu0 0.0
        %2809 = vmatpush.msra.mxu0 0.0
        %2810 = vmatpush.msra.mxu0 0.0
        %2811 = vmatpush.msra.mxu0 0.0
        %v2812 = vand.u32 %v687, 4294901760
        %2813 = vmatpush.msra.mxu0 %v2812
        %v2814 = vand.u32 %v2522, 4294901760
        %v2815 = vsub.f32 %v2522, %v2814
        %v2816 = vand.u32 %v2815, 4294901760
        %2817 = vmatmul.f32.gmra.mxu0 %v2816
        %v2818 = vpop.f32.mrf.mxu0
        %v2819 = vadd.f32 %v2790, %v2818
        %v2820 = vand.u32 %v2525, 4294901760
        %v2821 = vsub.f32 %v2525, %v2820
        %v2822 = vand.u32 %v2821, 4294901760
        %2823 = vmatmul.f32.gmra.mxu0 %v2822
        %v2824 = vpop.f32.mrf.mxu0
        %v2825 = vadd.f32 %v2795, %v2824
        %2826 = vdwg.mxu0
        %2827 = vmatpush.msra.mxu0 0.0
        %2828 = vmatpush.msra.mxu0 0.0
        %2829 = vmatpush.msra.mxu0 0.0
        %2830 = vmatpush.msra.mxu0 0.0
        %2831 = vmatpush.msra.mxu0 0.0
        %2832 = vmatpush.msra.mxu0 0.0
        %2833 = vmatpush.msra.mxu0 0.0
        %2834 = vmatpush.msra.mxu0 0.0
        %2835 = vmatpush.msra.mxu0 0.0
        %2836 = vmatpush.msra.mxu0 0.0
        %2837 = vmatpush.msra.mxu0 0.0
        %2838 = vmatpush.msra.mxu0 0.0
        %2839 = vmatpush.msra.mxu0 0.0
        %2840 = vmatpush.msra.mxu0 0.0
        %2841 = vmatpush.msra.mxu0 0.0
        %v2842 = vand.u32 %v687, 4294901760
        %v2843 = vsub.f32 %v687, %v2842
        %v2844 = vand.u32 %v2843, 4294901760
        %2845 = vmatpush.msra.mxu0 %v2844
        %v2846 = vand.u32 %v2522, 4294901760
        %2847 = vmatmul.f32.gmra.mxu0 %v2846
        %v2848 = vpop.f32.mrf.mxu0
        %v2849 = vadd.f32 %v2819, %v2848
        %v2850 = vand.u32 %v2525, 4294901760
        %2851 = vmatmul.f32.gmra.mxu0 %v2850
        %v2852 = vpop.f32.mrf.mxu0
        %v2853 = vadd.f32 %v2825, %v2852
        %2854 = vdwg.mxu0
        %2855 = vmatpush.msra.mxu0 0.0
        %2856 = vmatpush.msra.mxu0 0.0
        %2857 = vmatpush.msra.mxu0 0.0
        %2858 = vmatpush.msra.mxu0 0.0
        %2859 = vmatpush.msra.mxu0 0.0
        %2860 = vmatpush.msra.mxu0 0.0
        %2861 = vmatpush.msra.mxu0 0.0
        %2862 = vmatpush.msra.mxu0 0.0
        %2863 = vmatpush.msra.mxu0 0.0
        %2864 = vmatpush.msra.mxu0 0.0
        %2865 = vmatpush.msra.mxu0 0.0
        %2866 = vmatpush.msra.mxu0 0.0
        %2867 = vmatpush.msra.mxu0 0.0
        %2868 = vmatpush.msra.mxu0 0.0
        %2869 = vmatpush.msra.mxu0 0.0
        %v2870 = vand.u32 %v687, 4294901760
        %2871 = vmatpush.msra.mxu0 %v2870
        %v2872 = vand.u32 %v2522, 4294901760
        %2873 = vmatmul.f32.gmra.mxu0 %v2872
        %v2874 = vpop.f32.mrf.mxu0
        %v2875 = vadd.f32 %v2849, %v2874
        %v2876 = vand.u32 %v2525, 4294901760
        %2877 = vmatmul.f32.gmra.mxu0 %v2876
        %v2878 = vpop.f32.mrf.mxu0
        %v2879 = vadd.f32 %v2853, %v2878
        %2880 = vdwg.mxu0
        %2885 = vrot.lane.b32.xlu0 %v2698, 1
        %v2886 = vpop.permute.xlu0 %2885
        %2887 = vrot.lane.b32.xlu0 %v2875, 1
        %v2888 = vpop.permute.xlu0 %2887
        %2889 = vrot.lane.b32.xlu0 %v2702, 1
        %v2890 = vpop.permute.xlu0 %2889
        %2891 = vrot.lane.b32.xlu0 %v2879, 1
        %v2892 = vpop.permute.xlu0 %2891
        %vm2893 = vcmask 7168
        %v2894 = vsel %vm2893, %v2886, %v2888
        %v2895 = vsel %vm2893, %v2890, %v2892
        %v2900 = vsel %vm1674, %v2886, 0.0
        %v2901 = vsel %vm1675, %v2894, 0.0
        %v2902 = vsel %vm1674, %v2890, 0.0
        %v2903 = vsel %vm1675, %v2895, 0.0
        %v2904 = vld [vmem:[%s298] sm:$0xff]
        %v2905 = vld [vmem:[%s298 + $0x8] sm:$0xff]
        %v2906 = vld [vmem:[%s298 + $0x10] sm:$0xff]
        %v2907 = vld [vmem:[%s298 + $0x18] sm:$0xff]
        %v2908 = vadd.f32 %v2904, %v2900
        %v2909 = vadd.f32 %v2905, %v2901
        %v2910 = vadd.f32 %v2906, %v2902
        %v2911 = vadd.f32 %v2907, %v2903
        %vm2912 = vcmask 1047560
        %2913 = vst.msk [vmem:[%s298] sm:$0xff] %vm2912, %v2908
        %2914 = vst [vmem:[%s298 + $0x8] sm:$0xff] %v2909
        %2915 = vst.msk [vmem:[%s298 + $0x10] sm:$0xff] %vm2912, %v2910
        %2916 = vst [vmem:[%s298 + $0x18] sm:$0xff] %v2911
        %s2917 = scalar_lea.vmem %s4, 64
        %v2918 = vld [vmem:[%s2917] sm:$0xff]
        %v2919 = vld [vmem:[%s2917 + $0x8] sm:$0xff]
        %v2921 = vsel %vm317, %v2918, 0
        %v2924 = vsel %vm317, %v2919, 0
        %2926 = vmatpush.msra.mxu0 0.0
        %2927 = vmatpush.msra.mxu0 0.0
        %2928 = vmatpush.msra.mxu0 0.0
        %2929 = vmatpush.msra.mxu0 0.0
        %2930 = vmatpush.msra.mxu0 0.0
        %2931 = vmatpush.msra.mxu0 0.0
        %2932 = vmatpush.msra.mxu0 0.0
        %2933 = vmatpush.msra.mxu0 0.0
        %2934 = vmatpush.msra.mxu0 0.0
        %2935 = vmatpush.msra.mxu0 0.0
        %2936 = vmatpush.msra.mxu0 0.0
        %2937 = vmatpush.msra.mxu0 0.0
        %2938 = vmatpush.msra.mxu0 0.0
        %2939 = vmatpush.msra.mxu0 0.0
        %2940 = vmatpush.msra.mxu0 0.0
        %v2941 = vand.u32 %v686, 4294901760
        %2942 = vmatpush.msra.mxu0 %v2941
        %v2943 = vand.u32 %v2921, 4294901760
        %v2944 = vsub.f32 %v2921, %v2943
        %v2945 = vand.u32 %v2944, 4294901760
        %v2946 = vsub.f32 %v2944, %v2945
        %v2947 = vand.u32 %v2946, 4294901760
        %2948 = vmatmul.f32.gmra.mxu0 %v2947
        %v2949 = vpop.f32.mrf.mxu0
        %v2950 = vadd.f32 0.0, %v2949
        %v2951 = vand.u32 %v2924, 4294901760
        %v2952 = vsub.f32 %v2924, %v2951
        %v2953 = vand.u32 %v2952, 4294901760
        %v2954 = vsub.f32 %v2952, %v2953
        %v2955 = vand.u32 %v2954, 4294901760
        %2956 = vmatmul.f32.gmra.mxu0 %v2955
        %v2957 = vpop.f32.mrf.mxu0
        %v2958 = vadd.f32 0.0, %v2957
        %2959 = vdwg.mxu0
        %2960 = vmatpush.msra.mxu0 0.0
        %2961 = vmatpush.msra.mxu0 0.0
        %2962 = vmatpush.msra.mxu0 0.0
        %2963 = vmatpush.msra.mxu0 0.0
        %2964 = vmatpush.msra.mxu0 0.0
        %2965 = vmatpush.msra.mxu0 0.0
        %2966 = vmatpush.msra.mxu0 0.0
        %2967 = vmatpush.msra.mxu0 0.0
        %2968 = vmatpush.msra.mxu0 0.0
        %2969 = vmatpush.msra.mxu0 0.0
        %2970 = vmatpush.msra.mxu0 0.0
        %2971 = vmatpush.msra.mxu0 0.0
        %2972 = vmatpush.msra.mxu0 0.0
        %2973 = vmatpush.msra.mxu0 0.0
        %2974 = vmatpush.msra.mxu0 0.0
        %v2975 = vand.u32 %v686, 4294901760
        %v2976 = vsub.f32 %v686, %v2975
        %v2977 = vand.u32 %v2976, 4294901760
        %v2978 = vsub.f32 %v2976, %v2977
        %v2979 = vand.u32 %v2978, 4294901760
        %2980 = vmatpush.msra.mxu0 %v2979
        %v2981 = vand.u32 %v2921, 4294901760
        %2982 = vmatmul.f32.gmra.mxu0 %v2981
        %v2983 = vpop.f32.mrf.mxu0
        %v2984 = vadd.f32 %v2950, %v2983
        %v2985 = vand.u32 %v2924, 4294901760
        %2986 = vmatmul.f32.gmra.mxu0 %v2985
        %v2987 = vpop.f32.mrf.mxu0
        %v2988 = vadd.f32 %v2958, %v2987
        %2989 = vdwg.mxu0
        %2990 = vmatpush.msra.mxu0 0.0
        %2991 = vmatpush.msra.mxu0 0.0
        %2992 = vmatpush.msra.mxu0 0.0
        %2993 = vmatpush.msra.mxu0 0.0
        %2994 = vmatpush.msra.mxu0 0.0
        %2995 = vmatpush.msra.mxu0 0.0
        %2996 = vmatpush.msra.mxu0 0.0
        %2997 = vmatpush.msra.mxu0 0.0
        %2998 = vmatpush.msra.mxu0 0.0
        %2999 = vmatpush.msra.mxu0 0.0
        %3000 = vmatpush.msra.mxu0 0.0
        %3001 = vmatpush.msra.mxu0 0.0
        %3002 = vmatpush.msra.mxu0 0.0
        %3003 = vmatpush.msra.mxu0 0.0
        %3004 = vmatpush.msra.mxu0 0.0
        %v3005 = vand.u32 %v686, 4294901760
        %v3006 = vsub.f32 %v686, %v3005
        %3007 = vmatpush.msra.mxu0 %v3006
        %v3008 = vand.u32 %v2921, 4294901760
        %v3009 = vsub.f32 %v2921, %v3008
        %3010 = vmatmul.f32.gmra.mxu0 %v3009
        %v3011 = vpop.f32.mrf.mxu0
        %v3012 = vadd.f32 %v2984, %v3011
        %v3013 = vand.u32 %v2924, 4294901760
        %v3014 = vsub.f32 %v2924, %v3013
        %3015 = vmatmul.f32.gmra.mxu0 %v3014
        %v3016 = vpop.f32.mrf.mxu0
        %v3017 = vadd.f32 %v2988, %v3016
        %3018 = vdwg.mxu0
        %3019 = vmatpush.msra.mxu0 0.0
        %3020 = vmatpush.msra.mxu0 0.0
        %3021 = vmatpush.msra.mxu0 0.0
        %3022 = vmatpush.msra.mxu0 0.0
        %3023 = vmatpush.msra.mxu0 0.0
        %3024 = vmatpush.msra.mxu0 0.0
        %3025 = vmatpush.msra.mxu0 0.0
        %3026 = vmatpush.msra.mxu0 0.0
        %3027 = vmatpush.msra.mxu0 0.0
        %3028 = vmatpush.msra.mxu0 0.0
        %3029 = vmatpush.msra.mxu0 0.0
        %3030 = vmatpush.msra.mxu0 0.0
        %3031 = vmatpush.msra.mxu0 0.0
        %3032 = vmatpush.msra.mxu0 0.0
        %3033 = vmatpush.msra.mxu0 0.0
        %v3034 = vand.u32 %v686, 4294901760
        %3035 = vmatpush.msra.mxu0 %v3034
        %v3036 = vand.u32 %v2921, 4294901760
        %v3037 = vsub.f32 %v2921, %v3036
        %v3038 = vand.u32 %v3037, 4294901760
        %3039 = vmatmul.f32.gmra.mxu0 %v3038
        %v3040 = vpop.f32.mrf.mxu0
        %v3041 = vadd.f32 %v3012, %v3040
        %v3042 = vand.u32 %v2924, 4294901760
        %v3043 = vsub.f32 %v2924, %v3042
        %v3044 = vand.u32 %v3043, 4294901760
        %3045 = vmatmul.f32.gmra.mxu0 %v3044
        %v3046 = vpop.f32.mrf.mxu0
        %v3047 = vadd.f32 %v3017, %v3046
        %3048 = vdwg.mxu0
        %3049 = vmatpush.msra.mxu0 0.0
        %3050 = vmatpush.msra.mxu0 0.0
        %3051 = vmatpush.msra.mxu0 0.0
        %3052 = vmatpush.msra.mxu0 0.0
        %3053 = vmatpush.msra.mxu0 0.0
        %3054 = vmatpush.msra.mxu0 0.0
        %3055 = vmatpush.msra.mxu0 0.0
        %3056 = vmatpush.msra.mxu0 0.0
        %3057 = vmatpush.msra.mxu0 0.0
        %3058 = vmatpush.msra.mxu0 0.0
        %3059 = vmatpush.msra.mxu0 0.0
        %3060 = vmatpush.msra.mxu0 0.0
        %3061 = vmatpush.msra.mxu0 0.0
        %3062 = vmatpush.msra.mxu0 0.0
        %3063 = vmatpush.msra.mxu0 0.0
        %v3064 = vand.u32 %v686, 4294901760
        %v3065 = vsub.f32 %v686, %v3064
        %v3066 = vand.u32 %v3065, 4294901760
        %3067 = vmatpush.msra.mxu0 %v3066
        %v3068 = vand.u32 %v2921, 4294901760
        %3069 = vmatmul.f32.gmra.mxu0 %v3068
        %v3070 = vpop.f32.mrf.mxu0
        %v3071 = vadd.f32 %v3041, %v3070
        %v3072 = vand.u32 %v2924, 4294901760
        %3073 = vmatmul.f32.gmra.mxu0 %v3072
        %v3074 = vpop.f32.mrf.mxu0
        %v3075 = vadd.f32 %v3047, %v3074
        %3076 = vdwg.mxu0
        %3077 = vmatpush.msra.mxu0 0.0
        %3078 = vmatpush.msra.mxu0 0.0
        %3079 = vmatpush.msra.mxu0 0.0
        %3080 = vmatpush.msra.mxu0 0.0
        %3081 = vmatpush.msra.mxu0 0.0
        %3082 = vmatpush.msra.mxu0 0.0
        %3083 = vmatpush.msra.mxu0 0.0
        %3084 = vmatpush.msra.mxu0 0.0
        %3085 = vmatpush.msra.mxu0 0.0
        %3086 = vmatpush.msra.mxu0 0.0
        %3087 = vmatpush.msra.mxu0 0.0
        %3088 = vmatpush.msra.mxu0 0.0
        %3089 = vmatpush.msra.mxu0 0.0
        %3090 = vmatpush.msra.mxu0 0.0
        %3091 = vmatpush.msra.mxu0 0.0
        %v3092 = vand.u32 %v686, 4294901760
        %3093 = vmatpush.msra.mxu0 %v3092
        %v3094 = vand.u32 %v2921, 4294901760
        %3095 = vmatmul.f32.gmra.mxu0 %v3094
        %v3096 = vpop.f32.mrf.mxu0
        %v3097 = vadd.f32 %v3071, %v3096
        %v3098 = vand.u32 %v2924, 4294901760
        %3099 = vmatmul.f32.gmra.mxu0 %v3098
        %v3100 = vpop.f32.mrf.mxu0
        %v3101 = vadd.f32 %v3075, %v3100
        %3102 = vdwg.mxu0
        %3103 = vmatpush.msra.mxu0 0.0
        %3104 = vmatpush.msra.mxu0 0.0
        %3105 = vmatpush.msra.mxu0 0.0
        %3106 = vmatpush.msra.mxu0 0.0
        %3107 = vmatpush.msra.mxu0 0.0
        %3108 = vmatpush.msra.mxu0 0.0
        %3109 = vmatpush.msra.mxu0 0.0
        %3110 = vmatpush.msra.mxu0 0.0
        %3111 = vmatpush.msra.mxu0 0.0
        %3112 = vmatpush.msra.mxu0 0.0
        %3113 = vmatpush.msra.mxu0 0.0
        %3114 = vmatpush.msra.mxu0 0.0
        %3115 = vmatpush.msra.mxu0 0.0
        %3116 = vmatpush.msra.mxu0 0.0
        %3117 = vmatpush.msra.mxu0 0.0
        %v3118 = vand.u32 %v687, 4294901760
        %3119 = vmatpush.msra.mxu0 %v3118
        %v3120 = vand.u32 %v2921, 4294901760
        %v3121 = vsub.f32 %v2921, %v3120
        %v3122 = vand.u32 %v3121, 4294901760
        %v3123 = vsub.f32 %v3121, %v3122
        %v3124 = vand.u32 %v3123, 4294901760
        %3125 = vmatmul.f32.gmra.mxu0 %v3124
        %v3126 = vpop.f32.mrf.mxu0
        %v3127 = vadd.f32 0.0, %v3126
        %v3128 = vand.u32 %v2924, 4294901760
        %v3129 = vsub.f32 %v2924, %v3128
        %v3130 = vand.u32 %v3129, 4294901760
        %v3131 = vsub.f32 %v3129, %v3130
        %v3132 = vand.u32 %v3131, 4294901760
        %3133 = vmatmul.f32.gmra.mxu0 %v3132
        %v3134 = vpop.f32.mrf.mxu0
        %v3135 = vadd.f32 0.0, %v3134
        %3136 = vdwg.mxu0
        %3137 = vmatpush.msra.mxu0 0.0
        %3138 = vmatpush.msra.mxu0 0.0
        %3139 = vmatpush.msra.mxu0 0.0
        %3140 = vmatpush.msra.mxu0 0.0
        %3141 = vmatpush.msra.mxu0 0.0
        %3142 = vmatpush.msra.mxu0 0.0
        %3143 = vmatpush.msra.mxu0 0.0
        %3144 = vmatpush.msra.mxu0 0.0
        %3145 = vmatpush.msra.mxu0 0.0
        %3146 = vmatpush.msra.mxu0 0.0
        %3147 = vmatpush.msra.mxu0 0.0
        %3148 = vmatpush.msra.mxu0 0.0
        %3149 = vmatpush.msra.mxu0 0.0
        %3150 = vmatpush.msra.mxu0 0.0
        %3151 = vmatpush.msra.mxu0 0.0
        %v3152 = vand.u32 %v687, 4294901760
        %v3153 = vsub.f32 %v687, %v3152
        %v3154 = vand.u32 %v3153, 4294901760
        %v3155 = vsub.f32 %v3153, %v3154
        %v3156 = vand.u32 %v3155, 4294901760
        %3157 = vmatpush.msra.mxu0 %v3156
        %v3158 = vand.u32 %v2921, 4294901760
        %3159 = vmatmul.f32.gmra.mxu0 %v3158
        %v3160 = vpop.f32.mrf.mxu0
        %v3161 = vadd.f32 %v3127, %v3160
        %v3162 = vand.u32 %v2924, 4294901760
        %3163 = vmatmul.f32.gmra.mxu0 %v3162
        %v3164 = vpop.f32.mrf.mxu0
        %v3165 = vadd.f32 %v3135, %v3164
        %3166 = vdwg.mxu0
        %3167 = vmatpush.msra.mxu0 0.0
        %3168 = vmatpush.msra.mxu0 0.0
        %3169 = vmatpush.msra.mxu0 0.0
        %3170 = vmatpush.msra.mxu0 0.0
        %3171 = vmatpush.msra.mxu0 0.0
        %3172 = vmatpush.msra.mxu0 0.0
        %3173 = vmatpush.msra.mxu0 0.0
        %3174 = vmatpush.msra.mxu0 0.0
        %3175 = vmatpush.msra.mxu0 0.0
        %3176 = vmatpush.msra.mxu0 0.0
        %3177 = vmatpush.msra.mxu0 0.0
        %3178 = vmatpush.msra.mxu0 0.0
        %3179 = vmatpush.msra.mxu0 0.0
        %3180 = vmatpush.msra.mxu0 0.0
        %3181 = vmatpush.msra.mxu0 0.0
        %v3182 = vand.u32 %v687, 4294901760
        %v3183 = vsub.f32 %v687, %v3182
        %3184 = vmatpush.msra.mxu0 %v3183
        %v3185 = vand.u32 %v2921, 4294901760
        %v3186 = vsub.f32 %v2921, %v3185
        %3187 = vmatmul.f32.gmra.mxu0 %v3186
        %v3188 = vpop.f32.mrf.mxu0
        %v3189 = vadd.f32 %v3161, %v3188
        %v3190 = vand.u32 %v2924, 4294901760
        %v3191 = vsub.f32 %v2924, %v3190
        %3192 = vmatmul.f32.gmra.mxu0 %v3191
        %v3193 = vpop.f32.mrf.mxu0
        %v3194 = vadd.f32 %v3165, %v3193
        %3195 = vdwg.mxu0
        %3196 = vmatpush.msra.mxu0 0.0
        %3197 = vmatpush.msra.mxu0 0.0
        %3198 = vmatpush.msra.mxu0 0.0
        %3199 = vmatpush.msra.mxu0 0.0
        %3200 = vmatpush.msra.mxu0 0.0
        %3201 = vmatpush.msra.mxu0 0.0
        %3202 = vmatpush.msra.mxu0 0.0
        %3203 = vmatpush.msra.mxu0 0.0
        %3204 = vmatpush.msra.mxu0 0.0
        %3205 = vmatpush.msra.mxu0 0.0
        %3206 = vmatpush.msra.mxu0 0.0
        %3207 = vmatpush.msra.mxu0 0.0
        %3208 = vmatpush.msra.mxu0 0.0
        %3209 = vmatpush.msra.mxu0 0.0
        %3210 = vmatpush.msra.mxu0 0.0
        %v3211 = vand.u32 %v687, 4294901760
        %3212 = vmatpush.msra.mxu0 %v3211
        %v3213 = vand.u32 %v2921, 4294901760
        %v3214 = vsub.f32 %v2921, %v3213
        %v3215 = vand.u32 %v3214, 4294901760
        %3216 = vmatmul.f32.gmra.mxu0 %v3215
        %v3217 = vpop.f32.mrf.mxu0
        %v3218 = vadd.f32 %v3189, %v3217
        %v3219 = vand.u32 %v2924, 4294901760
        %v3220 = vsub.f32 %v2924, %v3219
        %v3221 = vand.u32 %v3220, 4294901760
        %3222 = vmatmul.f32.gmra.mxu0 %v3221
        %v3223 = vpop.f32.mrf.mxu0
        %v3224 = vadd.f32 %v3194, %v3223
        %3225 = vdwg.mxu0
        %3226 = vmatpush.msra.mxu0 0.0
        %3227 = vmatpush.msra.mxu0 0.0
        %3228 = vmatpush.msra.mxu0 0.0
        %3229 = vmatpush.msra.mxu0 0.0
        %3230 = vmatpush.msra.mxu0 0.0
        %3231 = vmatpush.msra.mxu0 0.0
        %3232 = vmatpush.msra.mxu0 0.0
        %3233 = vmatpush.msra.mxu0 0.0
        %3234 = vmatpush.msra.mxu0 0.0
        %3235 = vmatpush.msra.mxu0 0.0
        %3236 = vmatpush.msra.mxu0 0.0
        %3237 = vmatpush.msra.mxu0 0.0
        %3238 = vmatpush.msra.mxu0 0.0
        %3239 = vmatpush.msra.mxu0 0.0
        %3240 = vmatpush.msra.mxu0 0.0
        %v3241 = vand.u32 %v687, 4294901760
        %v3242 = vsub.f32 %v687, %v3241
        %v3243 = vand.u32 %v3242, 4294901760
        %3244 = vmatpush.msra.mxu0 %v3243
        %v3245 = vand.u32 %v2921, 4294901760
        %3246 = vmatmul.f32.gmra.mxu0 %v3245
        %v3247 = vpop.f32.mrf.mxu0
        %v3248 = vadd.f32 %v3218, %v3247
        %v3249 = vand.u32 %v2924, 4294901760
        %3250 = vmatmul.f32.gmra.mxu0 %v3249
        %v3251 = vpop.f32.mrf.mxu0
        %v3252 = vadd.f32 %v3224, %v3251
        %3253 = vdwg.mxu0
        %3254 = vmatpush.msra.mxu0 0.0
        %3255 = vmatpush.msra.mxu0 0.0
        %3256 = vmatpush.msra.mxu0 0.0
        %3257 = vmatpush.msra.mxu0 0.0
        %3258 = vmatpush.msra.mxu0 0.0
        %3259 = vmatpush.msra.mxu0 0.0
        %3260 = vmatpush.msra.mxu0 0.0
        %3261 = vmatpush.msra.mxu0 0.0
        %3262 = vmatpush.msra.mxu0 0.0
        %3263 = vmatpush.msra.mxu0 0.0
        %3264 = vmatpush.msra.mxu0 0.0
        %3265 = vmatpush.msra.mxu0 0.0
        %3266 = vmatpush.msra.mxu0 0.0
        %3267 = vmatpush.msra.mxu0 0.0
        %3268 = vmatpush.msra.mxu0 0.0
        %v3269 = vand.u32 %v687, 4294901760
        %3270 = vmatpush.msra.mxu0 %v3269
        %v3271 = vand.u32 %v2921, 4294901760
        %3272 = vmatmul.f32.gmra.mxu0 %v3271
        %v3273 = vpop.f32.mrf.mxu0
        %v3274 = vadd.f32 %v3248, %v3273
        %v3275 = vand.u32 %v2924, 4294901760
        %3276 = vmatmul.f32.gmra.mxu0 %v3275
        %v3277 = vpop.f32.mrf.mxu0
        %v3278 = vadd.f32 %v3252, %v3277
        %3279 = vdwg.mxu0
        %v3280 = vld [vmem:[%s298] sm:$0xff]
        %v3281 = vld [vmem:[%s298 + $0x8] sm:$0xff]
        %v3282 = vld [vmem:[%s298 + $0x10] sm:$0xff]
        %v3283 = vld [vmem:[%s298 + $0x18] sm:$0xff]
        %v3284 = vadd.f32 %v3280, %v3097
        %v3285 = vadd.f32 %v3281, %v3274
        %v3286 = vadd.f32 %v3282, %v3101
        %v3287 = vadd.f32 %v3283, %v3278
        %3288 = vst [vmem:[%s298] sm:$0xff] %v3284
        %3289 = vst [vmem:[%s298 + $0x8] sm:$0xff] %v3285
        %3290 = vst [vmem:[%s298 + $0x10] sm:$0xff] %v3286
        %3291 = vst [vmem:[%s298 + $0x18] sm:$0xff] %v3287
        %s3292 = scalar_lea.vmem %s4, 80
        %v3293 = vld [vmem:[%s3292] sm:$0xff]
        %v3294 = vld [vmem:[%s3292 + $0x8] sm:$0xff]
        %v3296 = vsel %vm317, %v3293, 0
        %v3299 = vsel %vm317, %v3294, 0
        %3301 = vmatpush.msra.mxu0 0.0
        %3302 = vmatpush.msra.mxu0 0.0
        %3303 = vmatpush.msra.mxu0 0.0
        %3304 = vmatpush.msra.mxu0 0.0
        %3305 = vmatpush.msra.mxu0 0.0
        %3306 = vmatpush.msra.mxu0 0.0
        %3307 = vmatpush.msra.mxu0 0.0
        %3308 = vmatpush.msra.mxu0 0.0
        %3309 = vmatpush.msra.mxu0 0.0
        %3310 = vmatpush.msra.mxu0 0.0
        %3311 = vmatpush.msra.mxu0 0.0
        %3312 = vmatpush.msra.mxu0 0.0
        %3313 = vmatpush.msra.mxu0 0.0
        %3314 = vmatpush.msra.mxu0 0.0
        %3315 = vmatpush.msra.mxu0 0.0
        %v3316 = vand.u32 %v686, 4294901760
        %3317 = vmatpush.msra.mxu0 %v3316
        %v3318 = vand.u32 %v3296, 4294901760
        %v3319 = vsub.f32 %v3296, %v3318
        %v3320 = vand.u32 %v3319, 4294901760
        %v3321 = vsub.f32 %v3319, %v3320
        %v3322 = vand.u32 %v3321, 4294901760
        %3323 = vmatmul.f32.gmra.mxu0 %v3322
        %v3324 = vpop.f32.mrf.mxu0
        %v3325 = vadd.f32 0.0, %v3324
        %v3326 = vand.u32 %v3299, 4294901760
        %v3327 = vsub.f32 %v3299, %v3326
        %v3328 = vand.u32 %v3327, 4294901760
        %v3329 = vsub.f32 %v3327, %v3328
        %v3330 = vand.u32 %v3329, 4294901760
        %3331 = vmatmul.f32.gmra.mxu0 %v3330
        %v3332 = vpop.f32.mrf.mxu0
        %v3333 = vadd.f32 0.0, %v3332
        %3334 = vdwg.mxu0
        %3335 = vmatpush.msra.mxu0 0.0
        %3336 = vmatpush.msra.mxu0 0.0
        %3337 = vmatpush.msra.mxu0 0.0
        %3338 = vmatpush.msra.mxu0 0.0
        %3339 = vmatpush.msra.mxu0 0.0
        %3340 = vmatpush.msra.mxu0 0.0
        %3341 = vmatpush.msra.mxu0 0.0
        %3342 = vmatpush.msra.mxu0 0.0
        %3343 = vmatpush.msra.mxu0 0.0
        %3344 = vmatpush.msra.mxu0 0.0
        %3345 = vmatpush.msra.mxu0 0.0
        %3346 = vmatpush.msra.mxu0 0.0
        %3347 = vmatpush.msra.mxu0 0.0
        %3348 = vmatpush.msra.mxu0 0.0
        %3349 = vmatpush.msra.mxu0 0.0
        %v3350 = vand.u32 %v686, 4294901760
        %v3351 = vsub.f32 %v686, %v3350
        %v3352 = vand.u32 %v3351, 4294901760
        %v3353 = vsub.f32 %v3351, %v3352
        %v3354 = vand.u32 %v3353, 4294901760
        %3355 = vmatpush.msra.mxu0 %v3354
        %v3356 = vand.u32 %v3296, 4294901760
        %3357 = vmatmul.f32.gmra.mxu0 %v3356
        %v3358 = vpop.f32.mrf.mxu0
        %v3359 = vadd.f32 %v3325, %v3358
        %v3360 = vand.u32 %v3299, 4294901760
        %3361 = vmatmul.f32.gmra.mxu0 %v3360
        %v3362 = vpop.f32.mrf.mxu0
        %v3363 = vadd.f32 %v3333, %v3362
        %3364 = vdwg.mxu0
        %3365 = vmatpush.msra.mxu0 0.0
        %3366 = vmatpush.msra.mxu0 0.0
        %3367 = vmatpush.msra.mxu0 0.0
        %3368 = vmatpush.msra.mxu0 0.0
        %3369 = vmatpush.msra.mxu0 0.0
        %3370 = vmatpush.msra.mxu0 0.0
        %3371 = vmatpush.msra.mxu0 0.0
        %3372 = vmatpush.msra.mxu0 0.0
        %3373 = vmatpush.msra.mxu0 0.0
        %3374 = vmatpush.msra.mxu0 0.0
        %3375 = vmatpush.msra.mxu0 0.0
        %3376 = vmatpush.msra.mxu0 0.0
        %3377 = vmatpush.msra.mxu0 0.0
        %3378 = vmatpush.msra.mxu0 0.0
        %3379 = vmatpush.msra.mxu0 0.0
        %v3380 = vand.u32 %v686, 4294901760
        %v3381 = vsub.f32 %v686, %v3380
        %3382 = vmatpush.msra.mxu0 %v3381
        %v3383 = vand.u32 %v3296, 4294901760
        %v3384 = vsub.f32 %v3296, %v3383
        %3385 = vmatmul.f32.gmra.mxu0 %v3384
        %v3386 = vpop.f32.mrf.mxu0
        %v3387 = vadd.f32 %v3359, %v3386
        %v3388 = vand.u32 %v3299, 4294901760
        %v3389 = vsub.f32 %v3299, %v3388
        %3390 = vmatmul.f32.gmra.mxu0 %v3389
        %v3391 = vpop.f32.mrf.mxu0
        %v3392 = vadd.f32 %v3363, %v3391
        %3393 = vdwg.mxu0
        %3394 = vmatpush.msra.mxu0 0.0
        %3395 = vmatpush.msra.mxu0 0.0
        %3396 = vmatpush.msra.mxu0 0.0
        %3397 = vmatpush.msra.mxu0 0.0
        %3398 = vmatpush.msra.mxu0 0.0
        %3399 = vmatpush.msra.mxu0 0.0
        %3400 = vmatpush.msra.mxu0 0.0
        %3401 = vmatpush.msra.mxu0 0.0
        %3402 = vmatpush.msra.mxu0 0.0
        %3403 = vmatpush.msra.mxu0 0.0
        %3404 = vmatpush.msra.mxu0 0.0
        %3405 = vmatpush.msra.mxu0 0.0
        %3406 = vmatpush.msra.mxu0 0.0
        %3407 = vmatpush.msra.mxu0 0.0
        %3408 = vmatpush.msra.mxu0 0.0
        %v3409 = vand.u32 %v686, 4294901760
        %3410 = vmatpush.msra.mxu0 %v3409
        %v3411 = vand.u32 %v3296, 4294901760
        %v3412 = vsub.f32 %v3296, %v3411
        %v3413 = vand.u32 %v3412, 4294901760
        %3414 = vmatmul.f32.gmra.mxu0 %v3413
        %v3415 = vpop.f32.mrf.mxu0
        %v3416 = vadd.f32 %v3387, %v3415
        %v3417 = vand.u32 %v3299, 4294901760
        %v3418 = vsub.f32 %v3299, %v3417
        %v3419 = vand.u32 %v3418, 4294901760
        %3420 = vmatmul.f32.gmra.mxu0 %v3419
        %v3421 = vpop.f32.mrf.mxu0
        %v3422 = vadd.f32 %v3392, %v3421
        %3423 = vdwg.mxu0
        %3424 = vmatpush.msra.mxu0 0.0
        %3425 = vmatpush.msra.mxu0 0.0
        %3426 = vmatpush.msra.mxu0 0.0
        %3427 = vmatpush.msra.mxu0 0.0
        %3428 = vmatpush.msra.mxu0 0.0
        %3429 = vmatpush.msra.mxu0 0.0
        %3430 = vmatpush.msra.mxu0 0.0
        %3431 = vmatpush.msra.mxu0 0.0
        %3432 = vmatpush.msra.mxu0 0.0
        %3433 = vmatpush.msra.mxu0 0.0
        %3434 = vmatpush.msra.mxu0 0.0
        %3435 = vmatpush.msra.mxu0 0.0
        %3436 = vmatpush.msra.mxu0 0.0
        %3437 = vmatpush.msra.mxu0 0.0
        %3438 = vmatpush.msra.mxu0 0.0
        %v3439 = vand.u32 %v686, 4294901760
        %v3440 = vsub.f32 %v686, %v3439
        %v3441 = vand.u32 %v3440, 4294901760
        %3442 = vmatpush.msra.mxu0 %v3441
        %v3443 = vand.u32 %v3296, 4294901760
        %3444 = vmatmul.f32.gmra.mxu0 %v3443
        %v3445 = vpop.f32.mrf.mxu0
        %v3446 = vadd.f32 %v3416, %v3445
        %v3447 = vand.u32 %v3299, 4294901760
        %3448 = vmatmul.f32.gmra.mxu0 %v3447
        %v3449 = vpop.f32.mrf.mxu0
        %v3450 = vadd.f32 %v3422, %v3449
        %3451 = vdwg.mxu0
        %3452 = vmatpush.msra.mxu0 0.0
        %3453 = vmatpush.msra.mxu0 0.0
        %3454 = vmatpush.msra.mxu0 0.0
        %3455 = vmatpush.msra.mxu0 0.0
        %3456 = vmatpush.msra.mxu0 0.0
        %3457 = vmatpush.msra.mxu0 0.0
        %3458 = vmatpush.msra.mxu0 0.0
        %3459 = vmatpush.msra.mxu0 0.0
        %3460 = vmatpush.msra.mxu0 0.0
        %3461 = vmatpush.msra.mxu0 0.0
        %3462 = vmatpush.msra.mxu0 0.0
        %3463 = vmatpush.msra.mxu0 0.0
        %3464 = vmatpush.msra.mxu0 0.0
        %3465 = vmatpush.msra.mxu0 0.0
        %3466 = vmatpush.msra.mxu0 0.0
        %v3467 = vand.u32 %v686, 4294901760
        %3468 = vmatpush.msra.mxu0 %v3467
        %v3469 = vand.u32 %v3296, 4294901760
        %3470 = vmatmul.f32.gmra.mxu0 %v3469
        %v3471 = vpop.f32.mrf.mxu0
        %v3472 = vadd.f32 %v3446, %v3471
        %v3473 = vand.u32 %v3299, 4294901760
        %3474 = vmatmul.f32.gmra.mxu0 %v3473
        %v3475 = vpop.f32.mrf.mxu0
        %v3476 = vadd.f32 %v3450, %v3475
        %3477 = vdwg.mxu0
        %3478 = vmatpush.msra.mxu0 0.0
        %3479 = vmatpush.msra.mxu0 0.0
        %3480 = vmatpush.msra.mxu0 0.0
        %3481 = vmatpush.msra.mxu0 0.0
        %3482 = vmatpush.msra.mxu0 0.0
        %3483 = vmatpush.msra.mxu0 0.0
        %3484 = vmatpush.msra.mxu0 0.0
        %3485 = vmatpush.msra.mxu0 0.0
        %3486 = vmatpush.msra.mxu0 0.0
        %3487 = vmatpush.msra.mxu0 0.0
        %3488 = vmatpush.msra.mxu0 0.0
        %3489 = vmatpush.msra.mxu0 0.0
        %3490 = vmatpush.msra.mxu0 0.0
        %3491 = vmatpush.msra.mxu0 0.0
        %3492 = vmatpush.msra.mxu0 0.0
        %v3493 = vand.u32 %v687, 4294901760
        %3494 = vmatpush.msra.mxu0 %v3493
        %v3495 = vand.u32 %v3296, 4294901760
        %v3496 = vsub.f32 %v3296, %v3495
        %v3497 = vand.u32 %v3496, 4294901760
        %v3498 = vsub.f32 %v3496, %v3497
        %v3499 = vand.u32 %v3498, 4294901760
        %3500 = vmatmul.f32.gmra.mxu0 %v3499
        %v3501 = vpop.f32.mrf.mxu0
        %v3502 = vadd.f32 0.0, %v3501
        %v3503 = vand.u32 %v3299, 4294901760
        %v3504 = vsub.f32 %v3299, %v3503
        %v3505 = vand.u32 %v3504, 4294901760
        %v3506 = vsub.f32 %v3504, %v3505
        %v3507 = vand.u32 %v3506, 4294901760
        %3508 = vmatmul.f32.gmra.mxu0 %v3507
        %v3509 = vpop.f32.mrf.mxu0
        %v3510 = vadd.f32 0.0, %v3509
        %3511 = vdwg.mxu0
        %3512 = vmatpush.msra.mxu0 0.0
        %3513 = vmatpush.msra.mxu0 0.0
        %3514 = vmatpush.msra.mxu0 0.0
        %3515 = vmatpush.msra.mxu0 0.0
        %3516 = vmatpush.msra.mxu0 0.0
        %3517 = vmatpush.msra.mxu0 0.0
        %3518 = vmatpush.msra.mxu0 0.0
        %3519 = vmatpush.msra.mxu0 0.0
        %3520 = vmatpush.msra.mxu0 0.0
        %3521 = vmatpush.msra.mxu0 0.0
        %3522 = vmatpush.msra.mxu0 0.0
        %3523 = vmatpush.msra.mxu0 0.0
        %3524 = vmatpush.msra.mxu0 0.0
        %3525 = vmatpush.msra.mxu0 0.0
        %3526 = vmatpush.msra.mxu0 0.0
        %v3527 = vand.u32 %v687, 4294901760
        %v3528 = vsub.f32 %v687, %v3527
        %v3529 = vand.u32 %v3528, 4294901760
        %v3530 = vsub.f32 %v3528, %v3529
        %v3531 = vand.u32 %v3530, 4294901760
        %3532 = vmatpush.msra.mxu0 %v3531
        %v3533 = vand.u32 %v3296, 4294901760
        %3534 = vmatmul.f32.gmra.mxu0 %v3533
        %v3535 = vpop.f32.mrf.mxu0
        %v3536 = vadd.f32 %v3502, %v3535
        %v3537 = vand.u32 %v3299, 4294901760
        %3538 = vmatmul.f32.gmra.mxu0 %v3537
        %v3539 = vpop.f32.mrf.mxu0
        %v3540 = vadd.f32 %v3510, %v3539
        %3541 = vdwg.mxu0
        %3542 = vmatpush.msra.mxu0 0.0
        %3543 = vmatpush.msra.mxu0 0.0
        %3544 = vmatpush.msra.mxu0 0.0
        %3545 = vmatpush.msra.mxu0 0.0
        %3546 = vmatpush.msra.mxu0 0.0
        %3547 = vmatpush.msra.mxu0 0.0
        %3548 = vmatpush.msra.mxu0 0.0
        %3549 = vmatpush.msra.mxu0 0.0
        %3550 = vmatpush.msra.mxu0 0.0
        %3551 = vmatpush.msra.mxu0 0.0
        %3552 = vmatpush.msra.mxu0 0.0
        %3553 = vmatpush.msra.mxu0 0.0
        %3554 = vmatpush.msra.mxu0 0.0
        %3555 = vmatpush.msra.mxu0 0.0
        %3556 = vmatpush.msra.mxu0 0.0
        %v3557 = vand.u32 %v687, 4294901760
        %v3558 = vsub.f32 %v687, %v3557
        %3559 = vmatpush.msra.mxu0 %v3558
        %v3560 = vand.u32 %v3296, 4294901760
        %v3561 = vsub.f32 %v3296, %v3560
        %3562 = vmatmul.f32.gmra.mxu0 %v3561
        %v3563 = vpop.f32.mrf.mxu0
        %v3564 = vadd.f32 %v3536, %v3563
        %v3565 = vand.u32 %v3299, 4294901760
        %v3566 = vsub.f32 %v3299, %v3565
        %3567 = vmatmul.f32.gmra.mxu0 %v3566
        %v3568 = vpop.f32.mrf.mxu0
        %v3569 = vadd.f32 %v3540, %v3568
        %3570 = vdwg.mxu0
        %3571 = vmatpush.msra.mxu0 0.0
        %3572 = vmatpush.msra.mxu0 0.0
        %3573 = vmatpush.msra.mxu0 0.0
        %3574 = vmatpush.msra.mxu0 0.0
        %3575 = vmatpush.msra.mxu0 0.0
        %3576 = vmatpush.msra.mxu0 0.0
        %3577 = vmatpush.msra.mxu0 0.0
        %3578 = vmatpush.msra.mxu0 0.0
        %3579 = vmatpush.msra.mxu0 0.0
        %3580 = vmatpush.msra.mxu0 0.0
        %3581 = vmatpush.msra.mxu0 0.0
        %3582 = vmatpush.msra.mxu0 0.0
        %3583 = vmatpush.msra.mxu0 0.0
        %3584 = vmatpush.msra.mxu0 0.0
        %3585 = vmatpush.msra.mxu0 0.0
        %v3586 = vand.u32 %v687, 4294901760
        %3587 = vmatpush.msra.mxu0 %v3586
        %v3588 = vand.u32 %v3296, 4294901760
        %v3589 = vsub.f32 %v3296, %v3588
        %v3590 = vand.u32 %v3589, 4294901760
        %3591 = vmatmul.f32.gmra.mxu0 %v3590
        %v3592 = vpop.f32.mrf.mxu0
        %v3593 = vadd.f32 %v3564, %v3592
        %v3594 = vand.u32 %v3299, 4294901760
        %v3595 = vsub.f32 %v3299, %v3594
        %v3596 = vand.u32 %v3595, 4294901760
        %3597 = vmatmul.f32.gmra.mxu0 %v3596
        %v3598 = vpop.f32.mrf.mxu0
        %v3599 = vadd.f32 %v3569, %v3598
        %3600 = vdwg.mxu0
        %3601 = vmatpush.msra.mxu0 0.0
        %3602 = vmatpush.msra.mxu0 0.0
        %3603 = vmatpush.msra.mxu0 0.0
        %3604 = vmatpush.msra.mxu0 0.0
        %3605 = vmatpush.msra.mxu0 0.0
        %3606 = vmatpush.msra.mxu0 0.0
        %3607 = vmatpush.msra.mxu0 0.0
        %3608 = vmatpush.msra.mxu0 0.0
        %3609 = vmatpush.msra.mxu0 0.0
        %3610 = vmatpush.msra.mxu0 0.0
        %3611 = vmatpush.msra.mxu0 0.0
        %3612 = vmatpush.msra.mxu0 0.0
        %3613 = vmatpush.msra.mxu0 0.0
        %3614 = vmatpush.msra.mxu0 0.0
        %3615 = vmatpush.msra.mxu0 0.0
        %v3616 = vand.u32 %v687, 4294901760
        %v3617 = vsub.f32 %v687, %v3616
        %v3618 = vand.u32 %v3617, 4294901760
        %3619 = vmatpush.msra.mxu0 %v3618
        %v3620 = vand.u32 %v3296, 4294901760
        %3621 = vmatmul.f32.gmra.mxu0 %v3620
        %v3622 = vpop.f32.mrf.mxu0
        %v3623 = vadd.f32 %v3593, %v3622
        %v3624 = vand.u32 %v3299, 4294901760
        %3625 = vmatmul.f32.gmra.mxu0 %v3624
        %v3626 = vpop.f32.mrf.mxu0
        %v3627 = vadd.f32 %v3599, %v3626
        %3628 = vdwg.mxu0
        %3629 = vmatpush.msra.mxu0 0.0
        %3630 = vmatpush.msra.mxu0 0.0
        %3631 = vmatpush.msra.mxu0 0.0
        %3632 = vmatpush.msra.mxu0 0.0
        %3633 = vmatpush.msra.mxu0 0.0
        %3634 = vmatpush.msra.mxu0 0.0
        %3635 = vmatpush.msra.mxu0 0.0
        %3636 = vmatpush.msra.mxu0 0.0
        %3637 = vmatpush.msra.mxu0 0.0
        %3638 = vmatpush.msra.mxu0 0.0
        %3639 = vmatpush.msra.mxu0 0.0
        %3640 = vmatpush.msra.mxu0 0.0
        %3641 = vmatpush.msra.mxu0 0.0
        %3642 = vmatpush.msra.mxu0 0.0
        %3643 = vmatpush.msra.mxu0 0.0
        %v3644 = vand.u32 %v687, 4294901760
        %3645 = vmatpush.msra.mxu0 %v3644
        %v3646 = vand.u32 %v3296, 4294901760
        %3647 = vmatmul.f32.gmra.mxu0 %v3646
        %v3648 = vpop.f32.mrf.mxu0
        %v3649 = vadd.f32 %v3623, %v3648
        %v3650 = vand.u32 %v3299, 4294901760
        %3651 = vmatmul.f32.gmra.mxu0 %v3650
        %v3652 = vpop.f32.mrf.mxu0
        %v3653 = vadd.f32 %v3627, %v3652
        %3654 = vdwg.mxu0
        %3659 = vrot.lane.b32.xlu0 %v3472, 127
        %v3660 = vpop.permute.xlu0 %3659
        %3661 = vrot.lane.b32.xlu0 %v3649, 127
        %v3662 = vpop.permute.xlu0 %3661
        %3663 = vrot.lane.b32.xlu0 %v3476, 127
        %v3664 = vpop.permute.xlu0 %3663
        %3665 = vrot.lane.b32.xlu0 %v3653, 127
        %v3666 = vpop.permute.xlu0 %3665
        %vm3667 = vcmask 1039360
        %v3668 = vsel %vm3667, %v3660, %v3662
        %v3669 = vsel %vm3667, %v3664, %v3666
        %v3674 = vsel %vm2480, %v3668, 0.0
        %v3675 = vsel %vm2481, %v3662, 0.0
        %v3676 = vsel %vm2480, %v3669, 0.0
        %v3677 = vsel %vm2481, %v3666, 0.0
        %v3678 = vld [vmem:[%s298] sm:$0xff]
        %v3679 = vld [vmem:[%s298 + $0x8] sm:$0xff]
        %v3680 = vld [vmem:[%s298 + $0x10] sm:$0xff]
        %v3681 = vld [vmem:[%s298 + $0x18] sm:$0xff]
        %v3682 = vadd.f32 %v3678, %v3674
        %v3683 = vadd.f32 %v3679, %v3675
        %v3684 = vadd.f32 %v3680, %v3676
        %v3685 = vadd.f32 %v3681, %v3677
        %3686 = vst [vmem:[%s298] sm:$0xff] %v3682
        %3687 = vst.msk [vmem:[%s298 + $0x8] sm:$0xff] %vm3667, %v3683
        %3688 = vst [vmem:[%s298 + $0x10] sm:$0xff] %v3684
        %3689 = vst.msk [vmem:[%s298 + $0x18] sm:$0xff] %vm3667, %v3685
        %s3690 = scalar_lea.vmem %s4, 96
        %v3691 = vld [vmem:[%s3690] sm:$0xff]
        %v3692 = vld [vmem:[%s3690 + $0x8] sm:$0xff]
        %v3694 = vsel %vm317, %v3691, 0
        %v3697 = vsel %vm317, %v3692, 0
        %3699 = vmatpush.msra.mxu0 0.0
        %3700 = vmatpush.msra.mxu0 0.0
        %3701 = vmatpush.msra.mxu0 0.0
        %3702 = vmatpush.msra.mxu0 0.0
        %3703 = vmatpush.msra.mxu0 0.0
        %3704 = vmatpush.msra.mxu0 0.0
        %3705 = vmatpush.msra.mxu0 0.0
        %3706 = vmatpush.msra.mxu0 0.0
        %3707 = vmatpush.msra.mxu0 0.0
        %3708 = vmatpush.msra.mxu0 0.0
        %3709 = vmatpush.msra.mxu0 0.0
        %3710 = vmatpush.msra.mxu0 0.0
        %3711 = vmatpush.msra.mxu0 0.0
        %3712 = vmatpush.msra.mxu0 0.0
        %3713 = vmatpush.msra.mxu0 0.0
        %v3714 = vand.u32 %v686, 4294901760
        %3715 = vmatpush.msra.mxu0 %v3714
        %v3716 = vand.u32 %v3694, 4294901760
        %v3717 = vsub.f32 %v3694, %v3716
        %v3718 = vand.u32 %v3717, 4294901760
        %v3719 = vsub.f32 %v3717, %v3718
        %v3720 = vand.u32 %v3719, 4294901760
        %3721 = vmatmul.f32.gmra.mxu0 %v3720
        %v3722 = vpop.f32.mrf.mxu0
        %v3723 = vadd.f32 0.0, %v3722
        %v3724 = vand.u32 %v3697, 4294901760
        %v3725 = vsub.f32 %v3697, %v3724
        %v3726 = vand.u32 %v3725, 4294901760
        %v3727 = vsub.f32 %v3725, %v3726
        %v3728 = vand.u32 %v3727, 4294901760
        %3729 = vmatmul.f32.gmra.mxu0 %v3728
        %v3730 = vpop.f32.mrf.mxu0
        %v3731 = vadd.f32 0.0, %v3730
        %3732 = vdwg.mxu0
        %3733 = vmatpush.msra.mxu0 0.0
        %3734 = vmatpush.msra.mxu0 0.0
        %3735 = vmatpush.msra.mxu0 0.0
        %3736 = vmatpush.msra.mxu0 0.0
        %3737 = vmatpush.msra.mxu0 0.0
        %3738 = vmatpush.msra.mxu0 0.0
        %3739 = vmatpush.msra.mxu0 0.0
        %3740 = vmatpush.msra.mxu0 0.0
        %3741 = vmatpush.msra.mxu0 0.0
        %3742 = vmatpush.msra.mxu0 0.0
        %3743 = vmatpush.msra.mxu0 0.0
        %3744 = vmatpush.msra.mxu0 0.0
        %3745 = vmatpush.msra.mxu0 0.0
        %3746 = vmatpush.msra.mxu0 0.0
        %3747 = vmatpush.msra.mxu0 0.0
        %v3748 = vand.u32 %v686, 4294901760
        %v3749 = vsub.f32 %v686, %v3748
        %v3750 = vand.u32 %v3749, 4294901760
        %v3751 = vsub.f32 %v3749, %v3750
        %v3752 = vand.u32 %v3751, 4294901760
        %3753 = vmatpush.msra.mxu0 %v3752
        %v3754 = vand.u32 %v3694, 4294901760
        %3755 = vmatmul.f32.gmra.mxu0 %v3754
        %v3756 = vpop.f32.mrf.mxu0
        %v3757 = vadd.f32 %v3723, %v3756
        %v3758 = vand.u32 %v3697, 4294901760
        %3759 = vmatmul.f32.gmra.mxu0 %v3758
        %v3760 = vpop.f32.mrf.mxu0
        %v3761 = vadd.f32 %v3731, %v3760
        %3762 = vdwg.mxu0
        %3763 = vmatpush.msra.mxu0 0.0
        %3764 = vmatpush.msra.mxu0 0.0
        %3765 = vmatpush.msra.mxu0 0.0
        %3766 = vmatpush.msra.mxu0 0.0
        %3767 = vmatpush.msra.mxu0 0.0
        %3768 = vmatpush.msra.mxu0 0.0
        %3769 = vmatpush.msra.mxu0 0.0
        %3770 = vmatpush.msra.mxu0 0.0
        %3771 = vmatpush.msra.mxu0 0.0
        %3772 = vmatpush.msra.mxu0 0.0
        %3773 = vmatpush.msra.mxu0 0.0
        %3774 = vmatpush.msra.mxu0 0.0
        %3775 = vmatpush.msra.mxu0 0.0
        %3776 = vmatpush.msra.mxu0 0.0
        %3777 = vmatpush.msra.mxu0 0.0
        %v3778 = vand.u32 %v686, 4294901760
        %v3779 = vsub.f32 %v686, %v3778
        %3780 = vmatpush.msra.mxu0 %v3779
        %v3781 = vand.u32 %v3694, 4294901760
        %v3782 = vsub.f32 %v3694, %v3781
        %3783 = vmatmul.f32.gmra.mxu0 %v3782
        %v3784 = vpop.f32.mrf.mxu0
        %v3785 = vadd.f32 %v3757, %v3784
        %v3786 = vand.u32 %v3697, 4294901760
        %v3787 = vsub.f32 %v3697, %v3786
        %3788 = vmatmul.f32.gmra.mxu0 %v3787
        %v3789 = vpop.f32.mrf.mxu0
        %v3790 = vadd.f32 %v3761, %v3789
        %3791 = vdwg.mxu0
        %3792 = vmatpush.msra.mxu0 0.0
        %3793 = vmatpush.msra.mxu0 0.0
        %3794 = vmatpush.msra.mxu0 0.0
        %3795 = vmatpush.msra.mxu0 0.0
        %3796 = vmatpush.msra.mxu0 0.0
        %3797 = vmatpush.msra.mxu0 0.0
        %3798 = vmatpush.msra.mxu0 0.0
        %3799 = vmatpush.msra.mxu0 0.0
        %3800 = vmatpush.msra.mxu0 0.0
        %3801 = vmatpush.msra.mxu0 0.0
        %3802 = vmatpush.msra.mxu0 0.0
        %3803 = vmatpush.msra.mxu0 0.0
        %3804 = vmatpush.msra.mxu0 0.0
        %3805 = vmatpush.msra.mxu0 0.0
        %3806 = vmatpush.msra.mxu0 0.0
        %v3807 = vand.u32 %v686, 4294901760
        %3808 = vmatpush.msra.mxu0 %v3807
        %v3809 = vand.u32 %v3694, 4294901760
        %v3810 = vsub.f32 %v3694, %v3809
        %v3811 = vand.u32 %v3810, 4294901760
        %3812 = vmatmul.f32.gmra.mxu0 %v3811
        %v3813 = vpop.f32.mrf.mxu0
        %v3814 = vadd.f32 %v3785, %v3813
        %v3815 = vand.u32 %v3697, 4294901760
        %v3816 = vsub.f32 %v3697, %v3815
        %v3817 = vand.u32 %v3816, 4294901760
        %3818 = vmatmul.f32.gmra.mxu0 %v3817
        %v3819 = vpop.f32.mrf.mxu0
        %v3820 = vadd.f32 %v3790, %v3819
        %3821 = vdwg.mxu0
        %3822 = vmatpush.msra.mxu0 0.0
        %3823 = vmatpush.msra.mxu0 0.0
        %3824 = vmatpush.msra.mxu0 0.0
        %3825 = vmatpush.msra.mxu0 0.0
        %3826 = vmatpush.msra.mxu0 0.0
        %3827 = vmatpush.msra.mxu0 0.0
        %3828 = vmatpush.msra.mxu0 0.0
        %3829 = vmatpush.msra.mxu0 0.0
        %3830 = vmatpush.msra.mxu0 0.0
        %3831 = vmatpush.msra.mxu0 0.0
        %3832 = vmatpush.msra.mxu0 0.0
        %3833 = vmatpush.msra.mxu0 0.0
        %3834 = vmatpush.msra.mxu0 0.0
        %3835 = vmatpush.msra.mxu0 0.0
        %3836 = vmatpush.msra.mxu0 0.0
        %v3837 = vand.u32 %v686, 4294901760
        %v3838 = vsub.f32 %v686, %v3837
        %v3839 = vand.u32 %v3838, 4294901760
        %3840 = vmatpush.msra.mxu0 %v3839
        %v3841 = vand.u32 %v3694, 4294901760
        %3842 = vmatmul.f32.gmra.mxu0 %v3841
        %v3843 = vpop.f32.mrf.mxu0
        %v3844 = vadd.f32 %v3814, %v3843
        %v3845 = vand.u32 %v3697, 4294901760
        %3846 = vmatmul.f32.gmra.mxu0 %v3845
        %v3847 = vpop.f32.mrf.mxu0
        %v3848 = vadd.f32 %v3820, %v3847
        %3849 = vdwg.mxu0
        %3850 = vmatpush.msra.mxu0 0.0
        %3851 = vmatpush.msra.mxu0 0.0
        %3852 = vmatpush.msra.mxu0 0.0
        %3853 = vmatpush.msra.mxu0 0.0
        %3854 = vmatpush.msra.mxu0 0.0
        %3855 = vmatpush.msra.mxu0 0.0
        %3856 = vmatpush.msra.mxu0 0.0
        %3857 = vmatpush.msra.mxu0 0.0
        %3858 = vmatpush.msra.mxu0 0.0
        %3859 = vmatpush.msra.mxu0 0.0
        %3860 = vmatpush.msra.mxu0 0.0
        %3861 = vmatpush.msra.mxu0 0.0
        %3862 = vmatpush.msra.mxu0 0.0
        %3863 = vmatpush.msra.mxu0 0.0
        %3864 = vmatpush.msra.mxu0 0.0
        %v3865 = vand.u32 %v686, 4294901760
        %3866 = vmatpush.msra.mxu0 %v3865
        %v3867 = vand.u32 %v3694, 4294901760
        %3868 = vmatmul.f32.gmra.mxu0 %v3867
        %v3869 = vpop.f32.mrf.mxu0
        %v3870 = vadd.f32 %v3844, %v3869
        %v3871 = vand.u32 %v3697, 4294901760
        %3872 = vmatmul.f32.gmra.mxu0 %v3871
        %v3873 = vpop.f32.mrf.mxu0
        %v3874 = vadd.f32 %v3848, %v3873
        %3875 = vdwg.mxu0
        %3876 = vmatpush.msra.mxu0 0.0
        %3877 = vmatpush.msra.mxu0 0.0
        %3878 = vmatpush.msra.mxu0 0.0
        %3879 = vmatpush.msra.mxu0 0.0
        %3880 = vmatpush.msra.mxu0 0.0
        %3881 = vmatpush.msra.mxu0 0.0
        %3882 = vmatpush.msra.mxu0 0.0
        %3883 = vmatpush.msra.mxu0 0.0
        %3884 = vmatpush.msra.mxu0 0.0
        %3885 = vmatpush.msra.mxu0 0.0
        %3886 = vmatpush.msra.mxu0 0.0
        %3887 = vmatpush.msra.mxu0 0.0
        %3888 = vmatpush.msra.mxu0 0.0
        %3889 = vmatpush.msra.mxu0 0.0
        %3890 = vmatpush.msra.mxu0 0.0
        %v3891 = vand.u32 %v687, 4294901760
        %3892 = vmatpush.msra.mxu0 %v3891
        %v3893 = vand.u32 %v3694, 4294901760
        %v3894 = vsub.f32 %v3694, %v3893
        %v3895 = vand.u32 %v3894, 4294901760
        %v3896 = vsub.f32 %v3894, %v3895
        %v3897 = vand.u32 %v3896, 4294901760
        %3898 = vmatmul.f32.gmra.mxu0 %v3897
        %v3899 = vpop.f32.mrf.mxu0
        %v3900 = vadd.f32 0.0, %v3899
        %v3901 = vand.u32 %v3697, 4294901760
        %v3902 = vsub.f32 %v3697, %v3901
        %v3903 = vand.u32 %v3902, 4294901760
        %v3904 = vsub.f32 %v3902, %v3903
        %v3905 = vand.u32 %v3904, 4294901760
        %3906 = vmatmul.f32.gmra.mxu0 %v3905
        %v3907 = vpop.f32.mrf.mxu0
        %v3908 = vadd.f32 0.0, %v3907
        %3909 = vdwg.mxu0
        %3910 = vmatpush.msra.mxu0 0.0
        %3911 = vmatpush.msra.mxu0 0.0
        %3912 = vmatpush.msra.mxu0 0.0
        %3913 = vmatpush.msra.mxu0 0.0
        %3914 = vmatpush.msra.mxu0 0.0
        %3915 = vmatpush.msra.mxu0 0.0
        %3916 = vmatpush.msra.mxu0 0.0
        %3917 = vmatpush.msra.mxu0 0.0
        %3918 = vmatpush.msra.mxu0 0.0
        %3919 = vmatpush.msra.mxu0 0.0
        %3920 = vmatpush.msra.mxu0 0.0
        %3921 = vmatpush.msra.mxu0 0.0
        %3922 = vmatpush.msra.mxu0 0.0
        %3923 = vmatpush.msra.mxu0 0.0
        %3924 = vmatpush.msra.mxu0 0.0
        %v3925 = vand.u32 %v687, 4294901760
        %v3926 = vsub.f32 %v687, %v3925
        %v3927 = vand.u32 %v3926, 4294901760
        %v3928 = vsub.f32 %v3926, %v3927
        %v3929 = vand.u32 %v3928, 4294901760
        %3930 = vmatpush.msra.mxu0 %v3929
        %v3931 = vand.u32 %v3694, 4294901760
        %3932 = vmatmul.f32.gmra.mxu0 %v3931
        %v3933 = vpop.f32.mrf.mxu0
        %v3934 = vadd.f32 %v3900, %v3933
        %v3935 = vand.u32 %v3697, 4294901760
        %3936 = vmatmul.f32.gmra.mxu0 %v3935
        %v3937 = vpop.f32.mrf.mxu0
        %v3938 = vadd.f32 %v3908, %v3937
        %3939 = vdwg.mxu0
        %3940 = vmatpush.msra.mxu0 0.0
        %3941 = vmatpush.msra.mxu0 0.0
        %3942 = vmatpush.msra.mxu0 0.0
        %3943 = vmatpush.msra.mxu0 0.0
        %3944 = vmatpush.msra.mxu0 0.0
        %3945 = vmatpush.msra.mxu0 0.0
        %3946 = vmatpush.msra.mxu0 0.0
        %3947 = vmatpush.msra.mxu0 0.0
        %3948 = vmatpush.msra.mxu0 0.0
        %3949 = vmatpush.msra.mxu0 0.0
        %3950 = vmatpush.msra.mxu0 0.0
        %3951 = vmatpush.msra.mxu0 0.0
        %3952 = vmatpush.msra.mxu0 0.0
        %3953 = vmatpush.msra.mxu0 0.0
        %3954 = vmatpush.msra.mxu0 0.0
        %v3955 = vand.u32 %v687, 4294901760
        %v3956 = vsub.f32 %v687, %v3955
        %3957 = vmatpush.msra.mxu0 %v3956
        %v3958 = vand.u32 %v3694, 4294901760
        %v3959 = vsub.f32 %v3694, %v3958
        %3960 = vmatmul.f32.gmra.mxu0 %v3959
        %v3961 = vpop.f32.mrf.mxu0
        %v3962 = vadd.f32 %v3934, %v3961
        %v3963 = vand.u32 %v3697, 4294901760
        %v3964 = vsub.f32 %v3697, %v3963
        %3965 = vmatmul.f32.gmra.mxu0 %v3964
        %v3966 = vpop.f32.mrf.mxu0
        %v3967 = vadd.f32 %v3938, %v3966
        %3968 = vdwg.mxu0
        %3969 = vmatpush.msra.mxu0 0.0
        %3970 = vmatpush.msra.mxu0 0.0
        %3971 = vmatpush.msra.mxu0 0.0
        %3972 = vmatpush.msra.mxu0 0.0
        %3973 = vmatpush.msra.mxu0 0.0
        %3974 = vmatpush.msra.mxu0 0.0
        %3975 = vmatpush.msra.mxu0 0.0
        %3976 = vmatpush.msra.mxu0 0.0
        %3977 = vmatpush.msra.mxu0 0.0
        %3978 = vmatpush.msra.mxu0 0.0
        %3979 = vmatpush.msra.mxu0 0.0
        %3980 = vmatpush.msra.mxu0 0.0
        %3981 = vmatpush.msra.mxu0 0.0
        %3982 = vmatpush.msra.mxu0 0.0
        %3983 = vmatpush.msra.mxu0 0.0
        %v3984 = vand.u32 %v687, 4294901760
        %3985 = vmatpush.msra.mxu0 %v3984
        %v3986 = vand.u32 %v3694, 4294901760
        %v3987 = vsub.f32 %v3694, %v3986
        %v3988 = vand.u32 %v3987, 4294901760
        %3989 = vmatmul.f32.gmra.mxu0 %v3988
        %v3990 = vpop.f32.mrf.mxu0
        %v3991 = vadd.f32 %v3962, %v3990
        %v3992 = vand.u32 %v3697, 4294901760
        %v3993 = vsub.f32 %v3697, %v3992
        %v3994 = vand.u32 %v3993, 4294901760
        %3995 = vmatmul.f32.gmra.mxu0 %v3994
        %v3996 = vpop.f32.mrf.mxu0
        %v3997 = vadd.f32 %v3967, %v3996
        %3998 = vdwg.mxu0
        %3999 = vmatpush.msra.mxu0 0.0
        %4000 = vmatpush.msra.mxu0 0.0
        %4001 = vmatpush.msra.mxu0 0.0
        %4002 = vmatpush.msra.mxu0 0.0
        %4003 = vmatpush.msra.mxu0 0.0
        %4004 = vmatpush.msra.mxu0 0.0
        %4005 = vmatpush.msra.mxu0 0.0
        %4006 = vmatpush.msra.mxu0 0.0
        %4007 = vmatpush.msra.mxu0 0.0
        %4008 = vmatpush.msra.mxu0 0.0
        %4009 = vmatpush.msra.mxu0 0.0
        %4010 = vmatpush.msra.mxu0 0.0
        %4011 = vmatpush.msra.mxu0 0.0
        %4012 = vmatpush.msra.mxu0 0.0
        %4013 = vmatpush.msra.mxu0 0.0
        %v4014 = vand.u32 %v687, 4294901760
        %v4015 = vsub.f32 %v687, %v4014
        %v4016 = vand.u32 %v4015, 4294901760
        %4017 = vmatpush.msra.mxu0 %v4016
        %v4018 = vand.u32 %v3694, 4294901760
        %4019 = vmatmul.f32.gmra.mxu0 %v4018
        %v4020 = vpop.f32.mrf.mxu0
        %v4021 = vadd.f32 %v3991, %v4020
        %v4022 = vand.u32 %v3697, 4294901760
        %4023 = vmatmul.f32.gmra.mxu0 %v4022
        %v4024 = vpop.f32.mrf.mxu0
        %v4025 = vadd.f32 %v3997, %v4024
        %4026 = vdwg.mxu0
        %4027 = vmatpush.msra.mxu0 0.0
        %4028 = vmatpush.msra.mxu0 0.0
        %4029 = vmatpush.msra.mxu0 0.0
        %4030 = vmatpush.msra.mxu0 0.0
        %4031 = vmatpush.msra.mxu0 0.0
        %4032 = vmatpush.msra.mxu0 0.0
        %4033 = vmatpush.msra.mxu0 0.0
        %4034 = vmatpush.msra.mxu0 0.0
        %4035 = vmatpush.msra.mxu0 0.0
        %4036 = vmatpush.msra.mxu0 0.0
        %4037 = vmatpush.msra.mxu0 0.0
        %4038 = vmatpush.msra.mxu0 0.0
        %4039 = vmatpush.msra.mxu0 0.0
        %4040 = vmatpush.msra.mxu0 0.0
        %4041 = vmatpush.msra.mxu0 0.0
        %v4042 = vand.u32 %v687, 4294901760
        %4043 = vmatpush.msra.mxu0 %v4042
        %v4044 = vand.u32 %v3694, 4294901760
        %4045 = vmatmul.f32.gmra.mxu0 %v4044
        %v4046 = vpop.f32.mrf.mxu0
        %v4047 = vadd.f32 %v4021, %v4046
        %v4048 = vand.u32 %v3697, 4294901760
        %4049 = vmatmul.f32.gmra.mxu0 %v4048
        %v4050 = vpop.f32.mrf.mxu0
        %v4051 = vadd.f32 %v4025, %v4050
        %4052 = vdwg.mxu0
        %4057 = vrot.lane.b32.xlu0 %v3870, 113
        %v4058 = vpop.permute.xlu0 %4057
        %4059 = vrot.lane.b32.xlu0 %v4047, 113
        %v4060 = vpop.permute.xlu0 %4059
        %4061 = vrot.lane.b32.xlu0 %v3874, 113
        %v4062 = vpop.permute.xlu0 %4061
        %4063 = vrot.lane.b32.xlu0 %v4051, 113
        %v4064 = vpop.permute.xlu0 %4063
        %vm4065 = vcmask 924672
        %v4066 = vsel %vm4065, %v4058, %v4060
        %v4067 = vsel %vm4065, %v4062, %v4064
        %v4072 = vsel %vm1674, %v4066, 0.0
        %v4073 = vsel %vm1675, %v4060, 0.0
        %v4074 = vsel %vm1674, %v4067, 0.0
        %v4075 = vsel %vm1675, %v4064, 0.0
        %v4076 = vld [vmem:[%s298] sm:$0xff]
        %v4077 = vld [vmem:[%s298 + $0x8] sm:$0xff]
        %v4078 = vld [vmem:[%s298 + $0x10] sm:$0xff]
        %v4079 = vld [vmem:[%s298 + $0x18] sm:$0xff]
        %v4080 = vadd.f32 %v4076, %v4072
        %v4081 = vadd.f32 %v4077, %v4073
        %v4082 = vadd.f32 %v4078, %v4074
        %v4083 = vadd.f32 %v4079, %v4075
        %4084 = vst [vmem:[%s298] sm:$0xff] %v4080
        %4085 = vst.msk [vmem:[%s298 + $0x8] sm:$0xff] %vm4065, %v4081
        %4086 = vst [vmem:[%s298 + $0x10] sm:$0xff] %v4082
        %4087 = vst.msk [vmem:[%s298 + $0x18] sm:$0xff] %vm4065, %v4083
        %s4088 = scalar_lea.vmem %s4, 112
        %v4089 = vld [vmem:[%s4088] sm:$0xff]
        %v4090 = vld [vmem:[%s4088 + $0x8] sm:$0xff]
        %v4092 = vsel %vm317, %v4089, 0
        %v4095 = vsel %vm317, %v4090, 0
        %4097 = vmatpush.msra.mxu0 0.0
        %4098 = vmatpush.msra.mxu0 0.0
        %4099 = vmatpush.msra.mxu0 0.0
        %4100 = vmatpush.msra.mxu0 0.0
        %4101 = vmatpush.msra.mxu0 0.0
        %4102 = vmatpush.msra.mxu0 0.0
        %4103 = vmatpush.msra.mxu0 0.0
        %4104 = vmatpush.msra.mxu0 0.0
        %4105 = vmatpush.msra.mxu0 0.0
        %4106 = vmatpush.msra.mxu0 0.0
        %4107 = vmatpush.msra.mxu0 0.0
        %4108 = vmatpush.msra.mxu0 0.0
        %4109 = vmatpush.msra.mxu0 0.0
        %4110 = vmatpush.msra.mxu0 0.0
        %4111 = vmatpush.msra.mxu0 0.0
        %v4112 = vand.u32 %v686, 4294901760
        %4113 = vmatpush.msra.mxu0 %v4112
        %v4114 = vand.u32 %v4092, 4294901760
        %v4115 = vsub.f32 %v4092, %v4114
        %v4116 = vand.u32 %v4115, 4294901760
        %v4117 = vsub.f32 %v4115, %v4116
        %v4118 = vand.u32 %v4117, 4294901760
        %4119 = vmatmul.f32.gmra.mxu0 %v4118
        %v4120 = vpop.f32.mrf.mxu0
        %v4121 = vadd.f32 0.0, %v4120
        %v4122 = vand.u32 %v4095, 4294901760
        %v4123 = vsub.f32 %v4095, %v4122
        %v4124 = vand.u32 %v4123, 4294901760
        %v4125 = vsub.f32 %v4123, %v4124
        %v4126 = vand.u32 %v4125, 4294901760
        %4127 = vmatmul.f32.gmra.mxu0 %v4126
        %v4128 = vpop.f32.mrf.mxu0
        %v4129 = vadd.f32 0.0, %v4128
        %4130 = vdwg.mxu0
        %4131 = vmatpush.msra.mxu0 0.0
        %4132 = vmatpush.msra.mxu0 0.0
        %4133 = vmatpush.msra.mxu0 0.0
        %4134 = vmatpush.msra.mxu0 0.0
        %4135 = vmatpush.msra.mxu0 0.0
        %4136 = vmatpush.msra.mxu0 0.0
        %4137 = vmatpush.msra.mxu0 0.0
        %4138 = vmatpush.msra.mxu0 0.0
        %4139 = vmatpush.msra.mxu0 0.0
        %4140 = vmatpush.msra.mxu0 0.0
        %4141 = vmatpush.msra.mxu0 0.0
        %4142 = vmatpush.msra.mxu0 0.0
        %4143 = vmatpush.msra.mxu0 0.0
        %4144 = vmatpush.msra.mxu0 0.0
        %4145 = vmatpush.msra.mxu0 0.0
        %v4146 = vand.u32 %v686, 4294901760
        %v4147 = vsub.f32 %v686, %v4146
        %v4148 = vand.u32 %v4147, 4294901760
        %v4149 = vsub.f32 %v4147, %v4148
        %v4150 = vand.u32 %v4149, 4294901760
        %4151 = vmatpush.msra.mxu0 %v4150
        %v4152 = vand.u32 %v4092, 4294901760
        %4153 = vmatmul.f32.gmra.mxu0 %v4152
        %v4154 = vpop.f32.mrf.mxu0
        %v4155 = vadd.f32 %v4121, %v4154
        %v4156 = vand.u32 %v4095, 4294901760
        %4157 = vmatmul.f32.gmra.mxu0 %v4156
        %v4158 = vpop.f32.mrf.mxu0
        %v4159 = vadd.f32 %v4129, %v4158
        %4160 = vdwg.mxu0
        %4161 = vmatpush.msra.mxu0 0.0
        %4162 = vmatpush.msra.mxu0 0.0
        %4163 = vmatpush.msra.mxu0 0.0
        %4164 = vmatpush.msra.mxu0 0.0
        %4165 = vmatpush.msra.mxu0 0.0
        %4166 = vmatpush.msra.mxu0 0.0
        %4167 = vmatpush.msra.mxu0 0.0
        %4168 = vmatpush.msra.mxu0 0.0
        %4169 = vmatpush.msra.mxu0 0.0
        %4170 = vmatpush.msra.mxu0 0.0
        %4171 = vmatpush.msra.mxu0 0.0
        %4172 = vmatpush.msra.mxu0 0.0
        %4173 = vmatpush.msra.mxu0 0.0
        %4174 = vmatpush.msra.mxu0 0.0
        %4175 = vmatpush.msra.mxu0 0.0
        %v4176 = vand.u32 %v686, 4294901760
        %v4177 = vsub.f32 %v686, %v4176
        %4178 = vmatpush.msra.mxu0 %v4177
        %v4179 = vand.u32 %v4092, 4294901760
        %v4180 = vsub.f32 %v4092, %v4179
        %4181 = vmatmul.f32.gmra.mxu0 %v4180
        %v4182 = vpop.f32.mrf.mxu0
        %v4183 = vadd.f32 %v4155, %v4182
        %v4184 = vand.u32 %v4095, 4294901760
        %v4185 = vsub.f32 %v4095, %v4184
        %4186 = vmatmul.f32.gmra.mxu0 %v4185
        %v4187 = vpop.f32.mrf.mxu0
        %v4188 = vadd.f32 %v4159, %v4187
        %4189 = vdwg.mxu0
        %4190 = vmatpush.msra.mxu0 0.0
        %4191 = vmatpush.msra.mxu0 0.0
        %4192 = vmatpush.msra.mxu0 0.0
        %4193 = vmatpush.msra.mxu0 0.0
        %4194 = vmatpush.msra.mxu0 0.0
        %4195 = vmatpush.msra.mxu0 0.0
        %4196 = vmatpush.msra.mxu0 0.0
        %4197 = vmatpush.msra.mxu0 0.0
        %4198 = vmatpush.msra.mxu0 0.0
        %4199 = vmatpush.msra.mxu0 0.0
        %4200 = vmatpush.msra.mxu0 0.0
        %4201 = vmatpush.msra.mxu0 0.0
        %4202 = vmatpush.msra.mxu0 0.0
        %4203 = vmatpush.msra.mxu0 0.0
        %4204 = vmatpush.msra.mxu0 0.0
        %v4205 = vand.u32 %v686, 4294901760
        %4206 = vmatpush.msra.mxu0 %v4205
        %v4207 = vand.u32 %v4092, 4294901760
        %v4208 = vsub.f32 %v4092, %v4207
        %v4209 = vand.u32 %v4208, 4294901760
        %4210 = vmatmul.f32.gmra.mxu0 %v4209
        %v4211 = vpop.f32.mrf.mxu0
        %v4212 = vadd.f32 %v4183, %v4211
        %v4213 = vand.u32 %v4095, 4294901760
        %v4214 = vsub.f32 %v4095, %v4213
        %v4215 = vand.u32 %v4214, 4294901760
        %4216 = vmatmul.f32.gmra.mxu0 %v4215
        %v4217 = vpop.f32.mrf.mxu0
        %v4218 = vadd.f32 %v4188, %v4217
        %4219 = vdwg.mxu0
        %4220 = vmatpush.msra.mxu0 0.0
        %4221 = vmatpush.msra.mxu0 0.0
        %4222 = vmatpush.msra.mxu0 0.0
        %4223 = vmatpush.msra.mxu0 0.0
        %4224 = vmatpush.msra.mxu0 0.0
        %4225 = vmatpush.msra.mxu0 0.0
        %4226 = vmatpush.msra.mxu0 0.0
        %4227 = vmatpush.msra.mxu0 0.0
        %4228 = vmatpush.msra.mxu0 0.0
        %4229 = vmatpush.msra.mxu0 0.0
        %4230 = vmatpush.msra.mxu0 0.0
        %4231 = vmatpush.msra.mxu0 0.0
        %4232 = vmatpush.msra.mxu0 0.0
        %4233 = vmatpush.msra.mxu0 0.0
        %4234 = vmatpush.msra.mxu0 0.0
        %v4235 = vand.u32 %v686, 4294901760
        %v4236 = vsub.f32 %v686, %v4235
        %v4237 = vand.u32 %v4236, 4294901760
        %4238 = vmatpush.msra.mxu0 %v4237
        %v4239 = vand.u32 %v4092, 4294901760
        %4240 = vmatmul.f32.gmra.mxu0 %v4239
        %v4241 = vpop.f32.mrf.mxu0
        %v4242 = vadd.f32 %v4212, %v4241
        %v4243 = vand.u32 %v4095, 4294901760
        %4244 = vmatmul.f32.gmra.mxu0 %v4243
        %v4245 = vpop.f32.mrf.mxu0
        %v4246 = vadd.f32 %v4218, %v4245
        %4247 = vdwg.mxu0
        %4248 = vmatpush.msra.mxu0 0.0
        %4249 = vmatpush.msra.mxu0 0.0
        %4250 = vmatpush.msra.mxu0 0.0
        %4251 = vmatpush.msra.mxu0 0.0
        %4252 = vmatpush.msra.mxu0 0.0
        %4253 = vmatpush.msra.mxu0 0.0
        %4254 = vmatpush.msra.mxu0 0.0
        %4255 = vmatpush.msra.mxu0 0.0
        %4256 = vmatpush.msra.mxu0 0.0
        %4257 = vmatpush.msra.mxu0 0.0
        %4258 = vmatpush.msra.mxu0 0.0
        %4259 = vmatpush.msra.mxu0 0.0
        %4260 = vmatpush.msra.mxu0 0.0
        %4261 = vmatpush.msra.mxu0 0.0
        %4262 = vmatpush.msra.mxu0 0.0
        %v4263 = vand.u32 %v686, 4294901760
        %4264 = vmatpush.msra.mxu0 %v4263
        %v4265 = vand.u32 %v4092, 4294901760
        %4266 = vmatmul.f32.gmra.mxu0 %v4265
        %v4267 = vpop.f32.mrf.mxu0
        %v4268 = vadd.f32 %v4242, %v4267
        %v4269 = vand.u32 %v4095, 4294901760
        %4270 = vmatmul.f32.gmra.mxu0 %v4269
        %v4271 = vpop.f32.mrf.mxu0
        %v4272 = vadd.f32 %v4246, %v4271
        %4273 = vdwg.mxu0
        %4274 = vmatpush.msra.mxu0 0.0
        %4275 = vmatpush.msra.mxu0 0.0
        %4276 = vmatpush.msra.mxu0 0.0
        %4277 = vmatpush.msra.mxu0 0.0
        %4278 = vmatpush.msra.mxu0 0.0
        %4279 = vmatpush.msra.mxu0 0.0
        %4280 = vmatpush.msra.mxu0 0.0
        %4281 = vmatpush.msra.mxu0 0.0
        %4282 = vmatpush.msra.mxu0 0.0
        %4283 = vmatpush.msra.mxu0 0.0
        %4284 = vmatpush.msra.mxu0 0.0
        %4285 = vmatpush.msra.mxu0 0.0
        %4286 = vmatpush.msra.mxu0 0.0
        %4287 = vmatpush.msra.mxu0 0.0
        %4288 = vmatpush.msra.mxu0 0.0
        %v4289 = vand.u32 %v687, 4294901760
        %4290 = vmatpush.msra.mxu0 %v4289
        %v4291 = vand.u32 %v4092, 4294901760
        %v4292 = vsub.f32 %v4092, %v4291
        %v4293 = vand.u32 %v4292, 4294901760
        %v4294 = vsub.f32 %v4292, %v4293
        %v4295 = vand.u32 %v4294, 4294901760
        %4296 = vmatmul.f32.gmra.mxu0 %v4295
        %v4297 = vpop.f32.mrf.mxu0
        %v4298 = vadd.f32 0.0, %v4297
        %v4299 = vand.u32 %v4095, 4294901760
        %v4300 = vsub.f32 %v4095, %v4299
        %v4301 = vand.u32 %v4300, 4294901760
        %v4302 = vsub.f32 %v4300, %v4301
        %v4303 = vand.u32 %v4302, 4294901760
        %4304 = vmatmul.f32.gmra.mxu0 %v4303
        %v4305 = vpop.f32.mrf.mxu0
        %v4306 = vadd.f32 0.0, %v4305
        %4307 = vdwg.mxu0
        %4308 = vmatpush.msra.mxu0 0.0
        %4309 = vmatpush.msra.mxu0 0.0
        %4310 = vmatpush.msra.mxu0 0.0
        %4311 = vmatpush.msra.mxu0 0.0
        %4312 = vmatpush.msra.mxu0 0.0
        %4313 = vmatpush.msra.mxu0 0.0
        %4314 = vmatpush.msra.mxu0 0.0
        %4315 = vmatpush.msra.mxu0 0.0
        %4316 = vmatpush.msra.mxu0 0.0
        %4317 = vmatpush.msra.mxu0 0.0
        %4318 = vmatpush.msra.mxu0 0.0
        %4319 = vmatpush.msra.mxu0 0.0
        %4320 = vmatpush.msra.mxu0 0.0
        %4321 = vmatpush.msra.mxu0 0.0
        %4322 = vmatpush.msra.mxu0 0.0
        %v4323 = vand.u32 %v687, 4294901760
        %v4324 = vsub.f32 %v687, %v4323
        %v4325 = vand.u32 %v4324, 4294901760
        %v4326 = vsub.f32 %v4324, %v4325
        %v4327 = vand.u32 %v4326, 4294901760
        %4328 = vmatpush.msra.mxu0 %v4327
        %v4329 = vand.u32 %v4092, 4294901760
        %4330 = vmatmul.f32.gmra.mxu0 %v4329
        %v4331 = vpop.f32.mrf.mxu0
        %v4332 = vadd.f32 %v4298, %v4331
        %v4333 = vand.u32 %v4095, 4294901760
        %4334 = vmatmul.f32.gmra.mxu0 %v4333
        %v4335 = vpop.f32.mrf.mxu0
        %v4336 = vadd.f32 %v4306, %v4335
        %4337 = vdwg.mxu0
        %4338 = vmatpush.msra.mxu0 0.0
        %4339 = vmatpush.msra.mxu0 0.0
        %4340 = vmatpush.msra.mxu0 0.0
        %4341 = vmatpush.msra.mxu0 0.0
        %4342 = vmatpush.msra.mxu0 0.0
        %4343 = vmatpush.msra.mxu0 0.0
        %4344 = vmatpush.msra.mxu0 0.0
        %4345 = vmatpush.msra.mxu0 0.0
        %4346 = vmatpush.msra.mxu0 0.0
        %4347 = vmatpush.msra.mxu0 0.0
        %4348 = vmatpush.msra.mxu0 0.0
        %4349 = vmatpush.msra.mxu0 0.0
        %4350 = vmatpush.msra.mxu0 0.0
        %4351 = vmatpush.msra.mxu0 0.0
        %4352 = vmatpush.msra.mxu0 0.0
        %v4353 = vand.u32 %v687, 4294901760
        %v4354 = vsub.f32 %v687, %v4353
        %4355 = vmatpush.msra.mxu0 %v4354
        %v4356 = vand.u32 %v4092, 4294901760
        %v4357 = vsub.f32 %v4092, %v4356
        %4358 = vmatmul.f32.gmra.mxu0 %v4357
        %v4359 = vpop.f32.mrf.mxu0
        %v4360 = vadd.f32 %v4332, %v4359
        %v4361 = vand.u32 %v4095, 4294901760
        %v4362 = vsub.f32 %v4095, %v4361
        %4363 = vmatmul.f32.gmra.mxu0 %v4362
        %v4364 = vpop.f32.mrf.mxu0
        %v4365 = vadd.f32 %v4336, %v4364
        %4366 = vdwg.mxu0
        %4367 = vmatpush.msra.mxu0 0.0
        %4368 = vmatpush.msra.mxu0 0.0
        %4369 = vmatpush.msra.mxu0 0.0
        %4370 = vmatpush.msra.mxu0 0.0
        %4371 = vmatpush.msra.mxu0 0.0
        %4372 = vmatpush.msra.mxu0 0.0
        %4373 = vmatpush.msra.mxu0 0.0
        %4374 = vmatpush.msra.mxu0 0.0
        %4375 = vmatpush.msra.mxu0 0.0
        %4376 = vmatpush.msra.mxu0 0.0
        %4377 = vmatpush.msra.mxu0 0.0
        %4378 = vmatpush.msra.mxu0 0.0
        %4379 = vmatpush.msra.mxu0 0.0
        %4380 = vmatpush.msra.mxu0 0.0
        %4381 = vmatpush.msra.mxu0 0.0
        %v4382 = vand.u32 %v687, 4294901760
        %4383 = vmatpush.msra.mxu0 %v4382
        %v4384 = vand.u32 %v4092, 4294901760
        %v4385 = vsub.f32 %v4092, %v4384
        %v4386 = vand.u32 %v4385, 4294901760
        %4387 = vmatmul.f32.gmra.mxu0 %v4386
        %v4388 = vpop.f32.mrf.mxu0
        %v4389 = vadd.f32 %v4360, %v4388
        %v4390 = vand.u32 %v4095, 4294901760
        %v4391 = vsub.f32 %v4095, %v4390
        %v4392 = vand.u32 %v4391, 4294901760
        %4393 = vmatmul.f32.gmra.mxu0 %v4392
        %v4394 = vpop.f32.mrf.mxu0
        %v4395 = vadd.f32 %v4365, %v4394
        %4396 = vdwg.mxu0
        %4397 = vmatpush.msra.mxu0 0.0
        %4398 = vmatpush.msra.mxu0 0.0
        %4399 = vmatpush.msra.mxu0 0.0
        %4400 = vmatpush.msra.mxu0 0.0
        %4401 = vmatpush.msra.mxu0 0.0
        %4402 = vmatpush.msra.mxu0 0.0
        %4403 = vmatpush.msra.mxu0 0.0
        %4404 = vmatpush.msra.mxu0 0.0
        %4405 = vmatpush.msra.mxu0 0.0
        %4406 = vmatpush.msra.mxu0 0.0
        %4407 = vmatpush.msra.mxu0 0.0
        %4408 = vmatpush.msra.mxu0 0.0
        %4409 = vmatpush.msra.mxu0 0.0
        %4410 = vmatpush.msra.mxu0 0.0
        %4411 = vmatpush.msra.mxu0 0.0
        %v4412 = vand.u32 %v687, 4294901760
        %v4413 = vsub.f32 %v687, %v4412
        %v4414 = vand.u32 %v4413, 4294901760
        %4415 = vmatpush.msra.mxu0 %v4414
        %v4416 = vand.u32 %v4092, 4294901760
        %4417 = vmatmul.f32.gmra.mxu0 %v4416
        %v4418 = vpop.f32.mrf.mxu0
        %v4419 = vadd.f32 %v4389, %v4418
        %v4420 = vand.u32 %v4095, 4294901760
        %4421 = vmatmul.f32.gmra.mxu0 %v4420
        %v4422 = vpop.f32.mrf.mxu0
        %v4423 = vadd.f32 %v4395, %v4422
        %4424 = vdwg.mxu0
        %4425 = vmatpush.msra.mxu0 0.0
        %4426 = vmatpush.msra.mxu0 0.0
        %4427 = vmatpush.msra.mxu0 0.0
        %4428 = vmatpush.msra.mxu0 0.0
        %4429 = vmatpush.msra.mxu0 0.0
        %4430 = vmatpush.msra.mxu0 0.0
        %4431 = vmatpush.msra.mxu0 0.0
        %4432 = vmatpush.msra.mxu0 0.0
        %4433 = vmatpush.msra.mxu0 0.0
        %4434 = vmatpush.msra.mxu0 0.0
        %4435 = vmatpush.msra.mxu0 0.0
        %4436 = vmatpush.msra.mxu0 0.0
        %4437 = vmatpush.msra.mxu0 0.0
        %4438 = vmatpush.msra.mxu0 0.0
        %4439 = vmatpush.msra.mxu0 0.0
        %v4440 = vand.u32 %v687, 4294901760
        %4441 = vmatpush.msra.mxu0 %v4440
        %v4442 = vand.u32 %v4092, 4294901760
        %4443 = vmatmul.f32.gmra.mxu0 %v4442
        %v4444 = vpop.f32.mrf.mxu0
        %v4445 = vadd.f32 %v4419, %v4444
        %v4446 = vand.u32 %v4095, 4294901760
        %4447 = vmatmul.f32.gmra.mxu0 %v4446
        %v4448 = vpop.f32.mrf.mxu0
        %v4449 = vadd.f32 %v4423, %v4448
        %4450 = vdwg.mxu0
        %v4451 = vld [vmem:[%s298] sm:$0xff]
        %v4452 = vld [vmem:[%s298 + $0x8] sm:$0xff]
        %v4453 = vld [vmem:[%s298 + $0x10] sm:$0xff]
        %v4454 = vld [vmem:[%s298 + $0x18] sm:$0xff]
        %4459 = vrot.lane.b32.xlu0 %v4268, 112
        %v4460 = vpop.permute.xlu0 %4459
        %4461 = vrot.lane.b32.xlu0 %v4445, 112
        %v4462 = vpop.permute.xlu0 %4461
        %4463 = vrot.lane.b32.xlu0 %v4272, 112
        %v4464 = vpop.permute.xlu0 %4463
        %4465 = vrot.lane.b32.xlu0 %v4449, 112
        %v4466 = vpop.permute.xlu0 %4465
        %vm4467 = vcmask 916480
        %v4468 = vsel %vm4467, %v4460, %v4462
        %v4469 = vsel %vm4467, %v4464, %v4466
        %v4474 = vadd.f32 %v4451, %v4468
        %v4475 = vadd.f32 %v4452, %v4462
        %v4476 = vadd.f32 %v4453, %v4469
        %v4477 = vadd.f32 %v4454, %v4466
        %4478 = vst [vmem:[%s298] sm:$0xff] %v4474
        %4479 = vst.msk [vmem:[%s298 + $0x8] sm:$0xff] %vm4467, %v4475
        %4480 = vst [vmem:[%s298 + $0x10] sm:$0xff] %v4476
        %4481 = vst.msk [vmem:[%s298 + $0x18] sm:$0xff] %vm4467, %v4477
        %s4482 = scalar_lea.vmem %s4, 128
        %v4483 = vld [vmem:[%s4482] sm:$0xff]
        %v4484 = vld [vmem:[%s4482 + $0x8] sm:$0xff]
        %v4486 = vsel %vm317, %v4483, 0
        %v4489 = vsel %vm317, %v4484, 0
        %4491 = vmatpush.msra.mxu0 0.0
        %4492 = vmatpush.msra.mxu0 0.0
        %4493 = vmatpush.msra.mxu0 0.0
        %4494 = vmatpush.msra.mxu0 0.0
        %4495 = vmatpush.msra.mxu0 0.0
        %4496 = vmatpush.msra.mxu0 0.0
        %4497 = vmatpush.msra.mxu0 0.0
        %4498 = vmatpush.msra.mxu0 0.0
        %4499 = vmatpush.msra.mxu0 0.0
        %4500 = vmatpush.msra.mxu0 0.0
        %4501 = vmatpush.msra.mxu0 0.0
        %4502 = vmatpush.msra.mxu0 0.0
        %4503 = vmatpush.msra.mxu0 0.0
        %4504 = vmatpush.msra.mxu0 0.0
        %4505 = vmatpush.msra.mxu0 0.0
        %v4506 = vand.u32 %v686, 4294901760
        %4507 = vmatpush.msra.mxu0 %v4506
        %v4508 = vand.u32 %v4486, 4294901760
        %v4509 = vsub.f32 %v4486, %v4508
        %v4510 = vand.u32 %v4509, 4294901760
        %v4511 = vsub.f32 %v4509, %v4510
        %v4512 = vand.u32 %v4511, 4294901760
        %4513 = vmatmul.f32.gmra.mxu0 %v4512
        %v4514 = vpop.f32.mrf.mxu0
        %v4515 = vadd.f32 0.0, %v4514
        %v4516 = vand.u32 %v4489, 4294901760
        %v4517 = vsub.f32 %v4489, %v4516
        %v4518 = vand.u32 %v4517, 4294901760
        %v4519 = vsub.f32 %v4517, %v4518
        %v4520 = vand.u32 %v4519, 4294901760
        %4521 = vmatmul.f32.gmra.mxu0 %v4520
        %v4522 = vpop.f32.mrf.mxu0
        %v4523 = vadd.f32 0.0, %v4522
        %4524 = vdwg.mxu0
        %4525 = vmatpush.msra.mxu0 0.0
        %4526 = vmatpush.msra.mxu0 0.0
        %4527 = vmatpush.msra.mxu0 0.0
        %4528 = vmatpush.msra.mxu0 0.0
        %4529 = vmatpush.msra.mxu0 0.0
        %4530 = vmatpush.msra.mxu0 0.0
        %4531 = vmatpush.msra.mxu0 0.0
        %4532 = vmatpush.msra.mxu0 0.0
        %4533 = vmatpush.msra.mxu0 0.0
        %4534 = vmatpush.msra.mxu0 0.0
        %4535 = vmatpush.msra.mxu0 0.0
        %4536 = vmatpush.msra.mxu0 0.0
        %4537 = vmatpush.msra.mxu0 0.0
        %4538 = vmatpush.msra.mxu0 0.0
        %4539 = vmatpush.msra.mxu0 0.0
        %v4540 = vand.u32 %v686, 4294901760
        %v4541 = vsub.f32 %v686, %v4540
        %v4542 = vand.u32 %v4541, 4294901760
        %v4543 = vsub.f32 %v4541, %v4542
        %v4544 = vand.u32 %v4543, 4294901760
        %4545 = vmatpush.msra.mxu0 %v4544
        %v4546 = vand.u32 %v4486, 4294901760
        %4547 = vmatmul.f32.gmra.mxu0 %v4546
        %v4548 = vpop.f32.mrf.mxu0
        %v4549 = vadd.f32 %v4515, %v4548
        %v4550 = vand.u32 %v4489, 4294901760
        %4551 = vmatmul.f32.gmra.mxu0 %v4550
        %v4552 = vpop.f32.mrf.mxu0
        %v4553 = vadd.f32 %v4523, %v4552
        %4554 = vdwg.mxu0
        %4555 = vmatpush.msra.mxu0 0.0
        %4556 = vmatpush.msra.mxu0 0.0
        %4557 = vmatpush.msra.mxu0 0.0
        %4558 = vmatpush.msra.mxu0 0.0
        %4559 = vmatpush.msra.mxu0 0.0
        %4560 = vmatpush.msra.mxu0 0.0
        %4561 = vmatpush.msra.mxu0 0.0
        %4562 = vmatpush.msra.mxu0 0.0
        %4563 = vmatpush.msra.mxu0 0.0
        %4564 = vmatpush.msra.mxu0 0.0
        %4565 = vmatpush.msra.mxu0 0.0
        %4566 = vmatpush.msra.mxu0 0.0
        %4567 = vmatpush.msra.mxu0 0.0
        %4568 = vmatpush.msra.mxu0 0.0
        %4569 = vmatpush.msra.mxu0 0.0
        %v4570 = vand.u32 %v686, 4294901760
        %v4571 = vsub.f32 %v686, %v4570
        %4572 = vmatpush.msra.mxu0 %v4571
        %v4573 = vand.u32 %v4486, 4294901760
        %v4574 = vsub.f32 %v4486, %v4573
        %4575 = vmatmul.f32.gmra.mxu0 %v4574
        %v4576 = vpop.f32.mrf.mxu0
        %v4577 = vadd.f32 %v4549, %v4576
        %v4578 = vand.u32 %v4489, 4294901760
        %v4579 = vsub.f32 %v4489, %v4578
        %4580 = vmatmul.f32.gmra.mxu0 %v4579
        %v4581 = vpop.f32.mrf.mxu0
        %v4582 = vadd.f32 %v4553, %v4581
        %4583 = vdwg.mxu0
        %4584 = vmatpush.msra.mxu0 0.0
        %4585 = vmatpush.msra.mxu0 0.0
        %4586 = vmatpush.msra.mxu0 0.0
        %4587 = vmatpush.msra.mxu0 0.0
        %4588 = vmatpush.msra.mxu0 0.0
        %4589 = vmatpush.msra.mxu0 0.0
        %4590 = vmatpush.msra.mxu0 0.0
        %4591 = vmatpush.msra.mxu0 0.0
        %4592 = vmatpush.msra.mxu0 0.0
        %4593 = vmatpush.msra.mxu0 0.0
        %4594 = vmatpush.msra.mxu0 0.0
        %4595 = vmatpush.msra.mxu0 0.0
        %4596 = vmatpush.msra.mxu0 0.0
        %4597 = vmatpush.msra.mxu0 0.0
        %4598 = vmatpush.msra.mxu0 0.0
        %v4599 = vand.u32 %v686, 4294901760
        %4600 = vmatpush.msra.mxu0 %v4599
        %v4601 = vand.u32 %v4486, 4294901760
        %v4602 = vsub.f32 %v4486, %v4601
        %v4603 = vand.u32 %v4602, 4294901760
        %4604 = vmatmul.f32.gmra.mxu0 %v4603
        %v4605 = vpop.f32.mrf.mxu0
        %v4606 = vadd.f32 %v4577, %v4605
        %v4607 = vand.u32 %v4489, 4294901760
        %v4608 = vsub.f32 %v4489, %v4607
        %v4609 = vand.u32 %v4608, 4294901760
        %4610 = vmatmul.f32.gmra.mxu0 %v4609
        %v4611 = vpop.f32.mrf.mxu0
        %v4612 = vadd.f32 %v4582, %v4611
        %4613 = vdwg.mxu0
        %4614 = vmatpush.msra.mxu0 0.0
        %4615 = vmatpush.msra.mxu0 0.0
        %4616 = vmatpush.msra.mxu0 0.0
        %4617 = vmatpush.msra.mxu0 0.0
        %4618 = vmatpush.msra.mxu0 0.0
        %4619 = vmatpush.msra.mxu0 0.0
        %4620 = vmatpush.msra.mxu0 0.0
        %4621 = vmatpush.msra.mxu0 0.0
        %4622 = vmatpush.msra.mxu0 0.0
        %4623 = vmatpush.msra.mxu0 0.0
        %4624 = vmatpush.msra.mxu0 0.0
        %4625 = vmatpush.msra.mxu0 0.0
        %4626 = vmatpush.msra.mxu0 0.0
        %4627 = vmatpush.msra.mxu0 0.0
        %4628 = vmatpush.msra.mxu0 0.0
        %v4629 = vand.u32 %v686, 4294901760
        %v4630 = vsub.f32 %v686, %v4629
        %v4631 = vand.u32 %v4630, 4294901760
        %4632 = vmatpush.msra.mxu0 %v4631
        %v4633 = vand.u32 %v4486, 4294901760
        %4634 = vmatmul.f32.gmra.mxu0 %v4633
        %v4635 = vpop.f32.mrf.mxu0
        %v4636 = vadd.f32 %v4606, %v4635
        %v4637 = vand.u32 %v4489, 4294901760
        %4638 = vmatmul.f32.gmra.mxu0 %v4637
        %v4639 = vpop.f32.mrf.mxu0
        %v4640 = vadd.f32 %v4612, %v4639
        %4641 = vdwg.mxu0
        %4642 = vmatpush.msra.mxu0 0.0
        %4643 = vmatpush.msra.mxu0 0.0
        %4644 = vmatpush.msra.mxu0 0.0
        %4645 = vmatpush.msra.mxu0 0.0
        %4646 = vmatpush.msra.mxu0 0.0
        %4647 = vmatpush.msra.mxu0 0.0
        %4648 = vmatpush.msra.mxu0 0.0
        %4649 = vmatpush.msra.mxu0 0.0
        %4650 = vmatpush.msra.mxu0 0.0
        %4651 = vmatpush.msra.mxu0 0.0
        %4652 = vmatpush.msra.mxu0 0.0
        %4653 = vmatpush.msra.mxu0 0.0
        %4654 = vmatpush.msra.mxu0 0.0
        %4655 = vmatpush.msra.mxu0 0.0
        %4656 = vmatpush.msra.mxu0 0.0
        %v4657 = vand.u32 %v686, 4294901760
        %4658 = vmatpush.msra.mxu0 %v4657
        %v4659 = vand.u32 %v4486, 4294901760
        %4660 = vmatmul.f32.gmra.mxu0 %v4659
        %v4661 = vpop.f32.mrf.mxu0
        %v4662 = vadd.f32 %v4636, %v4661
        %v4663 = vand.u32 %v4489, 4294901760
        %4664 = vmatmul.f32.gmra.mxu0 %v4663
        %v4665 = vpop.f32.mrf.mxu0
        %v4666 = vadd.f32 %v4640, %v4665
        %4667 = vdwg.mxu0
        %4668 = vmatpush.msra.mxu0 0.0
        %4669 = vmatpush.msra.mxu0 0.0
        %4670 = vmatpush.msra.mxu0 0.0
        %4671 = vmatpush.msra.mxu0 0.0
        %4672 = vmatpush.msra.mxu0 0.0
        %4673 = vmatpush.msra.mxu0 0.0
        %4674 = vmatpush.msra.mxu0 0.0
        %4675 = vmatpush.msra.mxu0 0.0
        %4676 = vmatpush.msra.mxu0 0.0
        %4677 = vmatpush.msra.mxu0 0.0
        %4678 = vmatpush.msra.mxu0 0.0
        %4679 = vmatpush.msra.mxu0 0.0
        %4680 = vmatpush.msra.mxu0 0.0
        %4681 = vmatpush.msra.mxu0 0.0
        %4682 = vmatpush.msra.mxu0 0.0
        %v4683 = vand.u32 %v687, 4294901760
        %4684 = vmatpush.msra.mxu0 %v4683
        %v4685 = vand.u32 %v4486, 4294901760
        %v4686 = vsub.f32 %v4486, %v4685
        %v4687 = vand.u32 %v4686, 4294901760
        %v4688 = vsub.f32 %v4686, %v4687
        %v4689 = vand.u32 %v4688, 4294901760
        %4690 = vmatmul.f32.gmra.mxu0 %v4689
        %v4691 = vpop.f32.mrf.mxu0
        %v4692 = vadd.f32 0.0, %v4691
        %v4693 = vand.u32 %v4489, 4294901760
        %v4694 = vsub.f32 %v4489, %v4693
        %v4695 = vand.u32 %v4694, 4294901760
        %v4696 = vsub.f32 %v4694, %v4695
        %v4697 = vand.u32 %v4696, 4294901760
        %4698 = vmatmul.f32.gmra.mxu0 %v4697
        %v4699 = vpop.f32.mrf.mxu0
        %v4700 = vadd.f32 0.0, %v4699
        %4701 = vdwg.mxu0
        %4702 = vmatpush.msra.mxu0 0.0
        %4703 = vmatpush.msra.mxu0 0.0
        %4704 = vmatpush.msra.mxu0 0.0
        %4705 = vmatpush.msra.mxu0 0.0
        %4706 = vmatpush.msra.mxu0 0.0
        %4707 = vmatpush.msra.mxu0 0.0
        %4708 = vmatpush.msra.mxu0 0.0
        %4709 = vmatpush.msra.mxu0 0.0
        %4710 = vmatpush.msra.mxu0 0.0
        %4711 = vmatpush.msra.mxu0 0.0
        %4712 = vmatpush.msra.mxu0 0.0
        %4713 = vmatpush.msra.mxu0 0.0
        %4714 = vmatpush.msra.mxu0 0.0
        %4715 = vmatpush.msra.mxu0 0.0
        %4716 = vmatpush.msra.mxu0 0.0
        %v4717 = vand.u32 %v687, 4294901760
        %v4718 = vsub.f32 %v687, %v4717
        %v4719 = vand.u32 %v4718, 4294901760
        %v4720 = vsub.f32 %v4718, %v4719
        %v4721 = vand.u32 %v4720, 4294901760
        %4722 = vmatpush.msra.mxu0 %v4721
        %v4723 = vand.u32 %v4486, 4294901760
        %4724 = vmatmul.f32.gmra.mxu0 %v4723
        %v4725 = vpop.f32.mrf.mxu0
        %v4726 = vadd.f32 %v4692, %v4725
        %v4727 = vand.u32 %v4489, 4294901760
        %4728 = vmatmul.f32.gmra.mxu0 %v4727
        %v4729 = vpop.f32.mrf.mxu0
        %v4730 = vadd.f32 %v4700, %v4729
        %4731 = vdwg.mxu0
        %4732 = vmatpush.msra.mxu0 0.0
        %4733 = vmatpush.msra.mxu0 0.0
        %4734 = vmatpush.msra.mxu0 0.0
        %4735 = vmatpush.msra.mxu0 0.0
        %4736 = vmatpush.msra.mxu0 0.0
        %4737 = vmatpush.msra.mxu0 0.0
        %4738 = vmatpush.msra.mxu0 0.0
        %4739 = vmatpush.msra.mxu0 0.0
        %4740 = vmatpush.msra.mxu0 0.0
        %4741 = vmatpush.msra.mxu0 0.0
        %4742 = vmatpush.msra.mxu0 0.0
        %4743 = vmatpush.msra.mxu0 0.0
        %4744 = vmatpush.msra.mxu0 0.0
        %4745 = vmatpush.msra.mxu0 0.0
        %4746 = vmatpush.msra.mxu0 0.0
        %v4747 = vand.u32 %v687, 4294901760
        %v4748 = vsub.f32 %v687, %v4747
        %4749 = vmatpush.msra.mxu0 %v4748
        %v4750 = vand.u32 %v4486, 4294901760
        %v4751 = vsub.f32 %v4486, %v4750
        %4752 = vmatmul.f32.gmra.mxu0 %v4751
        %v4753 = vpop.f32.mrf.mxu0
        %v4754 = vadd.f32 %v4726, %v4753
        %v4755 = vand.u32 %v4489, 4294901760
        %v4756 = vsub.f32 %v4489, %v4755
        %4757 = vmatmul.f32.gmra.mxu0 %v4756
        %v4758 = vpop.f32.mrf.mxu0
        %v4759 = vadd.f32 %v4730, %v4758
        %4760 = vdwg.mxu0
        %4761 = vmatpush.msra.mxu0 0.0
        %4762 = vmatpush.msra.mxu0 0.0
        %4763 = vmatpush.msra.mxu0 0.0
        %4764 = vmatpush.msra.mxu0 0.0
        %4765 = vmatpush.msra.mxu0 0.0
        %4766 = vmatpush.msra.mxu0 0.0
        %4767 = vmatpush.msra.mxu0 0.0
        %4768 = vmatpush.msra.mxu0 0.0
        %4769 = vmatpush.msra.mxu0 0.0
        %4770 = vmatpush.msra.mxu0 0.0
        %4771 = vmatpush.msra.mxu0 0.0
        %4772 = vmatpush.msra.mxu0 0.0
        %4773 = vmatpush.msra.mxu0 0.0
        %4774 = vmatpush.msra.mxu0 0.0
        %4775 = vmatpush.msra.mxu0 0.0
        %v4776 = vand.u32 %v687, 4294901760
        %4777 = vmatpush.msra.mxu0 %v4776
        %v4778 = vand.u32 %v4486, 4294901760
        %v4779 = vsub.f32 %v4486, %v4778
        %v4780 = vand.u32 %v4779, 4294901760
        %4781 = vmatmul.f32.gmra.mxu0 %v4780
        %v4782 = vpop.f32.mrf.mxu0
        %v4783 = vadd.f32 %v4754, %v4782
        %v4784 = vand.u32 %v4489, 4294901760
        %v4785 = vsub.f32 %v4489, %v4784
        %v4786 = vand.u32 %v4785, 4294901760
        %4787 = vmatmul.f32.gmra.mxu0 %v4786
        %v4788 = vpop.f32.mrf.mxu0
        %v4789 = vadd.f32 %v4759, %v4788
        %4790 = vdwg.mxu0
        %4791 = vmatpush.msra.mxu0 0.0
        %4792 = vmatpush.msra.mxu0 0.0
        %4793 = vmatpush.msra.mxu0 0.0
        %4794 = vmatpush.msra.mxu0 0.0
        %4795 = vmatpush.msra.mxu0 0.0
        %4796 = vmatpush.msra.mxu0 0.0
        %4797 = vmatpush.msra.mxu0 0.0
        %4798 = vmatpush.msra.mxu0 0.0
        %4799 = vmatpush.msra.mxu0 0.0
        %4800 = vmatpush.msra.mxu0 0.0
        %4801 = vmatpush.msra.mxu0 0.0
        %4802 = vmatpush.msra.mxu0 0.0
        %4803 = vmatpush.msra.mxu0 0.0
        %4804 = vmatpush.msra.mxu0 0.0
        %4805 = vmatpush.msra.mxu0 0.0
        %v4806 = vand.u32 %v687, 4294901760
        %v4807 = vsub.f32 %v687, %v4806
        %v4808 = vand.u32 %v4807, 4294901760
        %4809 = vmatpush.msra.mxu0 %v4808
        %v4810 = vand.u32 %v4486, 4294901760
        %4811 = vmatmul.f32.gmra.mxu0 %v4810
        %v4812 = vpop.f32.mrf.mxu0
        %v4813 = vadd.f32 %v4783, %v4812
        %v4814 = vand.u32 %v4489, 4294901760
        %4815 = vmatmul.f32.gmra.mxu0 %v4814
        %v4816 = vpop.f32.mrf.mxu0
        %v4817 = vadd.f32 %v4789, %v4816
        %4818 = vdwg.mxu0
        %4819 = vmatpush.msra.mxu0 0.0
        %4820 = vmatpush.msra.mxu0 0.0
        %4821 = vmatpush.msra.mxu0 0.0
        %4822 = vmatpush.msra.mxu0 0.0
        %4823 = vmatpush.msra.mxu0 0.0
        %4824 = vmatpush.msra.mxu0 0.0
        %4825 = vmatpush.msra.mxu0 0.0
        %4826 = vmatpush.msra.mxu0 0.0
        %4827 = vmatpush.msra.mxu0 0.0
        %4828 = vmatpush.msra.mxu0 0.0
        %4829 = vmatpush.msra.mxu0 0.0
        %4830 = vmatpush.msra.mxu0 0.0
        %4831 = vmatpush.msra.mxu0 0.0
        %4832 = vmatpush.msra.mxu0 0.0
        %4833 = vmatpush.msra.mxu0 0.0
        %v4834 = vand.u32 %v687, 4294901760
        %4835 = vmatpush.msra.mxu0 %v4834
        %v4836 = vand.u32 %v4486, 4294901760
        %4837 = vmatmul.f32.gmra.mxu0 %v4836
        %v4838 = vpop.f32.mrf.mxu0
        %v4839 = vadd.f32 %v4813, %v4838
        %v4840 = vand.u32 %v4489, 4294901760
        %4841 = vmatmul.f32.gmra.mxu0 %v4840
        %v4842 = vpop.f32.mrf.mxu0
        %v4843 = vadd.f32 %v4817, %v4842
        %4844 = vdwg.mxu0
        %4849 = vrot.lane.b32.xlu0 %v4662, 111
        %v4850 = vpop.permute.xlu0 %4849
        %4851 = vrot.lane.b32.xlu0 %v4839, 111
        %v4852 = vpop.permute.xlu0 %4851
        %4853 = vrot.lane.b32.xlu0 %v4666, 111
        %v4854 = vpop.permute.xlu0 %4853
        %4855 = vrot.lane.b32.xlu0 %v4843, 111
        %v4856 = vpop.permute.xlu0 %4855
        %vm4857 = vcmask 908288
        %v4858 = vsel %vm4857, %v4850, %v4852
        %v4859 = vsel %vm4857, %v4854, %v4856
        %v4864 = vsel %vm2480, %v4858, 0.0
        %v4865 = vsel %vm2481, %v4852, 0.0
        %v4866 = vsel %vm2480, %v4859, 0.0
        %v4867 = vsel %vm2481, %v4856, 0.0
        %v4868 = vld [vmem:[%s298] sm:$0xff]
        %v4869 = vld [vmem:[%s298 + $0x8] sm:$0xff]
        %v4870 = vld [vmem:[%s298 + $0x10] sm:$0xff]
        %v4871 = vld [vmem:[%s298 + $0x18] sm:$0xff]
        %v4872 = vadd.f32 %v4868, %v4864
        %v4873 = vadd.f32 %v4869, %v4865
        %v4874 = vadd.f32 %v4870, %v4866
        %v4875 = vadd.f32 %v4871, %v4867
        %4876 = vst [vmem:[%s298] sm:$0xff] %v4872
        %4877 = vst.msk [vmem:[%s298 + $0x8] sm:$0xff] %vm4857, %v4873
        %4878 = vst [vmem:[%s298 + $0x10] sm:$0xff] %v4874
        %4879 = vst.msk [vmem:[%s298 + $0x18] sm:$0xff] %vm4857, %v4875
        %s4880 = sand.u32 %s203, 1
        %s4881 = scalar_lea.sflag [#allocation3], %s4880
        %s4882 = sand.u32 %s203, 1
        %s4883 = smul.addr %s4882, 32
        %s4884 = scalar_lea.vmem [#allocation2], %s4883
        // Predicated region
        $region53: #{tpu_custom_call.1} parent=51 // pred_check
          %p4885 = pneg %p213
        $region54: #{tpu_custom_call.1} parent=51 // pred_check_branch
          %4887 = sbr.rel (%p4885) target = $region56
        $region55: #{tpu_custom_call.1} parent=51 // pred_region
          %4889 = vsyncadd %s4881, 0
          %s4890 = smul.addr %s22, 4
          %s4891 = smul.addr %s4890, 8
          %s4892 = scalar_lea.hbm %s8, %s4891
          %s4893 = sshll.u32 %s4884, 4
          %s4894 = int_to_ptr.vmem [resolvable:$true] %s4893
          %s4895 = sshll.u32 %s4892, 4
          %s4896 = int_to_ptr.hbm [resolvable:$true] %s4895
          %4901 = dma.vmem_to_hbm [thread:$0]  %s4894, 512, %s4896, %s4881, 256, 256, 16
        $region56: #{tpu_custom_call.1} parent=51 // pred_fallthru
          _
      $region52: #{tpu_custom_call.1} parent=5 // pred_fallthru
        _
      %p4902 = scmp.le.s32.totalorder 2, %s17
      // Predicated region
      $region57: #{tpu_custom_call.1} parent=5 // pred_check
        %p4903 = pneg %p4902
      $region58: #{tpu_custom_call.1} parent=5 // pred_check_branch
        %4905 = sbr.rel (%p4903) target = $region60
      $region59: #{tpu_custom_call.1} parent=5 // pred_region
        %s4906 = ssub.s32 %s17, 2
        // Predicated region
        $region61: #{tpu_custom_call.1} parent=59 // pred_check
          %p4907 = pneg %p219
        $region62: #{tpu_custom_call.1} parent=59 // pred_check_branch
          %4909 = sbr.rel (%p4907) target = $region64
        $region63: #{tpu_custom_call.1} parent=59 // pred_region
          %s4910 = sand.u32 %s204, 1
          %s4911 = scalar_lea.sflag [#allocation3], %s4910
          %s4912 = sand.u32 %s204, 1
          %s4913 = smul.addr %s4912, 32
          %s4914 = scalar_lea.vmem [#allocation2], %s4913
          %4916 = dma.done %s4911, 512
        $region64: #{tpu_custom_call.1} parent=59 // pred_fallthru
          _
      $region60: #{tpu_custom_call.1} parent=5 // pred_fallthru
        _
    $region6: #{tpu_custom_call.1} parent=1 // loop_footer
      %s21 = sadd.s32 1, %s17
    $region7: #{tpu_custom_call.1} parent=1 // loop_footer_branch
      %16 = sbr.rel target = $region3
    $region8: #{tpu_custom_call.1} parent=1 // loop_exit
      _
    %4917 = vsyncpa [#allocation3], 1
    %s4918 = scalar_lea.sflag [#allocation3], 1
    %4919 = vsyncpa %s4918, 1

</llo_original>
